<compile_context>
chip_gen: v6e
topology: v6e:2x2x1
jax: 0.10.0
libtpu: 0.0.40
codegen_flags: <defaults>
</compile_context>

<pallas_src>
import functools

import jax
import jax.numpy as jnp
from jax.experimental import pallas as pl
from jax.experimental.pallas import tpu as pltpu


def _fused_kernel(xc_ref, w1_ref, w2_ref, w3_ref, w4_ref,
                  b1_ref, b2_ref, b3_ref, b4_ref,
                  o_ref, s1_ref, s2_ref, s3_ref, *, H, W):
    """Whole feature extractor for one image, fully resident in VMEM.

    xc_ref : (1, H*W, 27)  bf16  layer-1 im2col columns (kh, kw, cin order)
    wX_ref : (9*Cin, Cout) bf16  conv weights with BN scale folded in
    bX_ref : (1, Cout)     f32   folded BN bias
    o_ref  : (1, H/16, W/16, 256) f32
    sX_ref : zero-padded bf16 VMEM scratch holding the next layer's input
    """

    def maxpool2x2(y, hp, wp):
        # y: (hp*wp, c) row-major over (h, w) -> (hp//2, wp//2, c)
        c = y.shape[-1]
        y = y.reshape(hp // 2, 2, wp // 2, 2, c)
        y = jnp.maximum(y[:, 0], y[:, 1])          # pool H pairs (VPU)
        y = jnp.maximum(y[:, :, 0], y[:, :, 1])    # pool W pairs (VPU)
        return y                                    # (hp//2, wp//2, c)

    def conv_bn_relu(p_ref, w_ref, b_ref, hp, wp):
        # p_ref: zero-padded (hp+2, wp+2, cin) bf16 scratch.
        cin = p_ref.shape[-1]
        p = p_ref[...]
        # im2col: concat nine shifted windows along channels, one reshape.
        cols = jnp.concatenate(
            [p[kh:kh + hp, kw:kw + wp, :]
             for kh in range(3) for kw in range(3)],
            axis=-1).reshape(hp * wp, 9 * cin)     # (hp*wp, 9*cin) bf16
        acc = jnp.dot(cols, w_ref[...], preferred_element_type=jnp.float32)
        return jnp.maximum(acc + b_ref[...], 0.0)  # bias + ReLU in f32

    # ---- layer 1: wrapper-side im2col -> single (H*W, 27) @ (27, 64) matmul.
    acc = jnp.dot(xc_ref[0], w1_ref[...], preferred_element_type=jnp.float32)
    y = jnp.maximum(acc + b1_ref[...], 0.0)
    y = maxpool2x2(y, H, W)                        # (H/2, W/2, 64) f32

    s1_ref[...] = jnp.zeros_like(s1_ref)           # keep zero halo
    s1_ref[1:1 + H // 2, 1:1 + W // 2, :] = y.astype(s1_ref.dtype)

    # ---- layer 2
    y = conv_bn_relu(s1_ref, w2_ref, b2_ref, H // 2, W // 2)
    y = maxpool2x2(y, H // 2, W // 2)              # (H/4, W/4, 128)
    s2_ref[...] = jnp.zeros_like(s2_ref)
    s2_ref[1:1 + H // 4, 1:1 + W // 4, :] = y.astype(s2_ref.dtype)

    # ---- layer 3
    y = conv_bn_relu(s2_ref, w3_ref, b3_ref, H // 4, W // 4)
    y = maxpool2x2(y, H // 4, W // 4)              # (H/8, W/8, 256)
    s3_ref[...] = jnp.zeros_like(s3_ref)
    s3_ref[1:1 + H // 8, 1:1 + W // 8, :] = y.astype(s3_ref.dtype)

    # ---- layer 4
    y = conv_bn_relu(s3_ref, w4_ref, b4_ref, H // 8, W // 8)
    y = maxpool2x2(y, H // 8, W // 8)              # (H/16, W/16, 256)

    o_ref[0] = y.astype(o_ref.dtype)


@jax.jit
def feature_extractor(x_nchw, params):
    """Forward pass matching u2s_FeatureExtractor.forward (eval-mode BN)."""
    N, C, H, W = x_nchw.shape
    assert C == 3 and H % 16 == 0 and W % 16 == 0

    # NCHW -> NHWC so channels ride the 128-wide lane dimension.
    x = jnp.transpose(x_nchw, (0, 2, 3, 1)).astype(jnp.float32)

    # Layer-1 im2col at the wrapper: Cin=3 is lane-hostile inside the kernel.
    xp = jnp.pad(x, ((0, 0), (1, 1), (1, 1), (0, 0)))
    xcols = jnp.concatenate(
        [xp[:, kh:kh + H, kw:kw + W, :] for kh in range(3) for kw in range(3)],
        axis=-1)                                   # (N, H, W, 27), (kh,kw,cin)
    xcols = xcols.reshape(N, H * W, 27).astype(jnp.bfloat16)

    # Weights: BN scale already folded in; reshape HWIO -> (9*Cin, Cout), bf16.
    ws = [w.reshape(-1, w.shape[-1]).astype(jnp.bfloat16) for (w, _) in params]
    bs = [b.reshape(1, -1).astype(jnp.float32) for (_, b) in params]

    Ho, Wo = H // 16, W // 16
    kernel = functools.partial(_fused_kernel, H=H, W=W)

    feats = pl.pallas_call(
        kernel,
        out_shape=jax.ShapeDtypeStruct((N, Ho, Wo, 256), jnp.float32),
        grid=(N,),
        in_specs=[
            pl.BlockSpec((1, H * W, 27), lambda b: (b, 0, 0)),
            pl.BlockSpec(ws[0].shape, lambda b: (0, 0)),
            pl.BlockSpec(ws[1].shape, lambda b: (0, 0)),
            pl.BlockSpec(ws[2].shape, lambda b: (0, 0)),
            pl.BlockSpec(ws[3].shape, lambda b: (0, 0)),
            pl.BlockSpec(bs[0].shape, lambda b: (0, 0)),
            pl.BlockSpec(bs[1].shape, lambda b: (0, 0)),
            pl.BlockSpec(bs[2].shape, lambda b: (0, 0)),
            pl.BlockSpec(bs[3].shape, lambda b: (0, 0)),
        ],
        out_specs=pl.BlockSpec((1, Ho, Wo, 256), lambda b: (b, 0, 0, 0)),
        scratch_shapes=[
            pltpu.VMEM((H // 2 + 2, W // 2 + 2, 64), jnp.bfloat16),
            pltpu.VMEM((H // 4 + 2, W // 4 + 2, 128), jnp.bfloat16),
            pltpu.VMEM((H // 8 + 2, W // 8 + 2, 256), jnp.bfloat16),
        ],
        compiler_params=pltpu.CompilerParams(
            dimension_semantics=("parallel",)),
    )(xcols, *ws, *bs)

    # Back to NCHW ordering before flatten, matching torch's x.view(N, -1).
    feats = jnp.transpose(feats, (0, 3, 1, 2))
    return feats.reshape(N, -1)


def init_params(key):
    """Deterministic params for the 4 blocks, with BN folded (eval mode)."""
    chans = [(3, 64), (64, 128), (128, 256), (256, 256)]
    params = []
    for i, (cin, cout) in enumerate(chans):
        k = jax.random.fold_in(key, i)
        kw_, kb, kg, kbt, km, kv = jax.random.split(k, 6)
        w = jax.random.normal(kw_, (3, 3, cin, cout), jnp.float32) / jnp.sqrt(9.0 * cin)
        b = 0.01 * jax.random.normal(kb, (cout,), jnp.float32)
        gamma = 1.0 + 0.1 * jax.random.normal(kg, (cout,), jnp.float32)
        beta = 0.1 * jax.random.normal(kbt, (cout,), jnp.float32)
        mean = 0.05 * jax.random.normal(km, (cout,), jnp.float32)
        var = 1.0 + 0.1 * jax.random.uniform(kv, (cout,), jnp.float32)
        scale = gamma / jnp.sqrt(var + 1e-5)
        w_folded = w * scale                       # fold BN scale into weights
        bias = beta + (b - mean) * scale           # folded BN bias
        params.append((w_folded, bias))
    return params


def _reference(x_nchw, params):
    """Pure-JAX reference with the same bf16-operand / f32-accumulate math."""
    x = jnp.transpose(x_nchw, (0, 2, 3, 1)).astype(jnp.float32)
    for (w, bias) in params:
        y = jax.lax.conv_general_dilated(
            x.astype(jnp.bfloat16), w.astype(jnp.bfloat16),
            window_strides=(1, 1), padding="SAME",
            dimension_numbers=("NHWC", "HWIO", "NHWC"),
            preferred_element_type=jnp.float32)
        y = jnp.maximum(y + bias, 0.0)
        y = jax.lax.reduce_window(
            y, -jnp.inf, jax.lax.max,
            window_dimensions=(1, 2, 2, 1), window_strides=(1, 2, 2, 1),
            padding="VALID")
        x = y
    x = jnp.transpose(x, (0, 3, 1, 2))
    return x.reshape(x.shape[0], -1)


if __name__ == "__main__":
    key = jax.random.PRNGKey(0)
    kx, kp = jax.random.split(key)

    # batch=2, 3 channels, 16x16 (16 -> 8 -> 4 -> 2 -> 1 through 4 MaxPool2d).
    x = jax.random.normal(kx, (2, 3, 16, 16), jnp.float32)
    params = init_params(kp)

    out = feature_extractor(x, params)
    out = jax.block_until_ready(out)

    ref = _reference(x, params)
    assert out.shape == (2, 256), out.shape
    assert jnp.allclose(out, ref, atol=2e-2, rtol=2e-2), \
        float(jnp.max(jnp.abs(out - ref)))

    print("KERNEL_OK")
</pallas_src>

<mosaic_0001>
module attributes {stable_mosaic.version = 11 : i64} {
  func.func @_fused_kernel(%arg0: i32, %arg1: memref<1x256x27xbf16, #tpu.memory_space<vmem>>, %arg2: memref<27x64xbf16, #tpu.memory_space<vmem>>, %arg3: memref<576x128xbf16, #tpu.memory_space<vmem>>, %arg4: memref<1152x256xbf16, #tpu.memory_space<vmem>>, %arg5: memref<2304x256xbf16, #tpu.memory_space<vmem>>, %arg6: memref<1x64xf32, #tpu.memory_space<vmem>>, %arg7: memref<1x128xf32, #tpu.memory_space<vmem>>, %arg8: memref<1x256xf32, #tpu.memory_space<vmem>>, %arg9: memref<1x256xf32, #tpu.memory_space<vmem>>, %arg10: memref<1x1x1x256xf32, #tpu.memory_space<vmem>>, %arg11: memref<10x10x64xbf16, #tpu.memory_space<vmem>>, %arg12: memref<6x6x128xbf16, #tpu.memory_space<vmem>>, %arg13: memref<4x4x256xbf16, #tpu.memory_space<vmem>>) attributes {dimension_semantics = [#tpu.dimension_semantics<parallel>], iteration_bounds = array<i64: 2>, scalar_prefetch = 0 : i64, scratch_operands = 3 : i64, tpu.core_type = #tpu.core_type<tc>, window_params = [{transform_indices = @transform_0, window_bounds = array<i64: 1, 256, 27>}, {pipeline_mode = #tpu.pipeline_mode<synchronous>, transform_indices = @transform_1, window_bounds = array<i64: 27, 64>}, {pipeline_mode = #tpu.pipeline_mode<synchronous>, transform_indices = @transform_2, window_bounds = array<i64: 576, 128>}, {pipeline_mode = #tpu.pipeline_mode<synchronous>, transform_indices = @transform_3, window_bounds = array<i64: 1152, 256>}, {pipeline_mode = #tpu.pipeline_mode<synchronous>, transform_indices = @transform_4, window_bounds = array<i64: 2304, 256>}, {pipeline_mode = #tpu.pipeline_mode<synchronous>, transform_indices = @transform_5, window_bounds = array<i64: 1, 64>}, {pipeline_mode = #tpu.pipeline_mode<synchronous>, transform_indices = @transform_6, window_bounds = array<i64: 1, 128>}, {pipeline_mode = #tpu.pipeline_mode<synchronous>, transform_indices = @transform_7, window_bounds = array<i64: 1, 256>}, {pipeline_mode = #tpu.pipeline_mode<synchronous>, transform_indices = @transform_8, window_bounds = array<i64: 1, 256>}, {transform_indices = @transform_9, window_bounds = array<i64: 1, 1, 1, 256>}]} {
    %c0 = arith.constant 0 : index
    %c0_0 = arith.constant 0 : index
    %c0_1 = arith.constant 0 : index
    %0 = vector.load %arg1[%c0, %c0_0, %c0_1] : memref<1x256x27xbf16, #tpu.memory_space<vmem>>, vector<1x256x27xbf16>
    %1 = vector.shape_cast %0 : vector<1x256x27xbf16> to vector<256x27xbf16>
    %c0_2 = arith.constant 0 : index
    %c0_3 = arith.constant 0 : index
    %2 = vector.load %arg2[%c0_2, %c0_3] : memref<27x64xbf16, #tpu.memory_space<vmem>>, vector<27x64xbf16>
    %cst = arith.constant dense<0.000000e+00> : vector<256x64xf32>
    %3 = tpu.matmul %1, %2, %cst {dimension_numbers = #tpu.dot_dimension_numbers<[1], [0], [0], [1], [0, 0, 1, 1], [], []>} : vector<256x27xbf16>, vector<27x64xbf16>, vector<256x64xf32> -> vector<256x64xf32>
    %c0_4 = arith.constant 0 : index
    %c0_5 = arith.constant 0 : index
    %4 = vector.load %arg6[%c0_4, %c0_5] : memref<1x64xf32, #tpu.memory_space<vmem>>, vector<1x64xf32>
    %5 = vector.broadcast %4 : vector<1x64xf32> to vector<256x64xf32>
    %6 = arith.addf %3, %5 : vector<256x64xf32>
    %cst_6 = arith.constant 0.000000e+00 : f32
    %7 = vector.broadcast %cst_6 : f32 to vector<256x64xf32>
    %8 = arith.maximumf %6, %7 : vector<256x64xf32>
    %9 = vector.shape_cast %8 : vector<256x64xf32> to vector<8x2x8x2x64xf32>
    %10 = vector.extract_strided_slice %9 {offsets = [0, 0, 0, 0, 0], sizes = [8, 1, 8, 2, 64], strides = [1, 1, 1, 1, 1]} : vector<8x2x8x2x64xf32> to vector<8x1x8x2x64xf32>
    %11 = vector.shape_cast %10 : vector<8x1x8x2x64xf32> to vector<8x8x2x64xf32>
    %12 = vector.extract_strided_slice %9 {offsets = [0, 1, 0, 0, 0], sizes = [8, 1, 8, 2, 64], strides = [1, 1, 1, 1, 1]} : vector<8x2x8x2x64xf32> to vector<8x1x8x2x64xf32>
    %13 = vector.shape_cast %12 : vector<8x1x8x2x64xf32> to vector<8x8x2x64xf32>
    %14 = arith.maximumf %11, %13 : vector<8x8x2x64xf32>
    %15 = vector.extract_strided_slice %14 {offsets = [0, 0, 0, 0], sizes = [8, 8, 1, 64], strides = [1, 1, 1, 1]} : vector<8x8x2x64xf32> to vector<8x8x1x64xf32>
    %16 = vector.shape_cast %15 : vector<8x8x1x64xf32> to vector<8x8x64xf32>
    %17 = vector.extract_strided_slice %14 {offsets = [0, 0, 1, 0], sizes = [8, 8, 1, 64], strides = [1, 1, 1, 1]} : vector<8x8x2x64xf32> to vector<8x8x1x64xf32>
    %18 = vector.shape_cast %17 : vector<8x8x1x64xf32> to vector<8x8x64xf32>
    %19 = arith.maximumf %16, %18 : vector<8x8x64xf32>
    %cst_7 = arith.constant 0.000000e+00 : bf16
    %20 = vector.broadcast %cst_7 : bf16 to vector<10x10x64xbf16>
    %c0_8 = arith.constant 0 : index
    %c0_9 = arith.constant 0 : index
    %c0_10 = arith.constant 0 : index
    %21 = vector.load %arg11[%c0_8, %c0_9, %c0_10] : memref<10x10x64xbf16, #tpu.memory_space<vmem>>, vector<10x10x64xbf16>
    tpu.vector_store %arg11[%c0_8, %c0_9, %c0_10], %20 {strides = array<i32>} : memref<10x10x64xbf16, #tpu.memory_space<vmem>>, vector<10x10x64xbf16>,
    %22 = arith.truncf %19 : vector<8x8x64xf32> to vector<8x8x64xbf16>
    %c1 = arith.constant 1 : index
    %c1_11 = arith.constant 1 : index
    %c0_12 = arith.constant 0 : index
    %23 = vector.load %arg11[%c1, %c1_11, %c0_12] : memref<10x10x64xbf16, #tpu.memory_space<vmem>>, vector<8x8x64xbf16>
    tpu.vector_store %arg11[%c1, %c1_11, %c0_12], %22 {strides = array<i32>} : memref<10x10x64xbf16, #tpu.memory_space<vmem>>, vector<8x8x64xbf16>,
    %c0_13 = arith.constant 0 : index
    %c0_14 = arith.constant 0 : index
    %c0_15 = arith.constant 0 : index
    %24 = vector.load %arg11[%c0_13, %c0_14, %c0_15] : memref<10x10x64xbf16, #tpu.memory_space<vmem>>, vector<10x10x64xbf16>
    %25 = vector.extract_strided_slice %24 {offsets = [0, 0, 0], sizes = [8, 8, 64], strides = [1, 1, 1]} : vector<10x10x64xbf16> to vector<8x8x64xbf16>
    %26 = vector.extract_strided_slice %24 {offsets = [0, 1, 0], sizes = [8, 8, 64], strides = [1, 1, 1]} : vector<10x10x64xbf16> to vector<8x8x64xbf16>
    %27 = vector.extract_strided_slice %24 {offsets = [0, 2, 0], sizes = [8, 8, 64], strides = [1, 1, 1]} : vector<10x10x64xbf16> to vector<8x8x64xbf16>
    %28 = vector.extract_strided_slice %24 {offsets = [1, 0, 0], sizes = [8, 8, 64], strides = [1, 1, 1]} : vector<10x10x64xbf16> to vector<8x8x64xbf16>
    %29 = vector.extract_strided_slice %24 {offsets = [1, 1, 0], sizes = [8, 8, 64], strides = [1, 1, 1]} : vector<10x10x64xbf16> to vector<8x8x64xbf16>
    %30 = vector.extract_strided_slice %24 {offsets = [1, 2, 0], sizes = [8, 8, 64], strides = [1, 1, 1]} : vector<10x10x64xbf16> to vector<8x8x64xbf16>
    %31 = vector.extract_strided_slice %24 {offsets = [2, 0, 0], sizes = [8, 8, 64], strides = [1, 1, 1]} : vector<10x10x64xbf16> to vector<8x8x64xbf16>
    %32 = vector.extract_strided_slice %24 {offsets = [2, 1, 0], sizes = [8, 8, 64], strides = [1, 1, 1]} : vector<10x10x64xbf16> to vector<8x8x64xbf16>
    %33 = vector.extract_strided_slice %24 {offsets = [2, 2, 0], sizes = [8, 8, 64], strides = [1, 1, 1]} : vector<10x10x64xbf16> to vector<8x8x64xbf16>
    %34 = tpu.concatenate %25, %26, %27, %28, %29, %30, %31, %32, %33 in 2 : vector<8x8x64xbf16>, vector<8x8x64xbf16>, vector<8x8x64xbf16>, vector<8x8x64xbf16>, vector<8x8x64xbf16>, vector<8x8x64xbf16>, vector<8x8x64xbf16>, vector<8x8x64xbf16>, vector<8x8x64xbf16> -> vector<8x8x576xbf16>
    %35 = vector.shape_cast %34 : vector<8x8x576xbf16> to vector<64x576xbf16>
    %c0_16 = arith.constant 0 : index
    %c0_17 = arith.constant 0 : index
    %36 = vector.load %arg3[%c0_16, %c0_17] : memref<576x128xbf16, #tpu.memory_space<vmem>>, vector<576x128xbf16>
    %cst_18 = arith.constant dense<0.000000e+00> : vector<64x128xf32>
    %37 = tpu.matmul %35, %36, %cst_18 {dimension_numbers = #tpu.dot_dimension_numbers<[1], [0], [0], [1], [0, 0, 1, 1], [], []>} : vector<64x576xbf16>, vector<576x128xbf16>, vector<64x128xf32> -> vector<64x128xf32>
    %c0_19 = arith.constant 0 : index
    %c0_20 = arith.constant 0 : index
    %38 = vector.load %arg7[%c0_19, %c0_20] : memref<1x128xf32, #tpu.memory_space<vmem>>, vector<1x128xf32>
    %39 = vector.broadcast %38 : vector<1x128xf32> to vector<64x128xf32>
    %40 = arith.addf %37, %39 : vector<64x128xf32>
    %cst_21 = arith.constant 0.000000e+00 : f32
    %41 = vector.broadcast %cst_21 : f32 to vector<64x128xf32>
    %42 = arith.maximumf %40, %41 : vector<64x128xf32>
    %43 = vector.shape_cast %42 : vector<64x128xf32> to vector<4x2x4x2x128xf32>
    %44 = vector.extract_strided_slice %43 {offsets = [0, 0, 0, 0, 0], sizes = [4, 1, 4, 2, 128], strides = [1, 1, 1, 1, 1]} : vector<4x2x4x2x128xf32> to vector<4x1x4x2x128xf32>
    %45 = vector.shape_cast %44 : vector<4x1x4x2x128xf32> to vector<4x4x2x128xf32>
    %46 = vector.extract_strided_slice %43 {offsets = [0, 1, 0, 0, 0], sizes = [4, 1, 4, 2, 128], strides = [1, 1, 1, 1, 1]} : vector<4x2x4x2x128xf32> to vector<4x1x4x2x128xf32>
    %47 = vector.shape_cast %46 : vector<4x1x4x2x128xf32> to vector<4x4x2x128xf32>
    %48 = arith.maximumf %45, %47 : vector<4x4x2x128xf32>
    %49 = vector.extract_strided_slice %48 {offsets = [0, 0, 0, 0], sizes = [4, 4, 1, 128], strides = [1, 1, 1, 1]} : vector<4x4x2x128xf32> to vector<4x4x1x128xf32>
    %50 = vector.shape_cast %49 : vector<4x4x1x128xf32> to vector<4x4x128xf32>
    %51 = vector.extract_strided_slice %48 {offsets = [0, 0, 1, 0], sizes = [4, 4, 1, 128], strides = [1, 1, 1, 1]} : vector<4x4x2x128xf32> to vector<4x4x1x128xf32>
    %52 = vector.shape_cast %51 : vector<4x4x1x128xf32> to vector<4x4x128xf32>
    %53 = arith.maximumf %50, %52 : vector<4x4x128xf32>
    %cst_22 = arith.constant 0.000000e+00 : bf16
    %54 = vector.broadcast %cst_22 : bf16 to vector<6x6x128xbf16>
    %c0_23 = arith.constant 0 : index
    %c0_24 = arith.constant 0 : index
    %c0_25 = arith.constant 0 : index
    %55 = vector.load %arg12[%c0_23, %c0_24, %c0_25] : memref<6x6x128xbf16, #tpu.memory_space<vmem>>, vector<6x6x128xbf16>
    tpu.vector_store %arg12[%c0_23, %c0_24, %c0_25], %54 {strides = array<i32>} : memref<6x6x128xbf16, #tpu.memory_space<vmem>>, vector<6x6x128xbf16>,
    %56 = arith.truncf %53 : vector<4x4x128xf32> to vector<4x4x128xbf16>
    %c1_26 = arith.constant 1 : index
    %c1_27 = arith.constant 1 : index
    %c0_28 = arith.constant 0 : index
    %57 = vector.load %arg12[%c1_26, %c1_27, %c0_28] : memref<6x6x128xbf16, #tpu.memory_space<vmem>>, vector<4x4x128xbf16>
    tpu.vector_store %arg12[%c1_26, %c1_27, %c0_28], %56 {strides = array<i32>} : memref<6x6x128xbf16, #tpu.memory_space<vmem>>, vector<4x4x128xbf16>,
    %c0_29 = arith.constant 0 : index
    %c0_30 = arith.constant 0 : index
    %c0_31 = arith.constant 0 : index
    %58 = vector.load %arg12[%c0_29, %c0_30, %c0_31] : memref<6x6x128xbf16, #tpu.memory_space<vmem>>, vector<6x6x128xbf16>
    %59 = vector.extract_strided_slice %58 {offsets = [0, 0, 0], sizes = [4, 4, 128], strides = [1, 1, 1]} : vector<6x6x128xbf16> to vector<4x4x128xbf16>
    %60 = vector.extract_strided_slice %58 {offsets = [0, 1, 0], sizes = [4, 4, 128], strides = [1, 1, 1]} : vector<6x6x128xbf16> to vector<4x4x128xbf16>
    %61 = vector.extract_strided_slice %58 {offsets = [0, 2, 0], sizes = [4, 4, 128], strides = [1, 1, 1]} : vector<6x6x128xbf16> to vector<4x4x128xbf16>
    %62 = vector.extract_strided_slice %58 {offsets = [1, 0, 0], sizes = [4, 4, 128], strides = [1, 1, 1]} : vector<6x6x128xbf16> to vector<4x4x128xbf16>
    %63 = vector.extract_strided_slice %58 {offsets = [1, 1, 0], sizes = [4, 4, 128], strides = [1, 1, 1]} : vector<6x6x128xbf16> to vector<4x4x128xbf16>
    %64 = vector.extract_strided_slice %58 {offsets = [1, 2, 0], sizes = [4, 4, 128], strides = [1, 1, 1]} : vector<6x6x128xbf16> to vector<4x4x128xbf16>
    %65 = vector.extract_strided_slice %58 {offsets = [2, 0, 0], sizes = [4, 4, 128], strides = [1, 1, 1]} : vector<6x6x128xbf16> to vector<4x4x128xbf16>
    %66 = vector.extract_strided_slice %58 {offsets = [2, 1, 0], sizes = [4, 4, 128], strides = [1, 1, 1]} : vector<6x6x128xbf16> to vector<4x4x128xbf16>
    %67 = vector.extract_strided_slice %58 {offsets = [2, 2, 0], sizes = [4, 4, 128], strides = [1, 1, 1]} : vector<6x6x128xbf16> to vector<4x4x128xbf16>
    %68 = tpu.concatenate %59, %60, %61, %62, %63, %64, %65, %66, %67 in 2 : vector<4x4x128xbf16>, vector<4x4x128xbf16>, vector<4x4x128xbf16>, vector<4x4x128xbf16>, vector<4x4x128xbf16>, vector<4x4x128xbf16>, vector<4x4x128xbf16>, vector<4x4x128xbf16>, vector<4x4x128xbf16> -> vector<4x4x1152xbf16>
    %69 = vector.shape_cast %68 : vector<4x4x1152xbf16> to vector<16x1152xbf16>
    %c0_32 = arith.constant 0 : index
    %c0_33 = arith.constant 0 : index
    %70 = vector.load %arg4[%c0_32, %c0_33] : memref<1152x256xbf16, #tpu.memory_space<vmem>>, vector<1152x256xbf16>
    %cst_34 = arith.constant dense<0.000000e+00> : vector<16x256xf32>
    %71 = tpu.matmul %69, %70, %cst_34 {dimension_numbers = #tpu.dot_dimension_numbers<[1], [0], [0], [1], [0, 0, 1, 1], [], []>} : vector<16x1152xbf16>, vector<1152x256xbf16>, vector<16x256xf32> -> vector<16x256xf32>
    %c0_35 = arith.constant 0 : index
    %c0_36 = arith.constant 0 : index
    %72 = vector.load %arg8[%c0_35, %c0_36] : memref<1x256xf32, #tpu.memory_space<vmem>>, vector<1x256xf32>
    %73 = vector.broadcast %72 : vector<1x256xf32> to vector<16x256xf32>
    %74 = arith.addf %71, %73 : vector<16x256xf32>
    %cst_37 = arith.constant 0.000000e+00 : f32
    %75 = vector.broadcast %cst_37 : f32 to vector<16x256xf32>
    %76 = arith.maximumf %74, %75 : vector<16x256xf32>
    %77 = vector.shape_cast %76 : vector<16x256xf32> to vector<2x2x2x2x256xf32>
    %78 = vector.extract_strided_slice %77 {offsets = [0, 0, 0, 0, 0], sizes = [2, 1, 2, 2, 256], strides = [1, 1, 1, 1, 1]} : vector<2x2x2x2x256xf32> to vector<2x1x2x2x256xf32>
    %79 = vector.shape_cast %78 : vector<2x1x2x2x256xf32> to vector<2x2x2x256xf32>
    %80 = vector.extract_strided_slice %77 {offsets = [0, 1, 0, 0, 0], sizes = [2, 1, 2, 2, 256], strides = [1, 1, 1, 1, 1]} : vector<2x2x2x2x256xf32> to vector<2x1x2x2x256xf32>
    %81 = vector.shape_cast %80 : vector<2x1x2x2x256xf32> to vector<2x2x2x256xf32>
    %82 = arith.maximumf %79, %81 : vector<2x2x2x256xf32>
    %83 = vector.extract_strided_slice %82 {offsets = [0, 0, 0, 0], sizes = [2, 2, 1, 256], strides = [1, 1, 1, 1]} : vector<2x2x2x256xf32> to vector<2x2x1x256xf32>
    %84 = vector.shape_cast %83 : vector<2x2x1x256xf32> to vector<2x2x256xf32>
    %85 = vector.extract_strided_slice %82 {offsets = [0, 0, 1, 0], sizes = [2, 2, 1, 256], strides = [1, 1, 1, 1]} : vector<2x2x2x256xf32> to vector<2x2x1x256xf32>
    %86 = vector.shape_cast %85 : vector<2x2x1x256xf32> to vector<2x2x256xf32>
    %87 = arith.maximumf %84, %86 : vector<2x2x256xf32>
    %cst_38 = arith.constant 0.000000e+00 : bf16
    %88 = vector.broadcast %cst_38 : bf16 to vector<4x4x256xbf16>
    %c0_39 = arith.constant 0 : index
    %c0_40 = arith.constant 0 : index
    %c0_41 = arith.constant 0 : index
    %89 = vector.load %arg13[%c0_39, %c0_40, %c0_41] : memref<4x4x256xbf16, #tpu.memory_space<vmem>>, vector<4x4x256xbf16>
    tpu.vector_store %arg13[%c0_39, %c0_40, %c0_41], %88 {strides = array<i32>} : memref<4x4x256xbf16, #tpu.memory_space<vmem>>, vector<4x4x256xbf16>,
    %90 = arith.truncf %87 : vector<2x2x256xf32> to vector<2x2x256xbf16>
    %c1_42 = arith.constant 1 : index
    %c1_43 = arith.constant 1 : index
    %c0_44 = arith.constant 0 : index
    %91 = vector.load %arg13[%c1_42, %c1_43, %c0_44] : memref<4x4x256xbf16, #tpu.memory_space<vmem>>, vector<2x2x256xbf16>
    tpu.vector_store %arg13[%c1_42, %c1_43, %c0_44], %90 {strides = array<i32>} : memref<4x4x256xbf16, #tpu.memory_space<vmem>>, vector<2x2x256xbf16>,
    %c0_45 = arith.constant 0 : index
    %c0_46 = arith.constant 0 : index
    %c0_47 = arith.constant 0 : index
    %92 = vector.load %arg13[%c0_45, %c0_46, %c0_47] : memref<4x4x256xbf16, #tpu.memory_space<vmem>>, vector<4x4x256xbf16>
    %93 = vector.extract_strided_slice %92 {offsets = [0, 0, 0], sizes = [2, 2, 256], strides = [1, 1, 1]} : vector<4x4x256xbf16> to vector<2x2x256xbf16>
    %94 = vector.extract_strided_slice %92 {offsets = [0, 1, 0], sizes = [2, 2, 256], strides = [1, 1, 1]} : vector<4x4x256xbf16> to vector<2x2x256xbf16>
    %95 = vector.extract_strided_slice %92 {offsets = [0, 2, 0], sizes = [2, 2, 256], strides = [1, 1, 1]} : vector<4x4x256xbf16> to vector<2x2x256xbf16>
    %96 = vector.extract_strided_slice %92 {offsets = [1, 0, 0], sizes = [2, 2, 256], strides = [1, 1, 1]} : vector<4x4x256xbf16> to vector<2x2x256xbf16>
    %97 = vector.extract_strided_slice %92 {offsets = [1, 1, 0], sizes = [2, 2, 256], strides = [1, 1, 1]} : vector<4x4x256xbf16> to vector<2x2x256xbf16>
    %98 = vector.extract_strided_slice %92 {offsets = [1, 2, 0], sizes = [2, 2, 256], strides = [1, 1, 1]} : vector<4x4x256xbf16> to vector<2x2x256xbf16>
    %99 = vector.extract_strided_slice %92 {offsets = [2, 0, 0], sizes = [2, 2, 256], strides = [1, 1, 1]} : vector<4x4x256xbf16> to vector<2x2x256xbf16>
    %100 = vector.extract_strided_slice %92 {offsets = [2, 1, 0], sizes = [2, 2, 256], strides = [1, 1, 1]} : vector<4x4x256xbf16> to vector<2x2x256xbf16>
    %101 = vector.extract_strided_slice %92 {offsets = [2, 2, 0], sizes = [2, 2, 256], strides = [1, 1, 1]} : vector<4x4x256xbf16> to vector<2x2x256xbf16>
    %102 = tpu.concatenate %93, %94, %95, %96, %97, %98, %99, %100, %101 in 2 : vector<2x2x256xbf16>, vector<2x2x256xbf16>, vector<2x2x256xbf16>, vector<2x2x256xbf16>, vector<2x2x256xbf16>, vector<2x2x256xbf16>, vector<2x2x256xbf16>, vector<2x2x256xbf16>, vector<2x2x256xbf16> -> vector<2x2x2304xbf16>
    %103 = vector.shape_cast %102 : vector<2x2x2304xbf16> to vector<4x2304xbf16>
    %c0_48 = arith.constant 0 : index
    %c0_49 = arith.constant 0 : index
    %104 = vector.load %arg5[%c0_48, %c0_49] : memref<2304x256xbf16, #tpu.memory_space<vmem>>, vector<2304x256xbf16>
    %cst_50 = arith.constant dense<0.000000e+00> : vector<4x256xf32>
    %105 = tpu.matmul %103, %104, %cst_50 {dimension_numbers = #tpu.dot_dimension_numbers<[1], [0], [0], [1], [0, 0, 1, 1], [], []>} : vector<4x2304xbf16>, vector<2304x256xbf16>, vector<4x256xf32> -> vector<4x256xf32>
    %c0_51 = arith.constant 0 : index
    %c0_52 = arith.constant 0 : index
    %106 = vector.load %arg9[%c0_51, %c0_52] : memref<1x256xf32, #tpu.memory_space<vmem>>, vector<1x256xf32>
    %107 = vector.broadcast %106 : vector<1x256xf32> to vector<4x256xf32>
    %108 = arith.addf %105, %107 : vector<4x256xf32>
    %cst_53 = arith.constant 0.000000e+00 : f32
    %109 = vector.broadcast %cst_53 : f32 to vector<4x256xf32>
    %110 = arith.maximumf %108, %109 : vector<4x256xf32>
    %111 = vector.shape_cast %110 : vector<4x256xf32> to vector<1x2x1x2x256xf32>
    %112 = vector.extract_strided_slice %111 {offsets = [0, 0, 0, 0, 0], sizes = [1, 1, 1, 2, 256], strides = [1, 1, 1, 1, 1]} : vector<1x2x1x2x256xf32> to vector<1x1x1x2x256xf32>
    %113 = vector.shape_cast %112 : vector<1x1x1x2x256xf32> to vector<1x1x2x256xf32>
    %114 = vector.extract_strided_slice %111 {offsets = [0, 1, 0, 0, 0], sizes = [1, 1, 1, 2, 256], strides = [1, 1, 1, 1, 1]} : vector<1x2x1x2x256xf32> to vector<1x1x1x2x256xf32>
    %115 = vector.shape_cast %114 : vector<1x1x1x2x256xf32> to vector<1x1x2x256xf32>
    %116 = arith.maximumf %113, %115 : vector<1x1x2x256xf32>
    %117 = vector.extract_strided_slice %116 {offsets = [0, 0, 0, 0], sizes = [1, 1, 1, 256], strides = [1, 1, 1, 1]} : vector<1x1x2x256xf32> to vector<1x1x1x256xf32>
    %118 = vector.shape_cast %117 : vector<1x1x1x256xf32> to vector<1x1x256xf32>
    %119 = vector.extract_strided_slice %116 {offsets = [0, 0, 1, 0], sizes = [1, 1, 1, 256], strides = [1, 1, 1, 1]} : vector<1x1x2x256xf32> to vector<1x1x1x256xf32>
    %120 = vector.shape_cast %119 : vector<1x1x1x256xf32> to vector<1x1x256xf32>
    %121 = arith.maximumf %118, %120 : vector<1x1x256xf32>
    %c0_54 = arith.constant 0 : index
    %c0_55 = arith.constant 0 : index
    %c0_56 = arith.constant 0 : index
    %c0_57 = arith.constant 0 : index
    %122 = vector.load %arg10[%c0_54, %c0_55, %c0_56, %c0_57] : memref<1x1x1x256xf32, #tpu.memory_space<vmem>>, vector<1x1x1x256xf32>
    %123 = vector.shape_cast %122 : vector<1x1x1x256xf32> to vector<1x1x256xf32>
    %124 = vector.shape_cast %121 : vector<1x1x256xf32> to vector<1x1x1x256xf32>
    tpu.vector_store %arg10[%c0_54, %c0_55, %c0_56, %c0_57], %124 {strides = array<i32>} : memref<1x1x1x256xf32, #tpu.memory_space<vmem>>, vector<1x1x1x256xf32>,
    return
  }
  func.func @transform_0(%arg0: i32) -> (i32, i32, i32) {
    %c0_i32 = arith.constant 0 : i32
    %c0_i32_0 = arith.constant 0 : i32
    %c0_i32_1 = arith.constant 0 : i32
    return %arg0, %c0_i32, %c0_i32_0 : i32, i32, i32
  }
  func.func @transform_1(%arg0: i32) -> (i32, i32) {
    %c0_i32 = arith.constant 0 : i32
    %c0_i32_0 = arith.constant 0 : i32
    %c0_i32_1 = arith.constant 0 : i32
    return %c0_i32, %c0_i32_0 : i32, i32
  }
  func.func @transform_2(%arg0: i32) -> (i32, i32) {
    %c0_i32 = arith.constant 0 : i32
    %c0_i32_0 = arith.constant 0 : i32
    %c0_i32_1 = arith.constant 0 : i32
    return %c0_i32, %c0_i32_0 : i32, i32
  }
  func.func @transform_3(%arg0: i32) -> (i32, i32) {
    %c0_i32 = arith.constant 0 : i32
    %c0_i32_0 = arith.constant 0 : i32
    %c0_i32_1 = arith.constant 0 : i32
    return %c0_i32, %c0_i32_0 : i32, i32
  }
  func.func @transform_4(%arg0: i32) -> (i32, i32) {
    %c0_i32 = arith.constant 0 : i32
    %c0_i32_0 = arith.constant 0 : i32
    %c0_i32_1 = arith.constant 0 : i32
    return %c0_i32, %c0_i32_0 : i32, i32
  }
  func.func @transform_5(%arg0: i32) -> (i32, i32) {
    %c0_i32 = arith.constant 0 : i32
    %c0_i32_0 = arith.constant 0 : i32
    %c0_i32_1 = arith.constant 0 : i32
    return %c0_i32, %c0_i32_0 : i32, i32
  }
  func.func @transform_6(%arg0: i32) -> (i32, i32) {
    %c0_i32 = arith.constant 0 : i32
    %c0_i32_0 = arith.constant 0 : i32
    %c0_i32_1 = arith.constant 0 : i32
    return %c0_i32, %c0_i32_0 : i32, i32
  }
  func.func @transform_7(%arg0: i32) -> (i32, i32) {
    %c0_i32 = arith.constant 0 : i32
    %c0_i32_0 = arith.constant 0 : i32
    %c0_i32_1 = arith.constant 0 : i32
    return %c0_i32, %c0_i32_0 : i32, i32
  }
  func.func @transform_8(%arg0: i32) -> (i32, i32) {
    %c0_i32 = arith.constant 0 : i32
    %c0_i32_0 = arith.constant 0 : i32
    %c0_i32_1 = arith.constant 0 : i32
    return %c0_i32, %c0_i32_0 : i32, i32
  }
  func.func @transform_9(%arg0: i32) -> (i32, i32, i32, i32) {
    %c0_i32 = arith.constant 0 : i32
    %c0_i32_0 = arith.constant 0 : i32
    %c0_i32_1 = arith.constant 0 : i32
    %c0_i32_2 = arith.constant 0 : i32
    return %arg0, %c0_i32, %c0_i32_0, %c0_i32_1 : i32, i32, i32, i32
  }
}

</mosaic_0001>

<llo_original>
// kernel: feature_extractor.1
$region0: #{feature_extractor.1}
  #allocation0 [shape = 'u32[]', space=smem, size = 0x4, offset = 0x4, fixed_abs, tag = 'smem constant byte address 0x4 - core index']
  #allocation1 [shape = 'u32[144,128]{1,0:T(1,128)}', space=vmem, size = 0x12000, scoped, tag = 'internal scratch']
  #allocation2 [shape = 'bf16[10,10,64]{2,1,0:T(8,128)(2,1)}', space=vmem, size = 0xa000, scoped, tag = 'scratch operand']
  #allocation3 [shape = 'bf16[6,6,128]{2,1,0:T(8,128)(2,1)}', space=vmem, size = 0x3000, scoped, tag = 'scratch operand']
  #allocation4 [shape = 'bf16[4,4,256]{2,1,0:T(4,128)(2,1)}', space=vmem, size = 0x2000, scoped, tag = 'scratch operand']
  %s0 = inlined_call_operand.vmem [shape: bf16[2,256,27], index: 0, kind: input, shape index: {}]
  %s1 = inlined_call_operand.vmem [shape: bf16[27,64], index: 1, kind: input, shape index: {}]
  %s2 = inlined_call_operand.vmem [shape: bf16[576,128], index: 2, kind: input, shape index: {}]
  %s3 = inlined_call_operand.vmem [shape: bf16[1152,256], index: 3, kind: input, shape index: {}]
  %s4 = inlined_call_operand.vmem [shape: bf16[2304,256], index: 4, kind: input, shape index: {}]
  %s5 = inlined_call_operand.vmem [shape: f32[1,64], index: 5, kind: input, shape index: {}]
  %s6 = inlined_call_operand.vmem [shape: f32[1,128], index: 6, kind: input, shape index: {}]
  %s7 = inlined_call_operand.vmem [shape: f32[1,256], index: 7, kind: input, shape index: {}]
  %s8 = inlined_call_operand.vmem [shape: f32[1,256], index: 8, kind: input, shape index: {}]
  %s9 = inlined_call_operand.vmem [shape: f32[2,1,1,256], index: 9, kind: output, shape index: {}]
  %s10 = sld [smem:[#allocation0]]
  $region69: #{feature_extractor.1} parent=0
    _
  %s12 = ssub.s32 1, %s10
  %s13 = scalar_select 0, %s12, %s10
  loop: start=0, step=1, limit=4
  $region2: #{feature_extractor.1} parent=0 // loop_pre_header
    _
  $region3: #{feature_extractor.1} parent=0 // loop_header
    %s15 = sphi 0, %s19
    %p16 = scmp.ge.s32.totalorder %s15, 4
    %s25 = sphi 0, %s27
    %s28 = sphi 0, %s25
    %s29 = sphi 0, %s28
    %s45 = sphi 0, %s29
    %s49 = sphi 0, %s49
    %s51 = sphi 0, %s49
    %s52 = sphi 0, %s51
    %s66 = sphi 0, %s52
    %s70 = sphi 0, %s70
    %s72 = sphi 0, %s70
    %s73 = sphi 0, %s72
    %s87 = sphi 0, %s73
    %s91 = sphi 0, %s91
    %s93 = sphi 0, %s91
    %s94 = sphi 0, %s93
    %s108 = sphi 0, %s94
    %s112 = sphi 0, %s112
    %s114 = sphi 0, %s112
    %s115 = sphi 0, %s114
    %s129 = sphi 0, %s115
    %s133 = sphi 0, %s133
    %s135 = sphi 0, %s133
    %s136 = sphi 0, %s135
    %s150 = sphi 0, %s136
    %s154 = sphi 0, %s154
    %s156 = sphi 0, %s154
    %s157 = sphi 0, %s156
    %s171 = sphi 0, %s157
    %s175 = sphi 0, %s175
    %s177 = sphi 0, %s175
    %s178 = sphi 0, %s177
    %s192 = sphi 0, %s178
    %s196 = sphi 0, %s196
    %s198 = sphi 0, %s196
    %s199 = sphi 0, %s198
    %s213 = sphi 0, %s199
    %s219 = sphi 0, %s221
    %s222 = sphi 0, %s219
    %s223 = sphi 0, %s222
    %s239 = sphi 0, %s223
  $region4: #{feature_extractor.1} parent=0 // loop_header_branch
    %18 = sbr.rel (%p16) target = $region8
  $region5: #{feature_extractor.1} parent=0 // loop_body
    %s20 = ssub.s32 %s15, 1
    %s21 = ssub.s32 %s15, 2
    %s22 = sadd.s32 %s15, 1
    %s23 = ssub.s32 %s15, %s22
    %p24 = scmp.eq.s32.totalorder %s23, 0
    %s26 = sadd.s32 %s25, 1
    %s27 = scalar_select %p24, %s25, %s26
    %p30 = pneg %p24
    %p31 = scmp.eq.s32.totalorder %s15, 1
    %p32 = por %p30, %p31
    %p33 = scmp.ne.s32.totalorder %s25, %s28
    %p34 = scmp.eq.s32.totalorder %s15, 0
    %p35 = por %p33, %p34
    %p36 = scmp.ne.s32.totalorder %s25, %s28
    %p37 = scmp.eq.s32.totalorder %s20, 1
    %p38 = por %p36, %p37
    %p39 = scmp.ne.s32.totalorder %s28, %s29
    %p40 = scmp.eq.s32.totalorder %s20, 0
    %p41 = por %p39, %p40
    %p42 = scmp.ne.s32.totalorder %s28, %s29
    %p43 = scmp.eq.s32.totalorder %s21, 1
    %p44 = por %p42, %p43
    %p46 = scmp.ne.s32.totalorder %s29, %s45
    %p47 = scmp.eq.s32.totalorder %s21, 0
    %p48 = por %p46, %p47
    %s50 = sadd.s32 %s49, 1
    %p53 = scmp.eq.s32.totalorder %s15, 1
    %p54 = scmp.ne.s32.totalorder %s49, %s51
    %p55 = scmp.eq.s32.totalorder %s15, 0
    %p56 = por %p54, %p55
    %p57 = scmp.ne.s32.totalorder %s49, %s51
    %p58 = scmp.eq.s32.totalorder %s20, 1
    %p59 = por %p57, %p58
    %p60 = scmp.ne.s32.totalorder %s51, %s52
    %p61 = scmp.eq.s32.totalorder %s20, 0
    %p62 = por %p60, %p61
    %p63 = scmp.ne.s32.totalorder %s51, %s52
    %p64 = scmp.eq.s32.totalorder %s21, 1
    %p65 = por %p63, %p64
    %p67 = scmp.ne.s32.totalorder %s52, %s66
    %p68 = scmp.eq.s32.totalorder %s21, 0
    %p69 = por %p67, %p68
    %s71 = sadd.s32 %s70, 1
    %p74 = scmp.eq.s32.totalorder %s15, 1
    %p75 = scmp.ne.s32.totalorder %s70, %s72
    %p76 = scmp.eq.s32.totalorder %s15, 0
    %p77 = por %p75, %p76
    %p78 = scmp.ne.s32.totalorder %s70, %s72
    %p79 = scmp.eq.s32.totalorder %s20, 1
    %p80 = por %p78, %p79
    %p81 = scmp.ne.s32.totalorder %s72, %s73
    %p82 = scmp.eq.s32.totalorder %s20, 0
    %p83 = por %p81, %p82
    %p84 = scmp.ne.s32.totalorder %s72, %s73
    %p85 = scmp.eq.s32.totalorder %s21, 1
    %p86 = por %p84, %p85
    %p88 = scmp.ne.s32.totalorder %s73, %s87
    %p89 = scmp.eq.s32.totalorder %s21, 0
    %p90 = por %p88, %p89
    %s92 = sadd.s32 %s91, 1
    %p95 = scmp.eq.s32.totalorder %s15, 1
    %p96 = scmp.ne.s32.totalorder %s91, %s93
    %p97 = scmp.eq.s32.totalorder %s15, 0
    %p98 = por %p96, %p97
    %p99 = scmp.ne.s32.totalorder %s91, %s93
    %p100 = scmp.eq.s32.totalorder %s20, 1
    %p101 = por %p99, %p100
    %p102 = scmp.ne.s32.totalorder %s93, %s94
    %p103 = scmp.eq.s32.totalorder %s20, 0
    %p104 = por %p102, %p103
    %p105 = scmp.ne.s32.totalorder %s93, %s94
    %p106 = scmp.eq.s32.totalorder %s21, 1
    %p107 = por %p105, %p106
    %p109 = scmp.ne.s32.totalorder %s94, %s108
    %p110 = scmp.eq.s32.totalorder %s21, 0
    %p111 = por %p109, %p110
    %s113 = sadd.s32 %s112, 1
    %p116 = scmp.eq.s32.totalorder %s15, 1
    %p117 = scmp.ne.s32.totalorder %s112, %s114
    %p118 = scmp.eq.s32.totalorder %s15, 0
    %p119 = por %p117, %p118
    %p120 = scmp.ne.s32.totalorder %s112, %s114
    %p121 = scmp.eq.s32.totalorder %s20, 1
    %p122 = por %p120, %p121
    %p123 = scmp.ne.s32.totalorder %s114, %s115
    %p124 = scmp.eq.s32.totalorder %s20, 0
    %p125 = por %p123, %p124
    %p126 = scmp.ne.s32.totalorder %s114, %s115
    %p127 = scmp.eq.s32.totalorder %s21, 1
    %p128 = por %p126, %p127
    %p130 = scmp.ne.s32.totalorder %s115, %s129
    %p131 = scmp.eq.s32.totalorder %s21, 0
    %p132 = por %p130, %p131
    %s134 = sadd.s32 %s133, 1
    %p137 = scmp.eq.s32.totalorder %s15, 1
    %p138 = scmp.ne.s32.totalorder %s133, %s135
    %p139 = scmp.eq.s32.totalorder %s15, 0
    %p140 = por %p138, %p139
    %p141 = scmp.ne.s32.totalorder %s133, %s135
    %p142 = scmp.eq.s32.totalorder %s20, 1
    %p143 = por %p141, %p142
    %p144 = scmp.ne.s32.totalorder %s135, %s136
    %p145 = scmp.eq.s32.totalorder %s20, 0
    %p146 = por %p144, %p145
    %p147 = scmp.ne.s32.totalorder %s135, %s136
    %p148 = scmp.eq.s32.totalorder %s21, 1
    %p149 = por %p147, %p148
    %p151 = scmp.ne.s32.totalorder %s136, %s150
    %p152 = scmp.eq.s32.totalorder %s21, 0
    %p153 = por %p151, %p152
    %s155 = sadd.s32 %s154, 1
    %p158 = scmp.eq.s32.totalorder %s15, 1
    %p159 = scmp.ne.s32.totalorder %s154, %s156
    %p160 = scmp.eq.s32.totalorder %s15, 0
    %p161 = por %p159, %p160
    %p162 = scmp.ne.s32.totalorder %s154, %s156
    %p163 = scmp.eq.s32.totalorder %s20, 1
    %p164 = por %p162, %p163
    %p165 = scmp.ne.s32.totalorder %s156, %s157
    %p166 = scmp.eq.s32.totalorder %s20, 0
    %p167 = por %p165, %p166
    %p168 = scmp.ne.s32.totalorder %s156, %s157
    %p169 = scmp.eq.s32.totalorder %s21, 1
    %p170 = por %p168, %p169
    %p172 = scmp.ne.s32.totalorder %s157, %s171
    %p173 = scmp.eq.s32.totalorder %s21, 0
    %p174 = por %p172, %p173
    %s176 = sadd.s32 %s175, 1
    %p179 = scmp.eq.s32.totalorder %s15, 1
    %p180 = scmp.ne.s32.totalorder %s175, %s177
    %p181 = scmp.eq.s32.totalorder %s15, 0
    %p182 = por %p180, %p181
    %p183 = scmp.ne.s32.totalorder %s175, %s177
    %p184 = scmp.eq.s32.totalorder %s20, 1
    %p185 = por %p183, %p184
    %p186 = scmp.ne.s32.totalorder %s177, %s178
    %p187 = scmp.eq.s32.totalorder %s20, 0
    %p188 = por %p186, %p187
    %p189 = scmp.ne.s32.totalorder %s177, %s178
    %p190 = scmp.eq.s32.totalorder %s21, 1
    %p191 = por %p189, %p190
    %p193 = scmp.ne.s32.totalorder %s178, %s192
    %p194 = scmp.eq.s32.totalorder %s21, 0
    %p195 = por %p193, %p194
    %s197 = sadd.s32 %s196, 1
    %p200 = scmp.eq.s32.totalorder %s15, 1
    %p201 = scmp.ne.s32.totalorder %s196, %s198
    %p202 = scmp.eq.s32.totalorder %s15, 0
    %p203 = por %p201, %p202
    %p204 = scmp.ne.s32.totalorder %s196, %s198
    %p205 = scmp.eq.s32.totalorder %s20, 1
    %p206 = por %p204, %p205
    %p207 = scmp.ne.s32.totalorder %s198, %s199
    %p208 = scmp.eq.s32.totalorder %s20, 0
    %p209 = por %p207, %p208
    %p210 = scmp.ne.s32.totalorder %s198, %s199
    %p211 = scmp.eq.s32.totalorder %s21, 1
    %p212 = por %p210, %p211
    %p214 = scmp.ne.s32.totalorder %s199, %s213
    %p215 = scmp.eq.s32.totalorder %s21, 0
    %p216 = por %p214, %p215
    %s217 = ssub.s32 %s15, %s22
    %p218 = scmp.eq.s32.totalorder %s217, 0
    %s220 = sadd.s32 %s219, 1
    %s221 = scalar_select %p218, %s219, %s220
    %p224 = pneg %p218
    %p225 = scmp.eq.s32.totalorder %s15, 1
    %p226 = por %p224, %p225
    %p227 = scmp.ne.s32.totalorder %s219, %s222
    %p228 = scmp.eq.s32.totalorder %s15, 0
    %p229 = por %p227, %p228
    %p230 = scmp.ne.s32.totalorder %s219, %s222
    %p231 = scmp.eq.s32.totalorder %s20, 1
    %p232 = por %p230, %p231
    %p233 = scmp.ne.s32.totalorder %s222, %s223
    %p234 = scmp.eq.s32.totalorder %s20, 0
    %p235 = por %p233, %p234
    %p236 = scmp.ne.s32.totalorder %s222, %s223
    %p237 = scmp.eq.s32.totalorder %s21, 1
    %p238 = por %p236, %p237
    %p240 = scmp.ne.s32.totalorder %s223, %s239
    %p241 = scmp.eq.s32.totalorder %s21, 0
    %p242 = por %p240, %p241
    %p243 = scmp.le.s32.totalorder 1, %s15
    %p244 = scmp.lt.s32.totalorder %s15, 3
    %p245 = pnand %p243, %p244
    %p246 = pneg %p245
    // Predicated region
    $region9: #{feature_extractor.1} parent=5 // pred_check
      _
    $region10: #{feature_extractor.1} parent=5 // pred_check_branch
      %248 = sbr.rel (%p245) target = $region12
    $region11: #{feature_extractor.1} parent=5 // pred_region
      %s249 = ssub.s32 %s15, 1
      // Predicated region
      $region13: #{feature_extractor.1} parent=11 // pred_check
        %p250 = pneg %p62
      $region14: #{feature_extractor.1} parent=11 // pred_check_branch
        %252 = sbr.rel (%p250) target = $region16
      $region15: #{feature_extractor.1} parent=11 // pred_region
        _
      $region16: #{feature_extractor.1} parent=11 // pred_fallthru
        _
      // Predicated region
      $region17: #{feature_extractor.1} parent=11 // pred_check
        %p253 = pneg %p83
      $region18: #{feature_extractor.1} parent=11 // pred_check_branch
        %255 = sbr.rel (%p253) target = $region20
      $region19: #{feature_extractor.1} parent=11 // pred_region
        _
      $region20: #{feature_extractor.1} parent=11 // pred_fallthru
        _
      // Predicated region
      $region21: #{feature_extractor.1} parent=11 // pred_check
        %p256 = pneg %p104
      $region22: #{feature_extractor.1} parent=11 // pred_check_branch
        %258 = sbr.rel (%p256) target = $region24
      $region23: #{feature_extractor.1} parent=11 // pred_region
        _
      $region24: #{feature_extractor.1} parent=11 // pred_fallthru
        _
      // Predicated region
      $region25: #{feature_extractor.1} parent=11 // pred_check
        %p259 = pneg %p125
      $region26: #{feature_extractor.1} parent=11 // pred_check_branch
        %261 = sbr.rel (%p259) target = $region28
      $region27: #{feature_extractor.1} parent=11 // pred_region
        _
      $region28: #{feature_extractor.1} parent=11 // pred_fallthru
        _
      // Predicated region
      $region29: #{feature_extractor.1} parent=11 // pred_check
        %p262 = pneg %p146
      $region30: #{feature_extractor.1} parent=11 // pred_check_branch
        %264 = sbr.rel (%p262) target = $region32
      $region31: #{feature_extractor.1} parent=11 // pred_region
        _
      $region32: #{feature_extractor.1} parent=11 // pred_fallthru
        _
      // Predicated region
      $region33: #{feature_extractor.1} parent=11 // pred_check
        %p265 = pneg %p167
      $region34: #{feature_extractor.1} parent=11 // pred_check_branch
        %267 = sbr.rel (%p265) target = $region36
      $region35: #{feature_extractor.1} parent=11 // pred_region
        _
      $region36: #{feature_extractor.1} parent=11 // pred_fallthru
        _
      // Predicated region
      $region37: #{feature_extractor.1} parent=11 // pred_check
        %p268 = pneg %p188
      $region38: #{feature_extractor.1} parent=11 // pred_check_branch
        %270 = sbr.rel (%p268) target = $region40
      $region39: #{feature_extractor.1} parent=11 // pred_region
        _
      $region40: #{feature_extractor.1} parent=11 // pred_fallthru
        _
      // Predicated region
      $region41: #{feature_extractor.1} parent=11 // pred_check
        %p271 = pneg %p209
      $region42: #{feature_extractor.1} parent=11 // pred_check_branch
        %273 = sbr.rel (%p271) target = $region44
      $region43: #{feature_extractor.1} parent=11 // pred_region
        _
      $region44: #{feature_extractor.1} parent=11 // pred_fallthru
        _
    $region12: #{feature_extractor.1} parent=5 // pred_fallthru
      _
    %p274 = scmp.lt.s32.totalorder %s15, 2
    // Predicated region
    $region45: #{feature_extractor.1} parent=5 // pred_check
      %p275 = pneg %p274
    $region46: #{feature_extractor.1} parent=5 // pred_check_branch
      %277 = sbr.rel (%p275) target = $region48
    $region47: #{feature_extractor.1} parent=5 // pred_region
      // Predicated region
      $region49: #{feature_extractor.1} parent=47 // pred_check
        %p278 = pneg %p35
      $region50: #{feature_extractor.1} parent=47 // pred_check_branch
        %280 = sbr.rel (%p278) target = $region52
      $region51: #{feature_extractor.1} parent=47 // pred_region
        %p281 = scmp.lt.s32.totalorder %s15, 1
        %s282 = scalar_select %p281, %s15, 1
        %s283 = smul.addr %s282, 32
        %s284 = smul.addr %s283, 4
        %s285 = scalar_lea.vmem %s0, %s284
      $region52: #{feature_extractor.1} parent=47 // pred_fallthru
        _
    $region48: #{feature_extractor.1} parent=5 // pred_fallthru
      _
    %p286 = scmp.le.s32.totalorder 1, %s15
    %p287 = scmp.lt.s32.totalorder %s15, 3
    %p288 = pnand %p286, %p287
    %p289 = pneg %p288
    // Predicated region
    $region53: #{feature_extractor.1} parent=5 // pred_check
      _
    $region54: #{feature_extractor.1} parent=5 // pred_check_branch
      %291 = sbr.rel (%p288) target = $region56
    $region55: #{feature_extractor.1} parent=5 // pred_region
      %s292 = ssub.s32 %s15, 1
      %p293 = scmp.lt.s32.totalorder %s20, 1
      %s294 = scalar_select %p293, %s20, 1
      %s295 = smul.addr %s294, 32
      %s296 = smul.addr %s295, 4
      %s297 = scalar_lea.vmem %s0, %s296
      %p298 = pneg %p41
      %p299 = pneg %p38
      %p300 = pneg %p62
      %p301 = pneg %p59
      %p302 = pneg %p83
      %p303 = pneg %p80
      %p304 = pneg %p104
      %p305 = pneg %p101
      %p306 = pneg %p125
      %p307 = pneg %p122
      %p308 = pneg %p146
      %p309 = pneg %p143
      %p310 = pneg %p167
      %p311 = pneg %p164
      %p312 = pneg %p188
      %p313 = pneg %p185
      %p314 = pneg %p209
      %p315 = pneg %p206
      %p316 = pneg %p235
      %p317 = pneg %p232
      %p318 = scmp.lt.s32.totalorder %s20, 1
      %s319 = scalar_select %p318, %s20, 1
      %s320 = smul.addr %s319, 2
      %s321 = scalar_lea.vmem %s9, %s320
      %p322 = scmp.lt.s32.totalorder %s20, 1
      %s323 = scalar_select %p322, %s20, 1
      %s324 = smul.addr %s323, 32
      %s325 = smul.addr %s324, 4
      %s326 = scalar_lea.vmem %s0, %s325
      %p327 = scmp.lt.s32.totalorder %s20, 1
      %s328 = scalar_select %p327, %s20, 1
      %s329 = smul.addr %s328, 2
      %s330 = scalar_lea.vmem %s9, %s329
      %v332 = vld [vmem:[%s326] sm:$0xf]
      %v333 = vld [vmem:[%s326 + $0x4] sm:$0xf]
      %v334 = vld [vmem:[%s326 + $0x8] sm:$0xf]
      %v335 = vld [vmem:[%s326 + $0xc] sm:$0xf]
      %v336 = vld [vmem:[%s326 + $0x10] sm:$0xf]
      %v337 = vld [vmem:[%s326 + $0x14] sm:$0xf]
      %v338 = vld [vmem:[%s326 + $0x18] sm:$0xf]
      %v339 = vld [vmem:[%s326 + $0x1c] sm:$0xf]
      %v340 = vld [vmem:[%s326 + $0x20] sm:$0xf]
      %v341 = vld [vmem:[%s326 + $0x24] sm:$0xf]
      %v342 = vld [vmem:[%s326 + $0x28] sm:$0xf]
      %v343 = vld [vmem:[%s326 + $0x2c] sm:$0xf]
      %v344 = vld [vmem:[%s326 + $0x30] sm:$0xf]
      %v345 = vld [vmem:[%s326 + $0x34] sm:$0xf]
      %v346 = vld [vmem:[%s326 + $0x38] sm:$0xf]
      %v347 = vld [vmem:[%s326 + $0x3c] sm:$0xf]
      %v348 = vld [vmem:[%s326 + $0x40] sm:$0xf]
      %v349 = vld [vmem:[%s326 + $0x44] sm:$0xf]
      %v350 = vld [vmem:[%s326 + $0x48] sm:$0xf]
      %v351 = vld [vmem:[%s326 + $0x4c] sm:$0xf]
      %v352 = vld [vmem:[%s326 + $0x50] sm:$0xf]
      %v353 = vld [vmem:[%s326 + $0x54] sm:$0xf]
      %v354 = vld [vmem:[%s326 + $0x58] sm:$0xf]
      %v355 = vld [vmem:[%s326 + $0x5c] sm:$0xf]
      %v356 = vld [vmem:[%s326 + $0x60] sm:$0xf]
      %v357 = vld [vmem:[%s326 + $0x64] sm:$0xf]
      %v358 = vld [vmem:[%s326 + $0x68] sm:$0xf]
      %v359 = vld [vmem:[%s326 + $0x6c] sm:$0xf]
      %v360 = vld [vmem:[%s326 + $0x70] sm:$0xf]
      %v361 = vld [vmem:[%s326 + $0x74] sm:$0xf]
      %v362 = vld [vmem:[%s326 + $0x78] sm:$0xf]
      %v363 = vld [vmem:[%s326 + $0x7c] sm:$0xf]
      %v364 = vld [vmem:[%s1] sm:$0xf]
      %v365 = vld [vmem:[%s1 + $0x4] sm:$0xf]
      %v366 = vld [vmem:[%s1 + $0x8] sm:$0xf]
      %v367 = vld [vmem:[%s1 + $0xc] sm:$0x3]
      %v368 = vld [vmem:[%s5] sm:$0x1]
      %v370 = vlaneseq
      %v371 = vshrl.u32 %v370, 7
      %v372 = vsub.s32 0, %v371
      %v373 = vrot.slane %v368, %v372
      %v407 = vunpack.c.l.b16 %v332
      %v408 = vunpack.c.l.b16 %v333
      %v409 = vunpack.c.l.b16 %v334
      %v410 = vunpack.c.l.b16 %v335
      %v411 = vunpack.c.l.b16 %v336
      %v412 = vunpack.c.l.b16 %v337
      %v413 = vunpack.c.l.b16 %v338
      %v414 = vunpack.c.l.b16 %v339
      %v415 = vunpack.c.l.b16 %v340
      %v416 = vunpack.c.l.b16 %v341
      %v417 = vunpack.c.l.b16 %v342
      %v418 = vunpack.c.l.b16 %v343
      %v419 = vunpack.c.l.b16 %v344
      %v420 = vunpack.c.l.b16 %v345
      %v421 = vunpack.c.l.b16 %v346
      %v422 = vunpack.c.l.b16 %v347
      %v423 = vunpack.c.l.b16 %v348
      %v424 = vunpack.c.l.b16 %v349
      %v425 = vunpack.c.l.b16 %v350
      %v426 = vunpack.c.l.b16 %v351
      %v427 = vunpack.c.l.b16 %v352
      %v428 = vunpack.c.l.b16 %v353
      %v429 = vunpack.c.l.b16 %v354
      %v430 = vunpack.c.l.b16 %v355
      %v431 = vunpack.c.l.b16 %v356
      %v432 = vunpack.c.l.b16 %v357
      %v433 = vunpack.c.l.b16 %v358
      %v434 = vunpack.c.l.b16 %v359
      %v435 = vunpack.c.l.b16 %v360
      %v436 = vunpack.c.l.b16 %v361
      %v437 = vunpack.c.l.b16 %v362
      %v438 = vunpack.c.l.b16 %v363
      %v439 = vpack.c.b16 %v408, %v407
      %v440 = vpack.c.b16 %v410, %v409
      %v441 = vpack.c.b16 %v412, %v411
      %v442 = vpack.c.b16 %v414, %v413
      %v443 = vpack.c.b16 %v416, %v415
      %v444 = vpack.c.b16 %v418, %v417
      %v445 = vpack.c.b16 %v420, %v419
      %v446 = vpack.c.b16 %v422, %v421
      %v447 = vpack.c.b16 %v424, %v423
      %v448 = vpack.c.b16 %v426, %v425
      %v449 = vpack.c.b16 %v428, %v427
      %v450 = vpack.c.b16 %v430, %v429
      %v451 = vpack.c.b16 %v432, %v431
      %v452 = vpack.c.b16 %v434, %v433
      %v453 = vpack.c.b16 %v436, %v435
      %v454 = vpack.c.b16 %v438, %v437
      %v459 = vunpack.c.l.b16 %v364
      %v460 = vunpack.c.l.b16 %v365
      %v461 = vunpack.c.l.b16 %v366
      %v462 = vunpack.c.l.b16 %v367
      %v463 = vpack.c.b16 %v460, %v459
      %v464 = vpack.c.b16 %v462, %v461
      %vm466 = vcmask 220160
      %v468 = vsel %vm466, %v439, 0
      %v471 = vsel %vm466, %v440, 0
      %v474 = vsel %vm466, %v441, 0
      %v477 = vsel %vm466, %v442, 0
      %v480 = vsel %vm466, %v443, 0
      %v483 = vsel %vm466, %v444, 0
      %v486 = vsel %vm466, %v445, 0
      %v489 = vsel %vm466, %v446, 0
      %v492 = vsel %vm466, %v447, 0
      %v495 = vsel %vm466, %v448, 0
      %v498 = vsel %vm466, %v449, 0
      %v501 = vsel %vm466, %v450, 0
      %v504 = vsel %vm466, %v451, 0
      %v507 = vsel %vm466, %v452, 0
      %v510 = vsel %vm466, %v453, 0
      %v513 = vsel %vm466, %v454, 0
      %vm515 = vcmask 1044480
      %vm516 = vcmask 1045504
      %v517 = vsel %vm515, 4294967295, 65535
      %v518 = vsel %vm516, %v517, 0
      %v520 = vand.u32 %v464, %v518
      %522 = vmatprep.subr.bf16.mxu0 0
      %523 = vmatpush1.bf16.msra.mxu0 0
      %524 = vmatprep.subr.bf16.mxu0 0
      %525 = vmatpush1.bf16.msra.mxu0 0
      %526 = vmatprep.subr.bf16.mxu0 0
      %527 = vmatpush1.bf16.msra.mxu0 0
      %528 = vmatprep.subr.bf16.mxu0 0
      %529 = vmatpush1.bf16.msra.mxu0 0
      %530 = vmatprep.subr.bf16.mxu0 0
      %531 = vmatpush1.bf16.msra.mxu0 0
      %532 = vmatprep.subr.bf16.mxu0 0
      %533 = vmatpush1.bf16.msra.mxu0 0
      %534 = vmatprep.subr.bf16.mxu0 0
      %535 = vmatpush1.bf16.msra.mxu0 %v520
      %536 = vmatprep.subr.bf16.mxu0 0
      %537 = vmatpush1.bf16.msra.mxu0 %v463
      %538 = vmatprep.subr.bf16.mxu0 0
      %539 = vmatpush2.bf16.msra.mxu0 0
      %540 = vmatprep.subr.bf16.mxu0 0
      %541 = vmatpush2.bf16.msra.mxu0 0
      %542 = vmatprep.subr.bf16.mxu0 0
      %543 = vmatpush2.bf16.msra.mxu0 0
      %544 = vmatprep.subr.bf16.mxu0 0
      %545 = vmatpush2.bf16.msra.mxu0 0
      %546 = vmatprep.subr.bf16.mxu0 0
      %547 = vmatpush2.bf16.msra.mxu0 0
      %548 = vmatprep.subr.bf16.mxu0 0
      %549 = vmatpush2.bf16.msra.mxu0 0
      %550 = vmatprep.subr.bf16.mxu0 0
      %551 = vmatpush2.bf16.msra.mxu0 0
      %552 = vmatprep.subr.bf16.mxu0 0
      %553 = vmatpush2.bf16.msra.mxu0 0
      %554 = vmatprep.mubr.bf16.mxu0 0
      %555 = vmatmul.mubr.bf16.gmra.mxu0 %v468
      %v556 = vpop.f32.mrf.mxu0
      %v557 = vadd.f32 %v373, %v556
      %v558 = vpop.f32.mrf.mxu0
      %v559 = vpop.f32.mrf.mxu0
      %v560 = vadd.f32 %v373, %v559
      %v561 = vpop.f32.mrf.mxu0
      %562 = vmatprep.mubr.bf16.mxu0 0
      %563 = vmatmul.mubr.bf16.gmra.mxu0 %v471
      %v564 = vpop.f32.mrf.mxu0
      %v565 = vadd.f32 %v373, %v564
      %v566 = vpop.f32.mrf.mxu0
      %v567 = vpop.f32.mrf.mxu0
      %v568 = vadd.f32 %v373, %v567
      %v569 = vpop.f32.mrf.mxu0
      %570 = vmatprep.mubr.bf16.mxu0 0
      %571 = vmatmul.mubr.bf16.gmra.mxu0 %v474
      %v572 = vpop.f32.mrf.mxu0
      %v573 = vadd.f32 %v373, %v572
      %v574 = vpop.f32.mrf.mxu0
      %v575 = vpop.f32.mrf.mxu0
      %v576 = vadd.f32 %v373, %v575
      %v577 = vpop.f32.mrf.mxu0
      %578 = vmatprep.mubr.bf16.mxu0 0
      %579 = vmatmul.mubr.bf16.gmra.mxu0 %v477
      %v580 = vpop.f32.mrf.mxu0
      %v581 = vadd.f32 %v373, %v580
      %v582 = vpop.f32.mrf.mxu0
      %v583 = vpop.f32.mrf.mxu0
      %v584 = vadd.f32 %v373, %v583
      %v585 = vpop.f32.mrf.mxu0
      %586 = vmatprep.mubr.bf16.mxu0 0
      %587 = vmatmul.mubr.bf16.gmra.mxu0 %v480
      %v588 = vpop.f32.mrf.mxu0
      %v589 = vadd.f32 %v373, %v588
      %v590 = vpop.f32.mrf.mxu0
      %v591 = vpop.f32.mrf.mxu0
      %v592 = vadd.f32 %v373, %v591
      %v593 = vpop.f32.mrf.mxu0
      %594 = vmatprep.mubr.bf16.mxu0 0
      %595 = vmatmul.mubr.bf16.gmra.mxu0 %v483
      %v596 = vpop.f32.mrf.mxu0
      %v597 = vadd.f32 %v373, %v596
      %v598 = vpop.f32.mrf.mxu0
      %v599 = vpop.f32.mrf.mxu0
      %v600 = vadd.f32 %v373, %v599
      %v601 = vpop.f32.mrf.mxu0
      %602 = vmatprep.mubr.bf16.mxu0 0
      %603 = vmatmul.mubr.bf16.gmra.mxu0 %v486
      %v604 = vpop.f32.mrf.mxu0
      %v605 = vadd.f32 %v373, %v604
      %v606 = vpop.f32.mrf.mxu0
      %v607 = vpop.f32.mrf.mxu0
      %v608 = vadd.f32 %v373, %v607
      %v609 = vpop.f32.mrf.mxu0
      %610 = vmatprep.mubr.bf16.mxu0 0
      %611 = vmatmul.mubr.bf16.gmra.mxu0 %v489
      %v612 = vpop.f32.mrf.mxu0
      %v613 = vadd.f32 %v373, %v612
      %v614 = vpop.f32.mrf.mxu0
      %v615 = vpop.f32.mrf.mxu0
      %v616 = vadd.f32 %v373, %v615
      %v617 = vpop.f32.mrf.mxu0
      %618 = vmatprep.mubr.bf16.mxu0 0
      %619 = vmatmul.mubr.bf16.gmra.mxu0 %v492
      %v620 = vpop.f32.mrf.mxu0
      %v621 = vadd.f32 %v373, %v620
      %v622 = vpop.f32.mrf.mxu0
      %v623 = vpop.f32.mrf.mxu0
      %v624 = vadd.f32 %v373, %v623
      %v625 = vpop.f32.mrf.mxu0
      %626 = vmatprep.mubr.bf16.mxu0 0
      %627 = vmatmul.mubr.bf16.gmra.mxu0 %v495
      %v628 = vpop.f32.mrf.mxu0
      %v629 = vadd.f32 %v373, %v628
      %v630 = vpop.f32.mrf.mxu0
      %v631 = vpop.f32.mrf.mxu0
      %v632 = vadd.f32 %v373, %v631
      %v633 = vpop.f32.mrf.mxu0
      %634 = vmatprep.mubr.bf16.mxu0 0
      %635 = vmatmul.mubr.bf16.gmra.mxu0 %v498
      %v636 = vpop.f32.mrf.mxu0
      %v637 = vadd.f32 %v373, %v636
      %v638 = vpop.f32.mrf.mxu0
      %v639 = vpop.f32.mrf.mxu0
      %v640 = vadd.f32 %v373, %v639
      %v641 = vpop.f32.mrf.mxu0
      %642 = vmatprep.mubr.bf16.mxu0 0
      %643 = vmatmul.mubr.bf16.gmra.mxu0 %v501
      %v644 = vpop.f32.mrf.mxu0
      %v645 = vadd.f32 %v373, %v644
      %v646 = vpop.f32.mrf.mxu0
      %v647 = vpop.f32.mrf.mxu0
      %v648 = vadd.f32 %v373, %v647
      %v649 = vpop.f32.mrf.mxu0
      %650 = vmatprep.mubr.bf16.mxu0 0
      %651 = vmatmul.mubr.bf16.gmra.mxu0 %v504
      %v652 = vpop.f32.mrf.mxu0
      %v653 = vadd.f32 %v373, %v652
      %v654 = vpop.f32.mrf.mxu0
      %v655 = vpop.f32.mrf.mxu0
      %v656 = vadd.f32 %v373, %v655
      %v657 = vpop.f32.mrf.mxu0
      %658 = vmatprep.mubr.bf16.mxu0 0
      %659 = vmatmul.mubr.bf16.gmra.mxu0 %v507
      %v660 = vpop.f32.mrf.mxu0
      %v661 = vadd.f32 %v373, %v660
      %v662 = vpop.f32.mrf.mxu0
      %v663 = vpop.f32.mrf.mxu0
      %v664 = vadd.f32 %v373, %v663
      %v665 = vpop.f32.mrf.mxu0
      %666 = vmatprep.mubr.bf16.mxu0 0
      %667 = vmatmul.mubr.bf16.gmra.mxu0 %v510
      %v668 = vpop.f32.mrf.mxu0
      %v669 = vadd.f32 %v373, %v668
      %v670 = vpop.f32.mrf.mxu0
      %v671 = vpop.f32.mrf.mxu0
      %v672 = vadd.f32 %v373, %v671
      %v673 = vpop.f32.mrf.mxu0
      %674 = vmatprep.mubr.bf16.mxu0 0
      %675 = vmatmul.mubr.bf16.gmra.mxu0 %v513
      %v676 = vpop.f32.mrf.mxu0
      %v677 = vadd.f32 %v373, %v676
      %v678 = vpop.f32.mrf.mxu0
      %v679 = vpop.f32.mrf.mxu0
      %v680 = vadd.f32 %v373, %v679
      %v681 = vpop.f32.mrf.mxu0
      %682 = vdwg.mxu0
      %v683 = vmax.f32 %v557, 0.0
      %v684 = vmax.f32 %v560, 0.0
      %v685 = vmax.f32 %v565, 0.0
      %v686 = vmax.f32 %v568, 0.0
      %v687 = vmax.f32 %v573, 0.0
      %v688 = vmax.f32 %v576, 0.0
      %v689 = vmax.f32 %v581, 0.0
      %v690 = vmax.f32 %v584, 0.0
      %v691 = vmax.f32 %v589, 0.0
      %v692 = vmax.f32 %v592, 0.0
      %v693 = vmax.f32 %v597, 0.0
      %v694 = vmax.f32 %v600, 0.0
      %v695 = vmax.f32 %v605, 0.0
      %v696 = vmax.f32 %v608, 0.0
      %v697 = vmax.f32 %v613, 0.0
      %v698 = vmax.f32 %v616, 0.0
      %v699 = vmax.f32 %v621, 0.0
      %v700 = vmax.f32 %v624, 0.0
      %v701 = vmax.f32 %v629, 0.0
      %v702 = vmax.f32 %v632, 0.0
      %v703 = vmax.f32 %v637, 0.0
      %v704 = vmax.f32 %v640, 0.0
      %v705 = vmax.f32 %v645, 0.0
      %v706 = vmax.f32 %v648, 0.0
      %v707 = vmax.f32 %v653, 0.0
      %v708 = vmax.f32 %v656, 0.0
      %v709 = vmax.f32 %v661, 0.0
      %v710 = vmax.f32 %v664, 0.0
      %v711 = vmax.f32 %v669, 0.0
      %v712 = vmax.f32 %v672, 0.0
      %v713 = vmax.f32 %v677, 0.0
      %v714 = vmax.f32 %v680, 0.0
      %v747 = vcombine.high %v683, %v683
      %v749 = vunpack.c.l.s4 1983009808
      %v750 = vunpack.c.0.s8 %v749
      %v751 = vlaneseq
      %v752 = vshrl.u32 %v751, 7
      %v753 = vsub.s32 %v750, %v752
      %v754 = vrot.slane %v683, %v753
      %v756 = vunpack.c.l.s4 1983009808
      %v757 = vunpack.c.0.s8 %v756
      %v758 = vlaneseq
      %v759 = vshrl.u32 %v758, 7
      %v760 = vsub.s32 %v757, %v759
      %v761 = vrot.slane %v747, %v760
      %v762 = vcombine.high %v754, %v754
      %v763 = vcombine.high %v761, %v761
      %v764 = vcombine.high %v684, %v684
      %v766 = vunpack.c.l.s4 1983009808
      %v767 = vunpack.c.0.s8 %v766
      %v768 = vlaneseq
      %v769 = vshrl.u32 %v768, 7
      %v770 = vsub.s32 %v767, %v769
      %v771 = vrot.slane %v684, %v770
      %v773 = vunpack.c.l.s4 1983009808
      %v774 = vunpack.c.0.s8 %v773
      %v775 = vlaneseq
      %v776 = vshrl.u32 %v775, 7
      %v777 = vsub.s32 %v774, %v776
      %v778 = vrot.slane %v764, %v777
      %v779 = vcombine.high %v771, %v771
      %v780 = vcombine.high %v778, %v778
      %v781 = vcombine.high %v685, %v685
      %v783 = vunpack.c.l.s4 1983009808
      %v784 = vunpack.c.0.s8 %v783
      %v785 = vlaneseq
      %v786 = vshrl.u32 %v785, 7
      %v787 = vsub.s32 %v784, %v786
      %v788 = vrot.slane %v685, %v787
      %v790 = vunpack.c.l.s4 1983009808
      %v791 = vunpack.c.0.s8 %v790
      %v792 = vlaneseq
      %v793 = vshrl.u32 %v792, 7
      %v794 = vsub.s32 %v791, %v793
      %v795 = vrot.slane %v781, %v794
      %v796 = vcombine.high %v788, %v788
      %v797 = vcombine.high %v795, %v795
      %v798 = vcombine.high %v686, %v686
      %v800 = vunpack.c.l.s4 1983009808
      %v801 = vunpack.c.0.s8 %v800
      %v802 = vlaneseq
      %v803 = vshrl.u32 %v802, 7
      %v804 = vsub.s32 %v801, %v803
      %v805 = vrot.slane %v686, %v804
      %v807 = vunpack.c.l.s4 1983009808
      %v808 = vunpack.c.0.s8 %v807
      %v809 = vlaneseq
      %v810 = vshrl.u32 %v809, 7
      %v811 = vsub.s32 %v808, %v810
      %v812 = vrot.slane %v798, %v811
      %v813 = vcombine.high %v805, %v805
      %v814 = vcombine.high %v812, %v812
      %v815 = vcombine.high %v687, %v687
      %v817 = vunpack.c.l.s4 1983009808
      %v818 = vunpack.c.0.s8 %v817
      %v819 = vlaneseq
      %v820 = vshrl.u32 %v819, 7
      %v821 = vsub.s32 %v818, %v820
      %v822 = vrot.slane %v687, %v821
      %v824 = vunpack.c.l.s4 1983009808
      %v825 = vunpack.c.0.s8 %v824
      %v826 = vlaneseq
      %v827 = vshrl.u32 %v826, 7
      %v828 = vsub.s32 %v825, %v827
      %v829 = vrot.slane %v815, %v828
      %v830 = vcombine.high %v822, %v822
      %v831 = vcombine.high %v829, %v829
      %v832 = vcombine.high %v688, %v688
      %v834 = vunpack.c.l.s4 1983009808
      %v835 = vunpack.c.0.s8 %v834
      %v836 = vlaneseq
      %v837 = vshrl.u32 %v836, 7
      %v838 = vsub.s32 %v835, %v837
      %v839 = vrot.slane %v688, %v838
      %v841 = vunpack.c.l.s4 1983009808
      %v842 = vunpack.c.0.s8 %v841
      %v843 = vlaneseq
      %v844 = vshrl.u32 %v843, 7
      %v845 = vsub.s32 %v842, %v844
      %v846 = vrot.slane %v832, %v845
      %v847 = vcombine.high %v839, %v839
      %v848 = vcombine.high %v846, %v846
      %v849 = vcombine.high %v689, %v689
      %v851 = vunpack.c.l.s4 1983009808
      %v852 = vunpack.c.0.s8 %v851
      %v853 = vlaneseq
      %v854 = vshrl.u32 %v853, 7
      %v855 = vsub.s32 %v852, %v854
      %v856 = vrot.slane %v689, %v855
      %v858 = vunpack.c.l.s4 1983009808
      %v859 = vunpack.c.0.s8 %v858
      %v860 = vlaneseq
      %v861 = vshrl.u32 %v860, 7
      %v862 = vsub.s32 %v859, %v861
      %v863 = vrot.slane %v849, %v862
      %v864 = vcombine.high %v856, %v856
      %v865 = vcombine.high %v863, %v863
      %v866 = vcombine.high %v690, %v690
      %v868 = vunpack.c.l.s4 1983009808
      %v869 = vunpack.c.0.s8 %v868
      %v870 = vlaneseq
      %v871 = vshrl.u32 %v870, 7
      %v872 = vsub.s32 %v869, %v871
      %v873 = vrot.slane %v690, %v872
      %v875 = vunpack.c.l.s4 1983009808
      %v876 = vunpack.c.0.s8 %v875
      %v877 = vlaneseq
      %v878 = vshrl.u32 %v877, 7
      %v879 = vsub.s32 %v876, %v878
      %v880 = vrot.slane %v866, %v879
      %v881 = vcombine.high %v873, %v873
      %v882 = vcombine.high %v880, %v880
      %v883 = vcombine.high %v691, %v691
      %v885 = vunpack.c.l.s4 1983009808
      %v886 = vunpack.c.0.s8 %v885
      %v887 = vlaneseq
      %v888 = vshrl.u32 %v887, 7
      %v889 = vsub.s32 %v886, %v888
      %v890 = vrot.slane %v691, %v889
      %v892 = vunpack.c.l.s4 1983009808
      %v893 = vunpack.c.0.s8 %v892
      %v894 = vlaneseq
      %v895 = vshrl.u32 %v894, 7
      %v896 = vsub.s32 %v893, %v895
      %v897 = vrot.slane %v883, %v896
      %v898 = vcombine.high %v890, %v890
      %v899 = vcombine.high %v897, %v897
      %v900 = vcombine.high %v692, %v692
      %v902 = vunpack.c.l.s4 1983009808
      %v903 = vunpack.c.0.s8 %v902
      %v904 = vlaneseq
      %v905 = vshrl.u32 %v904, 7
      %v906 = vsub.s32 %v903, %v905
      %v907 = vrot.slane %v692, %v906
      %v909 = vunpack.c.l.s4 1983009808
      %v910 = vunpack.c.0.s8 %v909
      %v911 = vlaneseq
      %v912 = vshrl.u32 %v911, 7
      %v913 = vsub.s32 %v910, %v912
      %v914 = vrot.slane %v900, %v913
      %v915 = vcombine.high %v907, %v907
      %v916 = vcombine.high %v914, %v914
      %v917 = vcombine.high %v693, %v693
      %v919 = vunpack.c.l.s4 1983009808
      %v920 = vunpack.c.0.s8 %v919
      %v921 = vlaneseq
      %v922 = vshrl.u32 %v921, 7
      %v923 = vsub.s32 %v920, %v922
      %v924 = vrot.slane %v693, %v923
      %v926 = vunpack.c.l.s4 1983009808
      %v927 = vunpack.c.0.s8 %v926
      %v928 = vlaneseq
      %v929 = vshrl.u32 %v928, 7
      %v930 = vsub.s32 %v927, %v929
      %v931 = vrot.slane %v917, %v930
      %v932 = vcombine.high %v924, %v924
      %v933 = vcombine.high %v931, %v931
      %v934 = vcombine.high %v694, %v694
      %v936 = vunpack.c.l.s4 1983009808
      %v937 = vunpack.c.0.s8 %v936
      %v938 = vlaneseq
      %v939 = vshrl.u32 %v938, 7
      %v940 = vsub.s32 %v937, %v939
      %v941 = vrot.slane %v694, %v940
      %v943 = vunpack.c.l.s4 1983009808
      %v944 = vunpack.c.0.s8 %v943
      %v945 = vlaneseq
      %v946 = vshrl.u32 %v945, 7
      %v947 = vsub.s32 %v944, %v946
      %v948 = vrot.slane %v934, %v947
      %v949 = vcombine.high %v941, %v941
      %v950 = vcombine.high %v948, %v948
      %v951 = vcombine.high %v695, %v695
      %v953 = vunpack.c.l.s4 1983009808
      %v954 = vunpack.c.0.s8 %v953
      %v955 = vlaneseq
      %v956 = vshrl.u32 %v955, 7
      %v957 = vsub.s32 %v954, %v956
      %v958 = vrot.slane %v695, %v957
      %v960 = vunpack.c.l.s4 1983009808
      %v961 = vunpack.c.0.s8 %v960
      %v962 = vlaneseq
      %v963 = vshrl.u32 %v962, 7
      %v964 = vsub.s32 %v961, %v963
      %v965 = vrot.slane %v951, %v964
      %v966 = vcombine.high %v958, %v958
      %v967 = vcombine.high %v965, %v965
      %v968 = vcombine.high %v696, %v696
      %v970 = vunpack.c.l.s4 1983009808
      %v971 = vunpack.c.0.s8 %v970
      %v972 = vlaneseq
      %v973 = vshrl.u32 %v972, 7
      %v974 = vsub.s32 %v971, %v973
      %v975 = vrot.slane %v696, %v974
      %v977 = vunpack.c.l.s4 1983009808
      %v978 = vunpack.c.0.s8 %v977
      %v979 = vlaneseq
      %v980 = vshrl.u32 %v979, 7
      %v981 = vsub.s32 %v978, %v980
      %v982 = vrot.slane %v968, %v981
      %v983 = vcombine.high %v975, %v975
      %v984 = vcombine.high %v982, %v982
      %v985 = vcombine.high %v697, %v697
      %v987 = vunpack.c.l.s4 1983009808
      %v988 = vunpack.c.0.s8 %v987
      %v989 = vlaneseq
      %v990 = vshrl.u32 %v989, 7
      %v991 = vsub.s32 %v988, %v990
      %v992 = vrot.slane %v697, %v991
      %v994 = vunpack.c.l.s4 1983009808
      %v995 = vunpack.c.0.s8 %v994
      %v996 = vlaneseq
      %v997 = vshrl.u32 %v996, 7
      %v998 = vsub.s32 %v995, %v997
      %v999 = vrot.slane %v985, %v998
      %v1000 = vcombine.high %v992, %v992
      %v1001 = vcombine.high %v999, %v999
      %v1002 = vcombine.high %v698, %v698
      %v1004 = vunpack.c.l.s4 1983009808
      %v1005 = vunpack.c.0.s8 %v1004
      %v1006 = vlaneseq
      %v1007 = vshrl.u32 %v1006, 7
      %v1008 = vsub.s32 %v1005, %v1007
      %v1009 = vrot.slane %v698, %v1008
      %v1011 = vunpack.c.l.s4 1983009808
      %v1012 = vunpack.c.0.s8 %v1011
      %v1013 = vlaneseq
      %v1014 = vshrl.u32 %v1013, 7
      %v1015 = vsub.s32 %v1012, %v1014
      %v1016 = vrot.slane %v1002, %v1015
      %v1017 = vcombine.high %v1009, %v1009
      %v1018 = vcombine.high %v1016, %v1016
      %v1019 = vcombine.high %v699, %v699
      %v1021 = vunpack.c.l.s4 1983009808
      %v1022 = vunpack.c.0.s8 %v1021
      %v1023 = vlaneseq
      %v1024 = vshrl.u32 %v1023, 7
      %v1025 = vsub.s32 %v1022, %v1024
      %v1026 = vrot.slane %v699, %v1025
      %v1028 = vunpack.c.l.s4 1983009808
      %v1029 = vunpack.c.0.s8 %v1028
      %v1030 = vlaneseq
      %v1031 = vshrl.u32 %v1030, 7
      %v1032 = vsub.s32 %v1029, %v1031
      %v1033 = vrot.slane %v1019, %v1032
      %v1034 = vcombine.high %v1026, %v1026
      %v1035 = vcombine.high %v1033, %v1033
      %v1036 = vcombine.high %v700, %v700
      %v1038 = vunpack.c.l.s4 1983009808
      %v1039 = vunpack.c.0.s8 %v1038
      %v1040 = vlaneseq
      %v1041 = vshrl.u32 %v1040, 7
      %v1042 = vsub.s32 %v1039, %v1041
      %v1043 = vrot.slane %v700, %v1042
      %v1045 = vunpack.c.l.s4 1983009808
      %v1046 = vunpack.c.0.s8 %v1045
      %v1047 = vlaneseq
      %v1048 = vshrl.u32 %v1047, 7
      %v1049 = vsub.s32 %v1046, %v1048
      %v1050 = vrot.slane %v1036, %v1049
      %v1051 = vcombine.high %v1043, %v1043
      %v1052 = vcombine.high %v1050, %v1050
      %v1053 = vcombine.high %v701, %v701
      %v1055 = vunpack.c.l.s4 1983009808
      %v1056 = vunpack.c.0.s8 %v1055
      %v1057 = vlaneseq
      %v1058 = vshrl.u32 %v1057, 7
      %v1059 = vsub.s32 %v1056, %v1058
      %v1060 = vrot.slane %v701, %v1059
      %v1062 = vunpack.c.l.s4 1983009808
      %v1063 = vunpack.c.0.s8 %v1062
      %v1064 = vlaneseq
      %v1065 = vshrl.u32 %v1064, 7
      %v1066 = vsub.s32 %v1063, %v1065
      %v1067 = vrot.slane %v1053, %v1066
      %v1068 = vcombine.high %v1060, %v1060
      %v1069 = vcombine.high %v1067, %v1067
      %v1070 = vcombine.high %v702, %v702
      %v1072 = vunpack.c.l.s4 1983009808
      %v1073 = vunpack.c.0.s8 %v1072
      %v1074 = vlaneseq
      %v1075 = vshrl.u32 %v1074, 7
      %v1076 = vsub.s32 %v1073, %v1075
      %v1077 = vrot.slane %v702, %v1076
      %v1079 = vunpack.c.l.s4 1983009808
      %v1080 = vunpack.c.0.s8 %v1079
      %v1081 = vlaneseq
      %v1082 = vshrl.u32 %v1081, 7
      %v1083 = vsub.s32 %v1080, %v1082
      %v1084 = vrot.slane %v1070, %v1083
      %v1085 = vcombine.high %v1077, %v1077
      %v1086 = vcombine.high %v1084, %v1084
      %v1087 = vcombine.high %v703, %v703
      %v1089 = vunpack.c.l.s4 1983009808
      %v1090 = vunpack.c.0.s8 %v1089
      %v1091 = vlaneseq
      %v1092 = vshrl.u32 %v1091, 7
      %v1093 = vsub.s32 %v1090, %v1092
      %v1094 = vrot.slane %v703, %v1093
      %v1096 = vunpack.c.l.s4 1983009808
      %v1097 = vunpack.c.0.s8 %v1096
      %v1098 = vlaneseq
      %v1099 = vshrl.u32 %v1098, 7
      %v1100 = vsub.s32 %v1097, %v1099
      %v1101 = vrot.slane %v1087, %v1100
      %v1102 = vcombine.high %v1094, %v1094
      %v1103 = vcombine.high %v1101, %v1101
      %v1104 = vcombine.high %v704, %v704
      %v1106 = vunpack.c.l.s4 1983009808
      %v1107 = vunpack.c.0.s8 %v1106
      %v1108 = vlaneseq
      %v1109 = vshrl.u32 %v1108, 7
      %v1110 = vsub.s32 %v1107, %v1109
      %v1111 = vrot.slane %v704, %v1110
      %v1113 = vunpack.c.l.s4 1983009808
      %v1114 = vunpack.c.0.s8 %v1113
      %v1115 = vlaneseq
      %v1116 = vshrl.u32 %v1115, 7
      %v1117 = vsub.s32 %v1114, %v1116
      %v1118 = vrot.slane %v1104, %v1117
      %v1119 = vcombine.high %v1111, %v1111
      %v1120 = vcombine.high %v1118, %v1118
      %v1121 = vcombine.high %v705, %v705
      %v1123 = vunpack.c.l.s4 1983009808
      %v1124 = vunpack.c.0.s8 %v1123
      %v1125 = vlaneseq
      %v1126 = vshrl.u32 %v1125, 7
      %v1127 = vsub.s32 %v1124, %v1126
      %v1128 = vrot.slane %v705, %v1127
      %v1130 = vunpack.c.l.s4 1983009808
      %v1131 = vunpack.c.0.s8 %v1130
      %v1132 = vlaneseq
      %v1133 = vshrl.u32 %v1132, 7
      %v1134 = vsub.s32 %v1131, %v1133
      %v1135 = vrot.slane %v1121, %v1134
      %v1136 = vcombine.high %v1128, %v1128
      %v1137 = vcombine.high %v1135, %v1135
      %v1138 = vcombine.high %v706, %v706
      %v1140 = vunpack.c.l.s4 1983009808
      %v1141 = vunpack.c.0.s8 %v1140
      %v1142 = vlaneseq
      %v1143 = vshrl.u32 %v1142, 7
      %v1144 = vsub.s32 %v1141, %v1143
      %v1145 = vrot.slane %v706, %v1144
      %v1147 = vunpack.c.l.s4 1983009808
      %v1148 = vunpack.c.0.s8 %v1147
      %v1149 = vlaneseq
      %v1150 = vshrl.u32 %v1149, 7
      %v1151 = vsub.s32 %v1148, %v1150
      %v1152 = vrot.slane %v1138, %v1151
      %v1153 = vcombine.high %v1145, %v1145
      %v1154 = vcombine.high %v1152, %v1152
      %v1155 = vcombine.high %v707, %v707
      %v1157 = vunpack.c.l.s4 1983009808
      %v1158 = vunpack.c.0.s8 %v1157
      %v1159 = vlaneseq
      %v1160 = vshrl.u32 %v1159, 7
      %v1161 = vsub.s32 %v1158, %v1160
      %v1162 = vrot.slane %v707, %v1161
      %v1164 = vunpack.c.l.s4 1983009808
      %v1165 = vunpack.c.0.s8 %v1164
      %v1166 = vlaneseq
      %v1167 = vshrl.u32 %v1166, 7
      %v1168 = vsub.s32 %v1165, %v1167
      %v1169 = vrot.slane %v1155, %v1168
      %v1170 = vcombine.high %v1162, %v1162
      %v1171 = vcombine.high %v1169, %v1169
      %v1172 = vcombine.high %v708, %v708
      %v1174 = vunpack.c.l.s4 1983009808
      %v1175 = vunpack.c.0.s8 %v1174
      %v1176 = vlaneseq
      %v1177 = vshrl.u32 %v1176, 7
      %v1178 = vsub.s32 %v1175, %v1177
      %v1179 = vrot.slane %v708, %v1178
      %v1181 = vunpack.c.l.s4 1983009808
      %v1182 = vunpack.c.0.s8 %v1181
      %v1183 = vlaneseq
      %v1184 = vshrl.u32 %v1183, 7
      %v1185 = vsub.s32 %v1182, %v1184
      %v1186 = vrot.slane %v1172, %v1185
      %v1187 = vcombine.high %v1179, %v1179
      %v1188 = vcombine.high %v1186, %v1186
      %v1189 = vcombine.high %v709, %v709
      %v1191 = vunpack.c.l.s4 1983009808
      %v1192 = vunpack.c.0.s8 %v1191
      %v1193 = vlaneseq
      %v1194 = vshrl.u32 %v1193, 7
      %v1195 = vsub.s32 %v1192, %v1194
      %v1196 = vrot.slane %v709, %v1195
      %v1198 = vunpack.c.l.s4 1983009808
      %v1199 = vunpack.c.0.s8 %v1198
      %v1200 = vlaneseq
      %v1201 = vshrl.u32 %v1200, 7
      %v1202 = vsub.s32 %v1199, %v1201
      %v1203 = vrot.slane %v1189, %v1202
      %v1204 = vcombine.high %v1196, %v1196
      %v1205 = vcombine.high %v1203, %v1203
      %v1206 = vcombine.high %v710, %v710
      %v1208 = vunpack.c.l.s4 1983009808
      %v1209 = vunpack.c.0.s8 %v1208
      %v1210 = vlaneseq
      %v1211 = vshrl.u32 %v1210, 7
      %v1212 = vsub.s32 %v1209, %v1211
      %v1213 = vrot.slane %v710, %v1212
      %v1215 = vunpack.c.l.s4 1983009808
      %v1216 = vunpack.c.0.s8 %v1215
      %v1217 = vlaneseq
      %v1218 = vshrl.u32 %v1217, 7
      %v1219 = vsub.s32 %v1216, %v1218
      %v1220 = vrot.slane %v1206, %v1219
      %v1221 = vcombine.high %v1213, %v1213
      %v1222 = vcombine.high %v1220, %v1220
      %v1223 = vcombine.high %v711, %v711
      %v1225 = vunpack.c.l.s4 1983009808
      %v1226 = vunpack.c.0.s8 %v1225
      %v1227 = vlaneseq
      %v1228 = vshrl.u32 %v1227, 7
      %v1229 = vsub.s32 %v1226, %v1228
      %v1230 = vrot.slane %v711, %v1229
      %v1232 = vunpack.c.l.s4 1983009808
      %v1233 = vunpack.c.0.s8 %v1232
      %v1234 = vlaneseq
      %v1235 = vshrl.u32 %v1234, 7
      %v1236 = vsub.s32 %v1233, %v1235
      %v1237 = vrot.slane %v1223, %v1236
      %v1238 = vcombine.high %v1230, %v1230
      %v1239 = vcombine.high %v1237, %v1237
      %v1240 = vcombine.high %v712, %v712
      %v1242 = vunpack.c.l.s4 1983009808
      %v1243 = vunpack.c.0.s8 %v1242
      %v1244 = vlaneseq
      %v1245 = vshrl.u32 %v1244, 7
      %v1246 = vsub.s32 %v1243, %v1245
      %v1247 = vrot.slane %v712, %v1246
      %v1249 = vunpack.c.l.s4 1983009808
      %v1250 = vunpack.c.0.s8 %v1249
      %v1251 = vlaneseq
      %v1252 = vshrl.u32 %v1251, 7
      %v1253 = vsub.s32 %v1250, %v1252
      %v1254 = vrot.slane %v1240, %v1253
      %v1255 = vcombine.high %v1247, %v1247
      %v1256 = vcombine.high %v1254, %v1254
      %v1257 = vcombine.high %v713, %v713
      %v1259 = vunpack.c.l.s4 1983009808
      %v1260 = vunpack.c.0.s8 %v1259
      %v1261 = vlaneseq
      %v1262 = vshrl.u32 %v1261, 7
      %v1263 = vsub.s32 %v1260, %v1262
      %v1264 = vrot.slane %v713, %v1263
      %v1266 = vunpack.c.l.s4 1983009808
      %v1267 = vunpack.c.0.s8 %v1266
      %v1268 = vlaneseq
      %v1269 = vshrl.u32 %v1268, 7
      %v1270 = vsub.s32 %v1267, %v1269
      %v1271 = vrot.slane %v1257, %v1270
      %v1272 = vcombine.high %v1264, %v1264
      %v1273 = vcombine.high %v1271, %v1271
      %v1274 = vcombine.high %v714, %v714
      %v1276 = vunpack.c.l.s4 1983009808
      %v1277 = vunpack.c.0.s8 %v1276
      %v1278 = vlaneseq
      %v1279 = vshrl.u32 %v1278, 7
      %v1280 = vsub.s32 %v1277, %v1279
      %v1281 = vrot.slane %v714, %v1280
      %v1283 = vunpack.c.l.s4 1983009808
      %v1284 = vunpack.c.0.s8 %v1283
      %v1285 = vlaneseq
      %v1286 = vshrl.u32 %v1285, 7
      %v1287 = vsub.s32 %v1284, %v1286
      %v1288 = vrot.slane %v1274, %v1287
      %v1289 = vcombine.high %v1281, %v1281
      %v1290 = vcombine.high %v1288, %v1288
      %v1419 = vmax.f32 %v754, %v788
      %v1420 = vmax.f32 %v762, %v796
      %v1421 = vmax.f32 %v761, %v795
      %v1422 = vmax.f32 %v763, %v797
      %v1423 = vmax.f32 %v771, %v805
      %v1424 = vmax.f32 %v779, %v813
      %v1425 = vmax.f32 %v778, %v812
      %v1426 = vmax.f32 %v780, %v814
      %v1427 = vmax.f32 %v822, %v856
      %v1428 = vmax.f32 %v830, %v864
      %v1429 = vmax.f32 %v829, %v863
      %v1430 = vmax.f32 %v831, %v865
      %v1431 = vmax.f32 %v839, %v873
      %v1432 = vmax.f32 %v847, %v881
      %v1433 = vmax.f32 %v846, %v880
      %v1434 = vmax.f32 %v848, %v882
      %v1435 = vmax.f32 %v890, %v924
      %v1436 = vmax.f32 %v898, %v932
      %v1437 = vmax.f32 %v897, %v931
      %v1438 = vmax.f32 %v899, %v933
      %v1439 = vmax.f32 %v907, %v941
      %v1440 = vmax.f32 %v915, %v949
      %v1441 = vmax.f32 %v914, %v948
      %v1442 = vmax.f32 %v916, %v950
      %v1443 = vmax.f32 %v958, %v992
      %v1444 = vmax.f32 %v966, %v1000
      %v1445 = vmax.f32 %v965, %v999
      %v1446 = vmax.f32 %v967, %v1001
      %v1447 = vmax.f32 %v975, %v1009
      %v1448 = vmax.f32 %v983, %v1017
      %v1449 = vmax.f32 %v982, %v1016
      %v1450 = vmax.f32 %v984, %v1018
      %v1451 = vmax.f32 %v1026, %v1060
      %v1452 = vmax.f32 %v1034, %v1068
      %v1453 = vmax.f32 %v1033, %v1067
      %v1454 = vmax.f32 %v1035, %v1069
      %v1455 = vmax.f32 %v1043, %v1077
      %v1456 = vmax.f32 %v1051, %v1085
      %v1457 = vmax.f32 %v1050, %v1084
      %v1458 = vmax.f32 %v1052, %v1086
      %v1459 = vmax.f32 %v1094, %v1128
      %v1460 = vmax.f32 %v1102, %v1136
      %v1461 = vmax.f32 %v1101, %v1135
      %v1462 = vmax.f32 %v1103, %v1137
      %v1463 = vmax.f32 %v1111, %v1145
      %v1464 = vmax.f32 %v1119, %v1153
      %v1465 = vmax.f32 %v1118, %v1152
      %v1466 = vmax.f32 %v1120, %v1154
      %v1467 = vmax.f32 %v1162, %v1196
      %v1468 = vmax.f32 %v1170, %v1204
      %v1469 = vmax.f32 %v1169, %v1203
      %v1470 = vmax.f32 %v1171, %v1205
      %v1471 = vmax.f32 %v1179, %v1213
      %v1472 = vmax.f32 %v1187, %v1221
      %v1473 = vmax.f32 %v1186, %v1220
      %v1474 = vmax.f32 %v1188, %v1222
      %v1475 = vmax.f32 %v1230, %v1264
      %v1476 = vmax.f32 %v1238, %v1272
      %v1477 = vmax.f32 %v1237, %v1271
      %v1478 = vmax.f32 %v1239, %v1273
      %v1479 = vmax.f32 %v1247, %v1281
      %v1480 = vmax.f32 %v1255, %v1289
      %v1481 = vmax.f32 %v1254, %v1288
      %v1482 = vmax.f32 %v1256, %v1290
      %v1547 = vrot.slane %v1419, 7
      %v1548 = vrot.slane %v1547, 2
      %v1549 = vrot.slane %v1420, 7
      %v1550 = vrot.slane %v1549, 2
      %v1551 = vrot.slane %v1421, 7
      %v1552 = vrot.slane %v1551, 2
      %v1553 = vrot.slane %v1422, 7
      %v1554 = vrot.slane %v1553, 2
      %v1555 = vrot.slane %v1423, 7
      %v1556 = vrot.slane %v1555, 2
      %v1557 = vrot.slane %v1424, 7
      %v1558 = vrot.slane %v1557, 2
      %v1559 = vrot.slane %v1425, 7
      %v1560 = vrot.slane %v1559, 2
      %v1561 = vrot.slane %v1426, 7
      %v1562 = vrot.slane %v1561, 2
      %v1563 = vrot.slane %v1427, 7
      %v1564 = vrot.slane %v1563, 2
      %v1565 = vrot.slane %v1428, 7
      %v1566 = vrot.slane %v1565, 2
      %v1567 = vrot.slane %v1429, 7
      %v1568 = vrot.slane %v1567, 2
      %v1569 = vrot.slane %v1430, 7
      %v1570 = vrot.slane %v1569, 2
      %v1571 = vrot.slane %v1431, 7
      %v1572 = vrot.slane %v1571, 2
      %v1573 = vrot.slane %v1432, 7
      %v1574 = vrot.slane %v1573, 2
      %v1575 = vrot.slane %v1433, 7
      %v1576 = vrot.slane %v1575, 2
      %v1577 = vrot.slane %v1434, 7
      %v1578 = vrot.slane %v1577, 2
      %v1579 = vrot.slane %v1435, 7
      %v1580 = vrot.slane %v1579, 2
      %v1581 = vrot.slane %v1436, 7
      %v1582 = vrot.slane %v1581, 2
      %v1583 = vrot.slane %v1437, 7
      %v1584 = vrot.slane %v1583, 2
      %v1585 = vrot.slane %v1438, 7
      %v1586 = vrot.slane %v1585, 2
      %v1587 = vrot.slane %v1439, 7
      %v1588 = vrot.slane %v1587, 2
      %v1589 = vrot.slane %v1440, 7
      %v1590 = vrot.slane %v1589, 2
      %v1591 = vrot.slane %v1441, 7
      %v1592 = vrot.slane %v1591, 2
      %v1593 = vrot.slane %v1442, 7
      %v1594 = vrot.slane %v1593, 2
      %v1595 = vrot.slane %v1443, 7
      %v1596 = vrot.slane %v1595, 2
      %v1597 = vrot.slane %v1444, 7
      %v1598 = vrot.slane %v1597, 2
      %v1599 = vrot.slane %v1445, 7
      %v1600 = vrot.slane %v1599, 2
      %v1601 = vrot.slane %v1446, 7
      %v1602 = vrot.slane %v1601, 2
      %v1603 = vrot.slane %v1447, 7
      %v1604 = vrot.slane %v1603, 2
      %v1605 = vrot.slane %v1448, 7
      %v1606 = vrot.slane %v1605, 2
      %v1607 = vrot.slane %v1449, 7
      %v1608 = vrot.slane %v1607, 2
      %v1609 = vrot.slane %v1450, 7
      %v1610 = vrot.slane %v1609, 2
      %v1611 = vrot.slane %v1451, 7
      %v1612 = vrot.slane %v1611, 2
      %v1613 = vrot.slane %v1452, 7
      %v1614 = vrot.slane %v1613, 2
      %v1615 = vrot.slane %v1453, 7
      %v1616 = vrot.slane %v1615, 2
      %v1617 = vrot.slane %v1454, 7
      %v1618 = vrot.slane %v1617, 2
      %v1619 = vrot.slane %v1455, 7
      %v1620 = vrot.slane %v1619, 2
      %v1621 = vrot.slane %v1456, 7
      %v1622 = vrot.slane %v1621, 2
      %v1623 = vrot.slane %v1457, 7
      %v1624 = vrot.slane %v1623, 2
      %v1625 = vrot.slane %v1458, 7
      %v1626 = vrot.slane %v1625, 2
      %v1627 = vrot.slane %v1459, 7
      %v1628 = vrot.slane %v1627, 2
      %v1629 = vrot.slane %v1460, 7
      %v1630 = vrot.slane %v1629, 2
      %v1631 = vrot.slane %v1461, 7
      %v1632 = vrot.slane %v1631, 2
      %v1633 = vrot.slane %v1462, 7
      %v1634 = vrot.slane %v1633, 2
      %v1635 = vrot.slane %v1463, 7
      %v1636 = vrot.slane %v1635, 2
      %v1637 = vrot.slane %v1464, 7
      %v1638 = vrot.slane %v1637, 2
      %v1639 = vrot.slane %v1465, 7
      %v1640 = vrot.slane %v1639, 2
      %v1641 = vrot.slane %v1466, 7
      %v1642 = vrot.slane %v1641, 2
      %v1643 = vrot.slane %v1467, 7
      %v1644 = vrot.slane %v1643, 2
      %v1645 = vrot.slane %v1468, 7
      %v1646 = vrot.slane %v1645, 2
      %v1647 = vrot.slane %v1469, 7
      %v1648 = vrot.slane %v1647, 2
      %v1649 = vrot.slane %v1470, 7
      %v1650 = vrot.slane %v1649, 2
      %v1651 = vrot.slane %v1471, 7
      %v1652 = vrot.slane %v1651, 2
      %v1653 = vrot.slane %v1472, 7
      %v1654 = vrot.slane %v1653, 2
      %v1655 = vrot.slane %v1473, 7
      %v1656 = vrot.slane %v1655, 2
      %v1657 = vrot.slane %v1474, 7
      %v1658 = vrot.slane %v1657, 2
      %v1659 = vrot.slane %v1475, 7
      %v1660 = vrot.slane %v1659, 2
      %v1661 = vrot.slane %v1476, 7
      %v1662 = vrot.slane %v1661, 2
      %v1663 = vrot.slane %v1477, 7
      %v1664 = vrot.slane %v1663, 2
      %v1665 = vrot.slane %v1478, 7
      %v1666 = vrot.slane %v1665, 2
      %v1667 = vrot.slane %v1479, 7
      %v1668 = vrot.slane %v1667, 2
      %v1669 = vrot.slane %v1480, 7
      %v1670 = vrot.slane %v1669, 2
      %v1671 = vrot.slane %v1481, 7
      %v1672 = vrot.slane %v1671, 2
      %v1673 = vrot.slane %v1482, 7
      %v1674 = vrot.slane %v1673, 2
      %v1739 = vmax.f32 %v1419, %v1548
      %v1740 = vmax.f32 %v1420, %v1550
      %v1741 = vmax.f32 %v1421, %v1552
      %v1742 = vmax.f32 %v1422, %v1554
      %v1743 = vmax.f32 %v1423, %v1556
      %v1744 = vmax.f32 %v1424, %v1558
      %v1745 = vmax.f32 %v1425, %v1560
      %v1746 = vmax.f32 %v1426, %v1562
      %v1747 = vmax.f32 %v1427, %v1564
      %v1748 = vmax.f32 %v1428, %v1566
      %v1749 = vmax.f32 %v1429, %v1568
      %v1750 = vmax.f32 %v1430, %v1570
      %v1751 = vmax.f32 %v1431, %v1572
      %v1752 = vmax.f32 %v1432, %v1574
      %v1753 = vmax.f32 %v1433, %v1576
      %v1754 = vmax.f32 %v1434, %v1578
      %v1755 = vmax.f32 %v1435, %v1580
      %v1756 = vmax.f32 %v1436, %v1582
      %v1757 = vmax.f32 %v1437, %v1584
      %v1758 = vmax.f32 %v1438, %v1586
      %v1759 = vmax.f32 %v1439, %v1588
      %v1760 = vmax.f32 %v1440, %v1590
      %v1761 = vmax.f32 %v1441, %v1592
      %v1762 = vmax.f32 %v1442, %v1594
      %v1763 = vmax.f32 %v1443, %v1596
      %v1764 = vmax.f32 %v1444, %v1598
      %v1765 = vmax.f32 %v1445, %v1600
      %v1766 = vmax.f32 %v1446, %v1602
      %v1767 = vmax.f32 %v1447, %v1604
      %v1768 = vmax.f32 %v1448, %v1606
      %v1769 = vmax.f32 %v1449, %v1608
      %v1770 = vmax.f32 %v1450, %v1610
      %v1771 = vmax.f32 %v1451, %v1612
      %v1772 = vmax.f32 %v1452, %v1614
      %v1773 = vmax.f32 %v1453, %v1616
      %v1774 = vmax.f32 %v1454, %v1618
      %v1775 = vmax.f32 %v1455, %v1620
      %v1776 = vmax.f32 %v1456, %v1622
      %v1777 = vmax.f32 %v1457, %v1624
      %v1778 = vmax.f32 %v1458, %v1626
      %v1779 = vmax.f32 %v1459, %v1628
      %v1780 = vmax.f32 %v1460, %v1630
      %v1781 = vmax.f32 %v1461, %v1632
      %v1782 = vmax.f32 %v1462, %v1634
      %v1783 = vmax.f32 %v1463, %v1636
      %v1784 = vmax.f32 %v1464, %v1638
      %v1785 = vmax.f32 %v1465, %v1640
      %v1786 = vmax.f32 %v1466, %v1642
      %v1787 = vmax.f32 %v1467, %v1644
      %v1788 = vmax.f32 %v1468, %v1646
      %v1789 = vmax.f32 %v1469, %v1648
      %v1790 = vmax.f32 %v1470, %v1650
      %v1791 = vmax.f32 %v1471, %v1652
      %v1792 = vmax.f32 %v1472, %v1654
      %v1793 = vmax.f32 %v1473, %v1656
      %v1794 = vmax.f32 %v1474, %v1658
      %v1795 = vmax.f32 %v1475, %v1660
      %v1796 = vmax.f32 %v1476, %v1662
      %v1797 = vmax.f32 %v1477, %v1664
      %v1798 = vmax.f32 %v1478, %v1666
      %v1799 = vmax.f32 %v1479, %v1668
      %v1800 = vmax.f32 %v1480, %v1670
      %v1801 = vmax.f32 %v1481, %v1672
      %v1802 = vmax.f32 %v1482, %v1674
      %vm1803 = vcmask 519168
      %1804 = vst.msk [vmem:[#allocation2] sm:$0xf] %vm1803, 0
      %vm1805 = vcmask 516096
      %1806 = vst.msk [vmem:[#allocation2 + $0x4] sm:$0x1] %vm1805, 0
      %1807 = vst.msk [vmem:[#allocation2 + $0x8] sm:$0xf] %vm1803, 0
      %1808 = vst.msk [vmem:[#allocation2 + $0xc] sm:$0x1] %vm1805, 0
      %1809 = vst.msk [vmem:[#allocation2 + $0x10] sm:$0xf] %vm1803, 0
      %1810 = vst.msk [vmem:[#allocation2 + $0x14] sm:$0x1] %vm1805, 0
      %1811 = vst.msk [vmem:[#allocation2 + $0x18] sm:$0xf] %vm1803, 0
      %1812 = vst.msk [vmem:[#allocation2 + $0x1c] sm:$0x1] %vm1805, 0
      %1813 = vst.msk [vmem:[#allocation2 + $0x20] sm:$0xf] %vm1803, 0
      %1814 = vst.msk [vmem:[#allocation2 + $0x24] sm:$0x1] %vm1805, 0
      %1815 = vst.msk [vmem:[#allocation2 + $0x28] sm:$0xf] %vm1803, 0
      %1816 = vst.msk [vmem:[#allocation2 + $0x2c] sm:$0x1] %vm1805, 0
      %1817 = vst.msk [vmem:[#allocation2 + $0x30] sm:$0xf] %vm1803, 0
      %1818 = vst.msk [vmem:[#allocation2 + $0x34] sm:$0x1] %vm1805, 0
      %1819 = vst.msk [vmem:[#allocation2 + $0x38] sm:$0xf] %vm1803, 0
      %1820 = vst.msk [vmem:[#allocation2 + $0x3c] sm:$0x1] %vm1805, 0
      %1821 = vst.msk [vmem:[#allocation2 + $0x40] sm:$0xf] %vm1803, 0
      %1822 = vst.msk [vmem:[#allocation2 + $0x44] sm:$0x1] %vm1805, 0
      %1823 = vst.msk [vmem:[#allocation2 + $0x48] sm:$0xf] %vm1803, 0
      %1824 = vst.msk [vmem:[#allocation2 + $0x4c] sm:$0x1] %vm1805, 0
      %v1825 = vpack.c.bf16 %v1739, %v1739
      %v1826 = vpack.c.bf16 %v1740, %v1740
      %v1827 = vpack.c.bf16 %v1741, %v1741
      %v1828 = vpack.c.bf16 %v1742, %v1742
      %v1829 = vpack.c.bf16 %v1743, %v1743
      %v1830 = vpack.c.bf16 %v1744, %v1744
      %v1831 = vpack.c.bf16 %v1745, %v1745
      %v1832 = vpack.c.bf16 %v1746, %v1746
      %v1833 = vpack.c.bf16 %v1747, %v1747
      %v1834 = vpack.c.bf16 %v1748, %v1748
      %v1835 = vpack.c.bf16 %v1749, %v1749
      %v1836 = vpack.c.bf16 %v1750, %v1750
      %v1837 = vpack.c.bf16 %v1751, %v1751
      %v1838 = vpack.c.bf16 %v1752, %v1752
      %v1839 = vpack.c.bf16 %v1753, %v1753
      %v1840 = vpack.c.bf16 %v1754, %v1754
      %v1841 = vpack.c.bf16 %v1755, %v1755
      %v1842 = vpack.c.bf16 %v1756, %v1756
      %v1843 = vpack.c.bf16 %v1757, %v1757
      %v1844 = vpack.c.bf16 %v1758, %v1758
      %v1845 = vpack.c.bf16 %v1759, %v1759
      %v1846 = vpack.c.bf16 %v1760, %v1760
      %v1847 = vpack.c.bf16 %v1761, %v1761
      %v1848 = vpack.c.bf16 %v1762, %v1762
      %v1849 = vpack.c.bf16 %v1763, %v1763
      %v1850 = vpack.c.bf16 %v1764, %v1764
      %v1851 = vpack.c.bf16 %v1765, %v1765
      %v1852 = vpack.c.bf16 %v1766, %v1766
      %v1853 = vpack.c.bf16 %v1767, %v1767
      %v1854 = vpack.c.bf16 %v1768, %v1768
      %v1855 = vpack.c.bf16 %v1769, %v1769
      %v1856 = vpack.c.bf16 %v1770, %v1770
      %v1857 = vpack.c.bf16 %v1771, %v1771
      %v1858 = vpack.c.bf16 %v1772, %v1772
      %v1859 = vpack.c.bf16 %v1773, %v1773
      %v1860 = vpack.c.bf16 %v1774, %v1774
      %v1861 = vpack.c.bf16 %v1775, %v1775
      %v1862 = vpack.c.bf16 %v1776, %v1776
      %v1863 = vpack.c.bf16 %v1777, %v1777
      %v1864 = vpack.c.bf16 %v1778, %v1778
      %v1865 = vpack.c.bf16 %v1779, %v1779
      %v1866 = vpack.c.bf16 %v1780, %v1780
      %v1867 = vpack.c.bf16 %v1781, %v1781
      %v1868 = vpack.c.bf16 %v1782, %v1782
      %v1869 = vpack.c.bf16 %v1783, %v1783
      %v1870 = vpack.c.bf16 %v1784, %v1784
      %v1871 = vpack.c.bf16 %v1785, %v1785
      %v1872 = vpack.c.bf16 %v1786, %v1786
      %v1873 = vpack.c.bf16 %v1787, %v1787
      %v1874 = vpack.c.bf16 %v1788, %v1788
      %v1875 = vpack.c.bf16 %v1789, %v1789
      %v1876 = vpack.c.bf16 %v1790, %v1790
      %v1877 = vpack.c.bf16 %v1791, %v1791
      %v1878 = vpack.c.bf16 %v1792, %v1792
      %v1879 = vpack.c.bf16 %v1793, %v1793
      %v1880 = vpack.c.bf16 %v1794, %v1794
      %v1881 = vpack.c.bf16 %v1795, %v1795
      %v1882 = vpack.c.bf16 %v1796, %v1796
      %v1883 = vpack.c.bf16 %v1797, %v1797
      %v1884 = vpack.c.bf16 %v1798, %v1798
      %v1885 = vpack.c.bf16 %v1799, %v1799
      %v1886 = vpack.c.bf16 %v1800, %v1800
      %v1887 = vpack.c.bf16 %v1801, %v1801
      %v1888 = vpack.c.bf16 %v1802, %v1802
      %v1953 = vunpack.c.l.b16 %v1825
      %v1954 = vunpack.c.l.b16 %v1826
      %v1955 = vunpack.c.l.b16 %v1827
      %v1956 = vunpack.c.l.b16 %v1828
      %v1957 = vunpack.c.l.b16 %v1829
      %v1958 = vunpack.c.l.b16 %v1830
      %v1959 = vunpack.c.l.b16 %v1831
      %v1960 = vunpack.c.l.b16 %v1832
      %v1961 = vunpack.c.l.b16 %v1833
      %v1962 = vunpack.c.l.b16 %v1834
      %v1963 = vunpack.c.l.b16 %v1835
      %v1964 = vunpack.c.l.b16 %v1836
      %v1965 = vunpack.c.l.b16 %v1837
      %v1966 = vunpack.c.l.b16 %v1838
      %v1967 = vunpack.c.l.b16 %v1839
      %v1968 = vunpack.c.l.b16 %v1840
      %v1969 = vunpack.c.l.b16 %v1841
      %v1970 = vunpack.c.l.b16 %v1842
      %v1971 = vunpack.c.l.b16 %v1843
      %v1972 = vunpack.c.l.b16 %v1844
      %v1973 = vunpack.c.l.b16 %v1845
      %v1974 = vunpack.c.l.b16 %v1846
      %v1975 = vunpack.c.l.b16 %v1847
      %v1976 = vunpack.c.l.b16 %v1848
      %v1977 = vunpack.c.l.b16 %v1849
      %v1978 = vunpack.c.l.b16 %v1850
      %v1979 = vunpack.c.l.b16 %v1851
      %v1980 = vunpack.c.l.b16 %v1852
      %v1981 = vunpack.c.l.b16 %v1853
      %v1982 = vunpack.c.l.b16 %v1854
      %v1983 = vunpack.c.l.b16 %v1855
      %v1984 = vunpack.c.l.b16 %v1856
      %v1985 = vunpack.c.l.b16 %v1857
      %v1986 = vunpack.c.l.b16 %v1858
      %v1987 = vunpack.c.l.b16 %v1859
      %v1988 = vunpack.c.l.b16 %v1860
      %v1989 = vunpack.c.l.b16 %v1861
      %v1990 = vunpack.c.l.b16 %v1862
      %v1991 = vunpack.c.l.b16 %v1863
      %v1992 = vunpack.c.l.b16 %v1864
      %v1993 = vunpack.c.l.b16 %v1865
      %v1994 = vunpack.c.l.b16 %v1866
      %v1995 = vunpack.c.l.b16 %v1867
      %v1996 = vunpack.c.l.b16 %v1868
      %v1997 = vunpack.c.l.b16 %v1869
      %v1998 = vunpack.c.l.b16 %v1870
      %v1999 = vunpack.c.l.b16 %v1871
      %v2000 = vunpack.c.l.b16 %v1872
      %v2001 = vunpack.c.l.b16 %v1873
      %v2002 = vunpack.c.l.b16 %v1874
      %v2003 = vunpack.c.l.b16 %v1875
      %v2004 = vunpack.c.l.b16 %v1876
      %v2005 = vunpack.c.l.b16 %v1877
      %v2006 = vunpack.c.l.b16 %v1878
      %v2007 = vunpack.c.l.b16 %v1879
      %v2008 = vunpack.c.l.b16 %v1880
      %v2009 = vunpack.c.l.b16 %v1881
      %v2010 = vunpack.c.l.b16 %v1882
      %v2011 = vunpack.c.l.b16 %v1883
      %v2012 = vunpack.c.l.b16 %v1884
      %v2013 = vunpack.c.l.b16 %v1885
      %v2014 = vunpack.c.l.b16 %v1886
      %v2015 = vunpack.c.l.b16 %v1887
      %v2016 = vunpack.c.l.b16 %v1888
      %v2017 = vpack.c.b16 %v1953, %v1953
      %v2018 = vpack.c.b16 %v1954, %v1954
      %v2019 = vpack.c.b16 %v1955, %v1955
      %v2020 = vpack.c.b16 %v1956, %v1956
      %v2021 = vpack.c.b16 %v1957, %v1957
      %v2022 = vpack.c.b16 %v1958, %v1958
      %v2023 = vpack.c.b16 %v1959, %v1959
      %v2024 = vpack.c.b16 %v1960, %v1960
      %v2025 = vpack.c.b16 %v1961, %v1961
      %v2026 = vpack.c.b16 %v1962, %v1962
      %v2027 = vpack.c.b16 %v1963, %v1963
      %v2028 = vpack.c.b16 %v1964, %v1964
      %v2029 = vpack.c.b16 %v1965, %v1965
      %v2030 = vpack.c.b16 %v1966, %v1966
      %v2031 = vpack.c.b16 %v1967, %v1967
      %v2032 = vpack.c.b16 %v1968, %v1968
      %v2033 = vpack.c.b16 %v1969, %v1969
      %v2034 = vpack.c.b16 %v1970, %v1970
      %v2035 = vpack.c.b16 %v1971, %v1971
      %v2036 = vpack.c.b16 %v1972, %v1972
      %v2037 = vpack.c.b16 %v1973, %v1973
      %v2038 = vpack.c.b16 %v1974, %v1974
      %v2039 = vpack.c.b16 %v1975, %v1975
      %v2040 = vpack.c.b16 %v1976, %v1976
      %v2041 = vpack.c.b16 %v1977, %v1977
      %v2042 = vpack.c.b16 %v1978, %v1978
      %v2043 = vpack.c.b16 %v1979, %v1979
      %v2044 = vpack.c.b16 %v1980, %v1980
      %v2045 = vpack.c.b16 %v1981, %v1981
      %v2046 = vpack.c.b16 %v1982, %v1982
      %v2047 = vpack.c.b16 %v1983, %v1983
      %v2048 = vpack.c.b16 %v1984, %v1984
      %v2049 = vpack.c.b16 %v1985, %v1985
      %v2050 = vpack.c.b16 %v1986, %v1986
      %v2051 = vpack.c.b16 %v1987, %v1987
      %v2052 = vpack.c.b16 %v1988, %v1988
      %v2053 = vpack.c.b16 %v1989, %v1989
      %v2054 = vpack.c.b16 %v1990, %v1990
      %v2055 = vpack.c.b16 %v1991, %v1991
      %v2056 = vpack.c.b16 %v1992, %v1992
      %v2057 = vpack.c.b16 %v1993, %v1993
      %v2058 = vpack.c.b16 %v1994, %v1994
      %v2059 = vpack.c.b16 %v1995, %v1995
      %v2060 = vpack.c.b16 %v1996, %v1996
      %v2061 = vpack.c.b16 %v1997, %v1997
      %v2062 = vpack.c.b16 %v1998, %v1998
      %v2063 = vpack.c.b16 %v1999, %v1999
      %v2064 = vpack.c.b16 %v2000, %v2000
      %v2065 = vpack.c.b16 %v2001, %v2001
      %v2066 = vpack.c.b16 %v2002, %v2002
      %v2067 = vpack.c.b16 %v2003, %v2003
      %v2068 = vpack.c.b16 %v2004, %v2004
      %v2069 = vpack.c.b16 %v2005, %v2005
      %v2070 = vpack.c.b16 %v2006, %v2006
      %v2071 = vpack.c.b16 %v2007, %v2007
      %v2072 = vpack.c.b16 %v2008, %v2008
      %v2073 = vpack.c.b16 %v2009, %v2009
      %v2074 = vpack.c.b16 %v2010, %v2010
      %v2075 = vpack.c.b16 %v2011, %v2011
      %v2076 = vpack.c.b16 %v2012, %v2012
      %v2077 = vpack.c.b16 %v2013, %v2013
      %v2078 = vpack.c.b16 %v2014, %v2014
      %v2079 = vpack.c.b16 %v2015, %v2015
      %v2080 = vpack.c.b16 %v2016, %v2016
      %v2081 = vunpack.c.l.b16 %v2017
      %v2082 = vunpack.c.l.b16 %v2018
      %v2083 = vunpack.c.l.b16 %v2019
      %v2084 = vunpack.c.l.b16 %v2020
      %v2085 = vunpack.c.l.b16 %v2021
      %v2086 = vunpack.c.l.b16 %v2022
      %v2087 = vunpack.c.l.b16 %v2023
      %v2088 = vunpack.c.l.b16 %v2024
      %v2089 = vunpack.c.l.b16 %v2025
      %v2090 = vunpack.c.l.b16 %v2026
      %v2091 = vunpack.c.l.b16 %v2027
      %v2092 = vunpack.c.l.b16 %v2028
      %v2093 = vunpack.c.l.b16 %v2029
      %v2094 = vunpack.c.l.b16 %v2030
      %v2095 = vunpack.c.l.b16 %v2031
      %v2096 = vunpack.c.l.b16 %v2032
      %v2097 = vunpack.c.l.b16 %v2033
      %v2098 = vunpack.c.l.b16 %v2034
      %v2099 = vunpack.c.l.b16 %v2035
      %v2100 = vunpack.c.l.b16 %v2036
      %v2101 = vunpack.c.l.b16 %v2037
      %v2102 = vunpack.c.l.b16 %v2038
      %v2103 = vunpack.c.l.b16 %v2039
      %v2104 = vunpack.c.l.b16 %v2040
      %v2105 = vunpack.c.l.b16 %v2041
      %v2106 = vunpack.c.l.b16 %v2042
      %v2107 = vunpack.c.l.b16 %v2043
      %v2108 = vunpack.c.l.b16 %v2044
      %v2109 = vunpack.c.l.b16 %v2045
      %v2110 = vunpack.c.l.b16 %v2046
      %v2111 = vunpack.c.l.b16 %v2047
      %v2112 = vunpack.c.l.b16 %v2048
      %v2113 = vunpack.c.l.b16 %v2049
      %v2114 = vunpack.c.l.b16 %v2050
      %v2115 = vunpack.c.l.b16 %v2051
      %v2116 = vunpack.c.l.b16 %v2052
      %v2117 = vunpack.c.l.b16 %v2053
      %v2118 = vunpack.c.l.b16 %v2054
      %v2119 = vunpack.c.l.b16 %v2055
      %v2120 = vunpack.c.l.b16 %v2056
      %v2121 = vunpack.c.l.b16 %v2057
      %v2122 = vunpack.c.l.b16 %v2058
      %v2123 = vunpack.c.l.b16 %v2059
      %v2124 = vunpack.c.l.b16 %v2060
      %v2125 = vunpack.c.l.b16 %v2061
      %v2126 = vunpack.c.l.b16 %v2062
      %v2127 = vunpack.c.l.b16 %v2063
      %v2128 = vunpack.c.l.b16 %v2064
      %v2129 = vunpack.c.l.b16 %v2065
      %v2130 = vunpack.c.l.b16 %v2066
      %v2131 = vunpack.c.l.b16 %v2067
      %v2132 = vunpack.c.l.b16 %v2068
      %v2133 = vunpack.c.l.b16 %v2069
      %v2134 = vunpack.c.l.b16 %v2070
      %v2135 = vunpack.c.l.b16 %v2071
      %v2136 = vunpack.c.l.b16 %v2072
      %v2137 = vunpack.c.l.b16 %v2073
      %v2138 = vunpack.c.l.b16 %v2074
      %v2139 = vunpack.c.l.b16 %v2075
      %v2140 = vunpack.c.l.b16 %v2076
      %v2141 = vunpack.c.l.b16 %v2077
      %v2142 = vunpack.c.l.b16 %v2078
      %v2143 = vunpack.c.l.b16 %v2079
      %v2144 = vunpack.c.l.b16 %v2080
      %v2145 = vrot.slane %v2081, 7
      %v2146 = vrot.slane %v2082, 6
      %vm2147 = vcmask 1042434
      %v2148 = vsel %vm2147, %v2146, %v2145
      %v2149 = vrot.slane %v2083, 5
      %vm2150 = vcmask 1043459
      %v2151 = vsel %vm2150, %v2149, %v2148
      %v2152 = vrot.slane %v2084, 4
      %vm2153 = vcmask 1044484
      %v2154 = vsel %vm2153, %v2152, %v2151
      %v2155 = vrot.slane %v2085, 3
      %vm2156 = vcmask 1045509
      %v2157 = vsel %vm2156, %v2155, %v2154
      %v2158 = vrot.slane %v2086, 2
      %vm2159 = vcmask 1046534
      %v2160 = vsel %vm2159, %v2158, %v2157
      %v2161 = vrot.slane %v2087, 1
      %vm2162 = vcmask 1047559
      %v2163 = vsel %vm2162, %v2161, %v2160
      %v2164 = vrot.slane %v2089, 7
      %v2165 = vrot.slane %v2090, 6
      %v2166 = vsel %vm2147, %v2165, %v2164
      %v2167 = vrot.slane %v2091, 5
      %v2168 = vsel %vm2150, %v2167, %v2166
      %v2169 = vrot.slane %v2092, 4
      %v2170 = vsel %vm2153, %v2169, %v2168
      %v2171 = vrot.slane %v2093, 3
      %v2172 = vsel %vm2156, %v2171, %v2170
      %v2173 = vrot.slane %v2094, 2
      %v2174 = vsel %vm2159, %v2173, %v2172
      %v2175 = vrot.slane %v2095, 1
      %v2176 = vsel %vm2162, %v2175, %v2174
      %v2177 = vrot.slane %v2097, 7
      %v2178 = vrot.slane %v2098, 6
      %v2179 = vsel %vm2147, %v2178, %v2177
      %v2180 = vrot.slane %v2099, 5
      %v2181 = vsel %vm2150, %v2180, %v2179
      %v2182 = vrot.slane %v2100, 4
      %v2183 = vsel %vm2153, %v2182, %v2181
      %v2184 = vrot.slane %v2101, 3
      %v2185 = vsel %vm2156, %v2184, %v2183
      %v2186 = vrot.slane %v2102, 2
      %v2187 = vsel %vm2159, %v2186, %v2185
      %v2188 = vrot.slane %v2103, 1
      %v2189 = vsel %vm2162, %v2188, %v2187
      %v2190 = vrot.slane %v2105, 7
      %v2191 = vrot.slane %v2106, 6
      %v2192 = vsel %vm2147, %v2191, %v2190
      %v2193 = vrot.slane %v2107, 5
      %v2194 = vsel %vm2150, %v2193, %v2192
      %v2195 = vrot.slane %v2108, 4
      %v2196 = vsel %vm2153, %v2195, %v2194
      %v2197 = vrot.slane %v2109, 3
      %v2198 = vsel %vm2156, %v2197, %v2196
      %v2199 = vrot.slane %v2110, 2
      %v2200 = vsel %vm2159, %v2199, %v2198
      %v2201 = vrot.slane %v2111, 1
      %v2202 = vsel %vm2162, %v2201, %v2200
      %v2203 = vrot.slane %v2113, 7
      %v2204 = vrot.slane %v2114, 6
      %v2205 = vsel %vm2147, %v2204, %v2203
      %v2206 = vrot.slane %v2115, 5
      %v2207 = vsel %vm2150, %v2206, %v2205
      %v2208 = vrot.slane %v2116, 4
      %v2209 = vsel %vm2153, %v2208, %v2207
      %v2210 = vrot.slane %v2117, 3
      %v2211 = vsel %vm2156, %v2210, %v2209
      %v2212 = vrot.slane %v2118, 2
      %v2213 = vsel %vm2159, %v2212, %v2211
      %v2214 = vrot.slane %v2119, 1
      %v2215 = vsel %vm2162, %v2214, %v2213
      %v2216 = vrot.slane %v2121, 7
      %v2217 = vrot.slane %v2122, 6
      %v2218 = vsel %vm2147, %v2217, %v2216
      %v2219 = vrot.slane %v2123, 5
      %v2220 = vsel %vm2150, %v2219, %v2218
      %v2221 = vrot.slane %v2124, 4
      %v2222 = vsel %vm2153, %v2221, %v2220
      %v2223 = vrot.slane %v2125, 3
      %v2224 = vsel %vm2156, %v2223, %v2222
      %v2225 = vrot.slane %v2126, 2
      %v2226 = vsel %vm2159, %v2225, %v2224
      %v2227 = vrot.slane %v2127, 1
      %v2228 = vsel %vm2162, %v2227, %v2226
      %v2229 = vrot.slane %v2129, 7
      %v2230 = vrot.slane %v2130, 6
      %v2231 = vsel %vm2147, %v2230, %v2229
      %v2232 = vrot.slane %v2131, 5
      %v2233 = vsel %vm2150, %v2232, %v2231
      %v2234 = vrot.slane %v2132, 4
      %v2235 = vsel %vm2153, %v2234, %v2233
      %v2236 = vrot.slane %v2133, 3
      %v2237 = vsel %vm2156, %v2236, %v2235
      %v2238 = vrot.slane %v2134, 2
      %v2239 = vsel %vm2159, %v2238, %v2237
      %v2240 = vrot.slane %v2135, 1
      %v2241 = vsel %vm2162, %v2240, %v2239
      %v2242 = vrot.slane %v2137, 7
      %v2243 = vrot.slane %v2138, 6
      %v2244 = vsel %vm2147, %v2243, %v2242
      %v2245 = vrot.slane %v2139, 5
      %v2246 = vsel %vm2150, %v2245, %v2244
      %v2247 = vrot.slane %v2140, 4
      %v2248 = vsel %vm2153, %v2247, %v2246
      %v2249 = vrot.slane %v2141, 3
      %v2250 = vsel %vm2156, %v2249, %v2248
      %v2251 = vrot.slane %v2142, 2
      %v2252 = vsel %vm2159, %v2251, %v2250
      %v2253 = vrot.slane %v2143, 1
      %v2254 = vsel %vm2162, %v2253, %v2252
      %v2255 = vpack.c.b16 %v2163, %v2163
      %v2256 = vpack.c.b16 %v2088, %v2088
      %v2257 = vpack.c.b16 %v2176, %v2176
      %v2258 = vpack.c.b16 %v2096, %v2096
      %v2259 = vpack.c.b16 %v2189, %v2189
      %v2260 = vpack.c.b16 %v2104, %v2104
      %v2261 = vpack.c.b16 %v2202, %v2202
      %v2262 = vpack.c.b16 %v2112, %v2112
      %v2263 = vpack.c.b16 %v2215, %v2215
      %v2264 = vpack.c.b16 %v2120, %v2120
      %v2265 = vpack.c.b16 %v2228, %v2228
      %v2266 = vpack.c.b16 %v2128, %v2128
      %v2267 = vpack.c.b16 %v2241, %v2241
      %v2268 = vpack.c.b16 %v2136, %v2136
      %v2269 = vpack.c.b16 %v2254, %v2254
      %v2270 = vpack.c.b16 %v2144, %v2144
      %s2287 = scalar_lea.vmem [#allocation2], 8
      %vm2288 = vcmask 519168
      %vm2289 = vsmask.f32 7938
      %vm2290 = vmand %vm2288, %vm2289
      %v2291 = vld [vmem:[%s2287] sm:$0xf]
      %v2292 = vsel %vm2290, %v2255, %v2291
      %2293 = vst [vmem:[%s2287] sm:$0xf] %v2292
      %vm2294 = vcmask 516096
      %vm2295 = vsmask.f32 256
      %vm2296 = vmand %vm2294, %vm2295
      %v2297 = vld [vmem:[%s2287 + $0x4] sm:$0x1]
      %v2298 = vsel %vm2296, %v2256, %v2297
      %2299 = vst [vmem:[%s2287 + $0x4] sm:$0x1] %v2298
      %v2300 = vld [vmem:[%s2287 + $0x8] sm:$0xf]
      %v2301 = vsel %vm2290, %v2257, %v2300
      %2302 = vst [vmem:[%s2287 + $0x8] sm:$0xf] %v2301
      %v2303 = vld [vmem:[%s2287 + $0xc] sm:$0x1]
      %v2304 = vsel %vm2296, %v2258, %v2303
      %2305 = vst [vmem:[%s2287 + $0xc] sm:$0x1] %v2304
      %v2306 = vld [vmem:[%s2287 + $0x10] sm:$0xf]
      %v2307 = vsel %vm2290, %v2259, %v2306
      %2308 = vst [vmem:[%s2287 + $0x10] sm:$0xf] %v2307
      %v2309 = vld [vmem:[%s2287 + $0x14] sm:$0x1]
      %v2310 = vsel %vm2296, %v2260, %v2309
      %2311 = vst [vmem:[%s2287 + $0x14] sm:$0x1] %v2310
      %v2312 = vld [vmem:[%s2287 + $0x18] sm:$0xf]
      %v2313 = vsel %vm2290, %v2261, %v2312
      %2314 = vst [vmem:[%s2287 + $0x18] sm:$0xf] %v2313
      %v2315 = vld [vmem:[%s2287 + $0x1c] sm:$0x1]
      %v2316 = vsel %vm2296, %v2262, %v2315
      %2317 = vst [vmem:[%s2287 + $0x1c] sm:$0x1] %v2316
      %v2318 = vld [vmem:[%s2287 + $0x20] sm:$0xf]
      %v2319 = vsel %vm2290, %v2263, %v2318
      %2320 = vst [vmem:[%s2287 + $0x20] sm:$0xf] %v2319
      %v2321 = vld [vmem:[%s2287 + $0x24] sm:$0x1]
      %v2322 = vsel %vm2296, %v2264, %v2321
      %2323 = vst [vmem:[%s2287 + $0x24] sm:$0x1] %v2322
      %v2324 = vld [vmem:[%s2287 + $0x28] sm:$0xf]
      %v2325 = vsel %vm2290, %v2265, %v2324
      %2326 = vst [vmem:[%s2287 + $0x28] sm:$0xf] %v2325
      %v2327 = vld [vmem:[%s2287 + $0x2c] sm:$0x1]
      %v2328 = vsel %vm2296, %v2266, %v2327
      %2329 = vst [vmem:[%s2287 + $0x2c] sm:$0x1] %v2328
      %v2330 = vld [vmem:[%s2287 + $0x30] sm:$0xf]
      %v2331 = vsel %vm2290, %v2267, %v2330
      %2332 = vst [vmem:[%s2287 + $0x30] sm:$0xf] %v2331
      %v2333 = vld [vmem:[%s2287 + $0x34] sm:$0x1]
      %v2334 = vsel %vm2296, %v2268, %v2333
      %2335 = vst [vmem:[%s2287 + $0x34] sm:$0x1] %v2334
      %v2336 = vld [vmem:[%s2287 + $0x38] sm:$0xf]
      %v2337 = vsel %vm2290, %v2269, %v2336
      %2338 = vst [vmem:[%s2287 + $0x38] sm:$0xf] %v2337
      %v2339 = vld [vmem:[%s2287 + $0x3c] sm:$0x1]
      %v2340 = vsel %vm2296, %v2270, %v2339
      %2341 = vst [vmem:[%s2287 + $0x3c] sm:$0x1] %v2340
      %v2342 = vld [vmem:[#allocation2] sm:$0xf]
      %v2343 = vld [vmem:[#allocation2 + $0x4] sm:$0x1]
      %v2344 = vld [vmem:[#allocation2 + $0x8] sm:$0xf]
      %v2345 = vld [vmem:[#allocation2 + $0xc] sm:$0x1]
      %v2346 = vld [vmem:[#allocation2 + $0x10] sm:$0xf]
      %v2347 = vld [vmem:[#allocation2 + $0x14] sm:$0x1]
      %v2348 = vld [vmem:[#allocation2 + $0x18] sm:$0xf]
      %v2349 = vld [vmem:[#allocation2 + $0x1c] sm:$0x1]
      %v2350 = vld [vmem:[#allocation2 + $0x20] sm:$0xf]
      %v2351 = vld [vmem:[#allocation2 + $0x24] sm:$0x1]
      %v2352 = vld [vmem:[#allocation2 + $0x28] sm:$0xf]
      %v2353 = vld [vmem:[#allocation2 + $0x2c] sm:$0x1]
      %v2354 = vld [vmem:[#allocation2 + $0x30] sm:$0xf]
      %v2355 = vld [vmem:[#allocation2 + $0x34] sm:$0x1]
      %v2356 = vld [vmem:[#allocation2 + $0x38] sm:$0xf]
      %v2357 = vld [vmem:[#allocation2 + $0x3c] sm:$0x1]
      %v2358 = vld [vmem:[#allocation2 + $0x40] sm:$0xf]
      %v2359 = vld [vmem:[#allocation2 + $0x44] sm:$0x1]
      %v2360 = vld [vmem:[#allocation2 + $0x48] sm:$0xf]
      %v2361 = vld [vmem:[#allocation2 + $0x4c] sm:$0x1]
      %v2378 = vunpack.c.l.b16 %v2342
      %v2379 = vunpack.c.l.b16 %v2343
      %v2380 = vunpack.c.l.b16 %v2344
      %v2381 = vunpack.c.l.b16 %v2345
      %v2382 = vunpack.c.l.b16 %v2346
      %v2383 = vunpack.c.l.b16 %v2347
      %v2384 = vunpack.c.l.b16 %v2348
      %v2385 = vunpack.c.l.b16 %v2349
      %v2386 = vunpack.c.l.b16 %v2350
      %v2387 = vunpack.c.l.b16 %v2351
      %v2388 = vunpack.c.l.b16 %v2352
      %v2389 = vunpack.c.l.b16 %v2353
      %v2390 = vunpack.c.l.b16 %v2354
      %v2391 = vunpack.c.l.b16 %v2355
      %v2392 = vunpack.c.l.b16 %v2356
      %v2393 = vunpack.c.l.b16 %v2357
      %v2394 = vpack.c.b16 %v2379, %v2378
      %v2395 = vpack.c.b16 %v2381, %v2380
      %v2396 = vpack.c.b16 %v2383, %v2382
      %v2397 = vpack.c.b16 %v2385, %v2384
      %v2398 = vpack.c.b16 %v2387, %v2386
      %v2399 = vpack.c.b16 %v2389, %v2388
      %v2400 = vpack.c.b16 %v2391, %v2390
      %v2401 = vpack.c.b16 %v2393, %v2392
      %v2403 = vshrl.u32 %v2394, 16
      %v2405 = vshll.u32 %v2394, 16
      %v2407 = vrot.slane %v2405, 1
      %v2408 = vor.u32 %v2403, %v2407
      %v2410 = vshrl.u32 %v2395, 16
      %v2412 = vshll.u32 %v2395, 16
      %v2414 = vrot.slane %v2412, 1
      %v2415 = vor.u32 %v2410, %v2414
      %v2417 = vshrl.u32 %v2396, 16
      %v2419 = vshll.u32 %v2396, 16
      %v2421 = vrot.slane %v2419, 1
      %v2422 = vor.u32 %v2417, %v2421
      %v2424 = vshrl.u32 %v2397, 16
      %v2426 = vshll.u32 %v2397, 16
      %v2428 = vrot.slane %v2426, 1
      %v2429 = vor.u32 %v2424, %v2428
      %v2431 = vshrl.u32 %v2398, 16
      %v2433 = vshll.u32 %v2398, 16
      %v2435 = vrot.slane %v2433, 1
      %v2436 = vor.u32 %v2431, %v2435
      %v2438 = vshrl.u32 %v2399, 16
      %v2440 = vshll.u32 %v2399, 16
      %v2442 = vrot.slane %v2440, 1
      %v2443 = vor.u32 %v2438, %v2442
      %v2445 = vshrl.u32 %v2400, 16
      %v2447 = vshll.u32 %v2400, 16
      %v2449 = vrot.slane %v2447, 1
      %v2450 = vor.u32 %v2445, %v2449
      %v2452 = vshrl.u32 %v2401, 16
      %v2454 = vshll.u32 %v2401, 16
      %v2456 = vrot.slane %v2454, 1
      %v2457 = vor.u32 %v2452, %v2456
      %2458 = vrot.lane.b32.xlu0 %v2408, 64
      %v2459 = vpop.permute.xlu0 %2458
      %2460 = vrot.lane.b32.xlu0 %v2415, 64
      %v2461 = vpop.permute.xlu0 %2460
      %2462 = vrot.lane.b32.xlu0 %v2422, 64
      %v2463 = vpop.permute.xlu0 %2462
      %2464 = vrot.lane.b32.xlu0 %v2429, 64
      %v2465 = vpop.permute.xlu0 %2464
      %2466 = vrot.lane.b32.xlu0 %v2436, 64
      %v2467 = vpop.permute.xlu0 %2466
      %2468 = vrot.lane.b32.xlu0 %v2443, 64
      %v2469 = vpop.permute.xlu0 %2468
      %2470 = vrot.lane.b32.xlu0 %v2450, 64
      %v2471 = vpop.permute.xlu0 %2470
      %2472 = vrot.lane.b32.xlu0 %v2457, 64
      %v2473 = vpop.permute.xlu0 %2472
      %v2474 = vrot.slane %v2394, 1
      %v2475 = vrot.slane %v2395, 1
      %v2476 = vrot.slane %v2396, 1
      %v2477 = vrot.slane %v2397, 1
      %v2478 = vrot.slane %v2398, 1
      %v2479 = vrot.slane %v2399, 1
      %v2480 = vrot.slane %v2400, 1
      %v2481 = vrot.slane %v2401, 1
      %v2483 = vunpack.c.l.b16 %v2358
      %v2484 = vpack.c.b16 %v2380, %v2380
      %v2485 = vpack.c.b16 %v2382, %v2382
      %v2486 = vpack.c.b16 %v2384, %v2384
      %v2487 = vpack.c.b16 %v2386, %v2386
      %v2488 = vpack.c.b16 %v2388, %v2388
      %v2489 = vpack.c.b16 %v2390, %v2390
      %v2490 = vpack.c.b16 %v2392, %v2392
      %v2491 = vpack.c.b16 %v2483, %v2483
      %2492 = vrot.lane.b32.xlu0 %v2484, 64
      %v2493 = vpop.permute.xlu0 %2492
      %2494 = vrot.lane.b32.xlu0 %v2485, 64
      %v2495 = vpop.permute.xlu0 %2494
      %2496 = vrot.lane.b32.xlu0 %v2486, 64
      %v2497 = vpop.permute.xlu0 %2496
      %2498 = vrot.lane.b32.xlu0 %v2487, 64
      %v2499 = vpop.permute.xlu0 %2498
      %2500 = vrot.lane.b32.xlu0 %v2488, 64
      %v2501 = vpop.permute.xlu0 %2500
      %2502 = vrot.lane.b32.xlu0 %v2489, 64
      %v2503 = vpop.permute.xlu0 %2502
      %2504 = vrot.lane.b32.xlu0 %v2490, 64
      %v2505 = vpop.permute.xlu0 %2504
      %2506 = vrot.lane.b32.xlu0 %v2491, 64
      %v2507 = vpop.permute.xlu0 %2506
      %v2509 = vunpack.c.l.b16 %v2359
      %v2510 = vpack.c.b16 %v2509, %v2483
      %v2512 = vshrl.u32 %v2510, 16
      %v2514 = vshll.u32 %v2510, 16
      %v2516 = vrot.slane %v2514, 1
      %v2517 = vor.u32 %v2512, %v2516
      %v2518 = vrot.slane %v2510, 1
      %2519 = vrot.lane.b32.xlu0 %v2475, 64
      %v2520 = vpop.permute.xlu0 %2519
      %2521 = vrot.lane.b32.xlu0 %v2476, 64
      %v2522 = vpop.permute.xlu0 %2521
      %2523 = vrot.lane.b32.xlu0 %v2477, 64
      %v2524 = vpop.permute.xlu0 %2523
      %2525 = vrot.lane.b32.xlu0 %v2478, 64
      %v2526 = vpop.permute.xlu0 %2525
      %2527 = vrot.lane.b32.xlu0 %v2479, 64
      %v2528 = vpop.permute.xlu0 %2527
      %2529 = vrot.lane.b32.xlu0 %v2480, 64
      %v2530 = vpop.permute.xlu0 %2529
      %2531 = vrot.lane.b32.xlu0 %v2481, 64
      %v2532 = vpop.permute.xlu0 %2531
      %2533 = vrot.lane.b32.xlu0 %v2518, 64
      %v2534 = vpop.permute.xlu0 %2533
      %v2537 = vunpack.c.l.b16 %v2360
      %v2538 = vunpack.c.l.b16 %v2361
      %v2539 = vpack.c.b16 %v2538, %v2537
      %v2541 = vshrl.u32 %v2539, 16
      %v2543 = vshll.u32 %v2539, 16
      %v2545 = vrot.slane %v2543, 1
      %v2546 = vor.u32 %v2541, %v2545
      %2547 = vrot.lane.b32.xlu0 %v2517, 64
      %v2548 = vpop.permute.xlu0 %2547
      %2549 = vrot.lane.b32.xlu0 %v2546, 64
      %v2550 = vpop.permute.xlu0 %2549
      %v2551 = vrot.slane %v2539, 1
      %vm2552 = vcmask 523264
      %v2555 = vsel %vm2552, %v2342, %v2459
      %v2558 = vsel %vm2552, %v2344, %v2461
      %v2561 = vsel %vm2552, %v2346, %v2463
      %v2564 = vsel %vm2552, %v2348, %v2465
      %v2567 = vsel %vm2552, %v2350, %v2467
      %v2570 = vsel %vm2552, %v2352, %v2469
      %v2573 = vsel %vm2552, %v2354, %v2471
      %v2576 = vsel %vm2552, %v2356, %v2473
      %v2579 = vsel %vm2552, %v2474, %v2493
      %v2582 = vsel %vm2552, %v2475, %v2495
      %v2585 = vsel %vm2552, %v2476, %v2497
      %v2588 = vsel %vm2552, %v2477, %v2499
      %v2591 = vsel %vm2552, %v2478, %v2501
      %v2594 = vsel %vm2552, %v2479, %v2503
      %v2597 = vsel %vm2552, %v2480, %v2505
      %v2600 = vsel %vm2552, %v2481, %v2507
      %v2603 = vsel %vm2552, %v2415, %v2520
      %v2606 = vsel %vm2552, %v2422, %v2522
      %v2609 = vsel %vm2552, %v2429, %v2524
      %v2612 = vsel %vm2552, %v2436, %v2526
      %v2615 = vsel %vm2552, %v2443, %v2528
      %v2618 = vsel %vm2552, %v2450, %v2530
      %v2621 = vsel %vm2552, %v2457, %v2532
      %v2624 = vsel %vm2552, %v2517, %v2534
      %v2627 = vsel %vm2552, %v2358, %v2548
      %v2630 = vsel %vm2552, %v2360, %v2550
      %v2657 = vunpack.c.l.b16 %v2555
      %v2658 = vunpack.c.l.b16 %v2579
      %v2659 = vunpack.c.l.b16 %v2603
      %v2660 = vunpack.c.l.b16 %v2561
      %v2661 = vunpack.c.l.b16 %v2476
      %v2662 = vunpack.c.l.b16 %v2558
      %v2663 = vunpack.c.l.b16 %v2582
      %v2664 = vunpack.c.l.b16 %v2606
      %v2665 = vunpack.c.l.b16 %v2564
      %v2666 = vunpack.c.l.b16 %v2477
      %v2667 = vunpack.c.l.b16 %v2585
      %v2668 = vunpack.c.l.b16 %v2609
      %v2669 = vunpack.c.l.b16 %v2567
      %v2670 = vunpack.c.l.b16 %v2478
      %v2671 = vunpack.c.l.b16 %v2588
      %v2672 = vunpack.c.l.b16 %v2612
      %v2673 = vunpack.c.l.b16 %v2570
      %v2674 = vunpack.c.l.b16 %v2479
      %v2675 = vunpack.c.l.b16 %v2591
      %v2676 = vunpack.c.l.b16 %v2615
      %v2677 = vunpack.c.l.b16 %v2573
      %v2678 = vunpack.c.l.b16 %v2480
      %v2679 = vunpack.c.l.b16 %v2594
      %v2680 = vunpack.c.l.b16 %v2618
      %v2681 = vunpack.c.l.b16 %v2576
      %v2682 = vunpack.c.l.b16 %v2481
      %v2683 = vunpack.c.l.b16 %v2597
      %v2684 = vunpack.c.l.b16 %v2621
      %v2685 = vunpack.c.l.b16 %v2627
      %v2686 = vunpack.c.l.b16 %v2518
      %v2687 = vunpack.c.l.b16 %v2600
      %v2688 = vunpack.c.l.b16 %v2624
      %v2689 = vunpack.c.l.b16 %v2630
      %v2690 = vunpack.c.l.b16 %v2551
      %v2691 = vld [vmem:[%s2] sm:$0xf]
      %v2692 = vld [vmem:[%s2 + $0x4] sm:$0xf]
      %v2693 = vld [vmem:[%s2 + $0x8] sm:$0xf]
      %v2694 = vld [vmem:[%s2 + $0xc] sm:$0xf]
      %v2695 = vld [vmem:[%s2 + $0x10] sm:$0xf]
      %v2696 = vld [vmem:[%s2 + $0x14] sm:$0xf]
      %v2697 = vld [vmem:[%s2 + $0x18] sm:$0xf]
      %v2698 = vld [vmem:[%s2 + $0x1c] sm:$0xf]
      %v2699 = vld [vmem:[%s2 + $0x20] sm:$0xf]
      %v2700 = vld [vmem:[%s2 + $0x24] sm:$0xf]
      %v2701 = vld [vmem:[%s2 + $0x28] sm:$0xf]
      %v2702 = vld [vmem:[%s2 + $0x2c] sm:$0xf]
      %v2703 = vld [vmem:[%s2 + $0x30] sm:$0xf]
      %v2704 = vld [vmem:[%s2 + $0x34] sm:$0xf]
      %v2705 = vld [vmem:[%s2 + $0x38] sm:$0xf]
      %v2706 = vld [vmem:[%s2 + $0x3c] sm:$0xf]
      %v2707 = vld [vmem:[%s2 + $0x40] sm:$0xf]
      %v2708 = vld [vmem:[%s2 + $0x44] sm:$0xf]
      %v2709 = vld [vmem:[%s2 + $0x48] sm:$0xf]
      %v2710 = vld [vmem:[%s2 + $0x4c] sm:$0xf]
      %v2711 = vld [vmem:[%s2 + $0x50] sm:$0xf]
      %v2712 = vld [vmem:[%s2 + $0x54] sm:$0xf]
      %v2713 = vld [vmem:[%s2 + $0x58] sm:$0xf]
      %v2714 = vld [vmem:[%s2 + $0x5c] sm:$0xf]
      %v2715 = vld [vmem:[%s2 + $0x60] sm:$0xf]
      %v2716 = vld [vmem:[%s2 + $0x64] sm:$0xf]
      %v2717 = vld [vmem:[%s2 + $0x68] sm:$0xf]
      %v2718 = vld [vmem:[%s2 + $0x6c] sm:$0xf]
      %v2719 = vld [vmem:[%s2 + $0x70] sm:$0xf]
      %v2720 = vld [vmem:[%s2 + $0x74] sm:$0xf]
      %v2721 = vld [vmem:[%s2 + $0x78] sm:$0xf]
      %v2722 = vld [vmem:[%s2 + $0x7c] sm:$0xf]
      %v2723 = vld [vmem:[%s2 + $0x80] sm:$0xf]
      %v2724 = vld [vmem:[%s2 + $0x84] sm:$0xf]
      %v2725 = vld [vmem:[%s2 + $0x88] sm:$0xf]
      %v2726 = vld [vmem:[%s2 + $0x8c] sm:$0xf]
      %v2727 = vld [vmem:[%s2 + $0x90] sm:$0xf]
      %v2728 = vld [vmem:[%s2 + $0x94] sm:$0xf]
      %v2729 = vld [vmem:[%s2 + $0x98] sm:$0xf]
      %v2730 = vld [vmem:[%s2 + $0x9c] sm:$0xf]
      %v2731 = vld [vmem:[%s2 + $0xa0] sm:$0xf]
      %v2732 = vld [vmem:[%s2 + $0xa4] sm:$0xf]
      %v2733 = vld [vmem:[%s2 + $0xa8] sm:$0xf]
      %v2734 = vld [vmem:[%s2 + $0xac] sm:$0xf]
      %v2735 = vld [vmem:[%s2 + $0xb0] sm:$0xf]
      %v2736 = vld [vmem:[%s2 + $0xb4] sm:$0xf]
      %v2737 = vld [vmem:[%s2 + $0xb8] sm:$0xf]
      %v2738 = vld [vmem:[%s2 + $0xbc] sm:$0xf]
      %v2739 = vld [vmem:[%s2 + $0xc0] sm:$0xf]
      %v2740 = vld [vmem:[%s2 + $0xc4] sm:$0xf]
      %v2741 = vld [vmem:[%s2 + $0xc8] sm:$0xf]
      %v2742 = vld [vmem:[%s2 + $0xcc] sm:$0xf]
      %v2743 = vld [vmem:[%s2 + $0xd0] sm:$0xf]
      %v2744 = vld [vmem:[%s2 + $0xd4] sm:$0xf]
      %v2745 = vld [vmem:[%s2 + $0xd8] sm:$0xf]
      %v2746 = vld [vmem:[%s2 + $0xdc] sm:$0xf]
      %v2747 = vld [vmem:[%s2 + $0xe0] sm:$0xf]
      %v2748 = vld [vmem:[%s2 + $0xe4] sm:$0xf]
      %v2749 = vld [vmem:[%s2 + $0xe8] sm:$0xf]
      %v2750 = vld [vmem:[%s2 + $0xec] sm:$0xf]
      %v2751 = vld [vmem:[%s2 + $0xf0] sm:$0xf]
      %v2752 = vld [vmem:[%s2 + $0xf4] sm:$0xf]
      %v2753 = vld [vmem:[%s2 + $0xf8] sm:$0xf]
      %v2754 = vld [vmem:[%s2 + $0xfc] sm:$0xf]
      %v2755 = vld [vmem:[%s2 + $0x100] sm:$0xf]
      %v2756 = vld [vmem:[%s2 + $0x104] sm:$0xf]
      %v2757 = vld [vmem:[%s2 + $0x108] sm:$0xf]
      %v2758 = vld [vmem:[%s2 + $0x10c] sm:$0xf]
      %v2759 = vld [vmem:[%s2 + $0x110] sm:$0xf]
      %v2760 = vld [vmem:[%s2 + $0x114] sm:$0xf]
      %v2761 = vld [vmem:[%s2 + $0x118] sm:$0xf]
      %v2762 = vld [vmem:[%s2 + $0x11c] sm:$0xf]
      %v2763 = vld [vmem:[%s6] sm:$0x1]
      %v2765 = vlaneseq
      %v2766 = vshrl.u32 %v2765, 7
      %v2767 = vsub.s32 0, %v2766
      %v2768 = vrot.slane %v2763, %v2767
      %v2770 = vpack.c.b16 %v2662, %v2657
      %v2771 = vpack.c.b16 %v2663, %v2658
      %v2772 = vpack.c.b16 %v2664, %v2659
      %v2773 = vpack.c.b16 %v2665, %v2660
      %v2774 = vpack.c.b16 %v2666, %v2661
      %v2775 = vpack.c.b16 %v2671, %v2667
      %v2776 = vpack.c.b16 %v2672, %v2668
      %v2777 = vpack.c.b16 %v2673, %v2669
      %v2778 = vpack.c.b16 %v2674, %v2670
      %v2779 = vpack.c.b16 %v2679, %v2675
      %v2780 = vpack.c.b16 %v2680, %v2676
      %v2781 = vpack.c.b16 %v2681, %v2677
      %v2782 = vpack.c.b16 %v2682, %v2678
      %v2783 = vpack.c.b16 %v2687, %v2683
      %v2784 = vpack.c.b16 %v2688, %v2684
      %v2785 = vpack.c.b16 %v2689, %v2685
      %v2786 = vpack.c.b16 %v2690, %v2686
      %v2872 = vunpack.c.l.b16 %v2691
      %v2873 = vunpack.c.l.b16 %v2692
      %v2874 = vunpack.c.l.b16 %v2693
      %v2875 = vunpack.c.l.b16 %v2694
      %v2876 = vunpack.c.l.b16 %v2695
      %v2877 = vunpack.c.l.b16 %v2696
      %v2878 = vunpack.c.l.b16 %v2697
      %v2879 = vunpack.c.l.b16 %v2698
      %v2880 = vunpack.c.l.b16 %v2699
      %v2881 = vunpack.c.l.b16 %v2700
      %v2882 = vunpack.c.l.b16 %v2701
      %v2883 = vunpack.c.l.b16 %v2702
      %v2884 = vunpack.c.l.b16 %v2703
      %v2885 = vunpack.c.l.b16 %v2704
      %v2886 = vunpack.c.l.b16 %v2705
      %v2887 = vunpack.c.l.b16 %v2706
      %v2888 = vunpack.c.l.b16 %v2707
      %v2889 = vunpack.c.l.b16 %v2708
      %v2890 = vunpack.c.l.b16 %v2709
      %v2891 = vunpack.c.l.b16 %v2710
      %v2892 = vunpack.c.l.b16 %v2711
      %v2893 = vunpack.c.l.b16 %v2712
      %v2894 = vunpack.c.l.b16 %v2713
      %v2895 = vunpack.c.l.b16 %v2714
      %v2896 = vunpack.c.l.b16 %v2715
      %v2897 = vunpack.c.l.b16 %v2716
      %v2898 = vunpack.c.l.b16 %v2717
      %v2899 = vunpack.c.l.b16 %v2718
      %v2900 = vunpack.c.l.b16 %v2719
      %v2901 = vunpack.c.l.b16 %v2720
      %v2902 = vunpack.c.l.b16 %v2721
      %v2903 = vunpack.c.l.b16 %v2722
      %v2904 = vunpack.c.l.b16 %v2723
      %v2905 = vunpack.c.l.b16 %v2724
      %v2906 = vunpack.c.l.b16 %v2725
      %v2907 = vunpack.c.l.b16 %v2726
      %v2908 = vunpack.c.l.b16 %v2727
      %v2909 = vunpack.c.l.b16 %v2728
      %v2910 = vunpack.c.l.b16 %v2729
      %v2911 = vunpack.c.l.b16 %v2730
      %v2912 = vunpack.c.l.b16 %v2731
      %v2913 = vunpack.c.l.b16 %v2732
      %v2914 = vunpack.c.l.b16 %v2733
      %v2915 = vunpack.c.l.b16 %v2734
      %v2916 = vunpack.c.l.b16 %v2735
      %v2917 = vunpack.c.l.b16 %v2736
      %v2918 = vunpack.c.l.b16 %v2737
      %v2919 = vunpack.c.l.b16 %v2738
      %v2920 = vunpack.c.l.b16 %v2739
      %v2921 = vunpack.c.l.b16 %v2740
      %v2922 = vunpack.c.l.b16 %v2741
      %v2923 = vunpack.c.l.b16 %v2742
      %v2924 = vunpack.c.l.b16 %v2743
      %v2925 = vunpack.c.l.b16 %v2744
      %v2926 = vunpack.c.l.b16 %v2745
      %v2927 = vunpack.c.l.b16 %v2746
      %v2928 = vunpack.c.l.b16 %v2747
      %v2929 = vunpack.c.l.b16 %v2748
      %v2930 = vunpack.c.l.b16 %v2749
      %v2931 = vunpack.c.l.b16 %v2750
      %v2932 = vunpack.c.l.b16 %v2751
      %v2933 = vunpack.c.l.b16 %v2752
      %v2934 = vunpack.c.l.b16 %v2753
      %v2935 = vunpack.c.l.b16 %v2754
      %v2936 = vunpack.c.l.b16 %v2755
      %v2937 = vunpack.c.l.b16 %v2756
      %v2938 = vunpack.c.l.b16 %v2757
      %v2939 = vunpack.c.l.b16 %v2758
      %v2940 = vunpack.c.l.b16 %v2759
      %v2941 = vunpack.c.l.b16 %v2760
      %v2942 = vunpack.c.l.b16 %v2761
      %v2943 = vunpack.c.l.b16 %v2762
      %v2944 = vpack.c.b16 %v2873, %v2872
      %v2945 = vpack.c.b16 %v2875, %v2874
      %v2946 = vpack.c.b16 %v2877, %v2876
      %v2947 = vpack.c.b16 %v2879, %v2878
      %v2948 = vpack.c.b16 %v2881, %v2880
      %v2949 = vpack.c.b16 %v2883, %v2882
      %v2950 = vpack.c.b16 %v2885, %v2884
      %v2951 = vpack.c.b16 %v2887, %v2886
      %v2952 = vpack.c.b16 %v2889, %v2888
      %v2953 = vpack.c.b16 %v2891, %v2890
      %v2954 = vpack.c.b16 %v2893, %v2892
      %v2955 = vpack.c.b16 %v2895, %v2894
      %v2956 = vpack.c.b16 %v2897, %v2896
      %v2957 = vpack.c.b16 %v2899, %v2898
      %v2958 = vpack.c.b16 %v2901, %v2900
      %v2959 = vpack.c.b16 %v2903, %v2902
      %v2960 = vpack.c.b16 %v2905, %v2904
      %v2961 = vpack.c.b16 %v2907, %v2906
      %v2962 = vpack.c.b16 %v2909, %v2908
      %v2963 = vpack.c.b16 %v2911, %v2910
      %v2964 = vpack.c.b16 %v2913, %v2912
      %v2965 = vpack.c.b16 %v2915, %v2914
      %v2966 = vpack.c.b16 %v2917, %v2916
      %v2967 = vpack.c.b16 %v2919, %v2918
      %v2968 = vpack.c.b16 %v2921, %v2920
      %v2969 = vpack.c.b16 %v2923, %v2922
      %v2970 = vpack.c.b16 %v2925, %v2924
      %v2971 = vpack.c.b16 %v2927, %v2926
      %v2972 = vpack.c.b16 %v2929, %v2928
      %v2973 = vpack.c.b16 %v2931, %v2930
      %v2974 = vpack.c.b16 %v2933, %v2932
      %v2975 = vpack.c.b16 %v2935, %v2934
      %v2976 = vpack.c.b16 %v2937, %v2936
      %v2977 = vpack.c.b16 %v2939, %v2938
      %v2978 = vpack.c.b16 %v2941, %v2940
      %v2979 = vpack.c.b16 %v2943, %v2942
      %v3017 = vsel %vm2552, %v2774, 0
      %v3020 = vsel %vm2552, %v2778, 0
      %v3023 = vsel %vm2552, %v2782, 0
      %v3026 = vsel %vm2552, %v2786, 0
      %3028 = vmatprep.subr.bf16.mxu0 0
      %3029 = vmatpush1.bf16.msra.mxu0 %v2951
      %3030 = vmatprep.subr.bf16.mxu0 0
      %3031 = vmatpush1.bf16.msra.mxu0 %v2950
      %3032 = vmatprep.subr.bf16.mxu0 0
      %3033 = vmatpush1.bf16.msra.mxu0 %v2949
      %3034 = vmatprep.subr.bf16.mxu0 0
      %3035 = vmatpush1.bf16.msra.mxu0 %v2948
      %3036 = vmatprep.subr.bf16.mxu0 0
      %3037 = vmatpush1.bf16.msra.mxu0 %v2947
      %3038 = vmatprep.subr.bf16.mxu0 0
      %3039 = vmatpush1.bf16.msra.mxu0 %v2946
      %3040 = vmatprep.subr.bf16.mxu0 0
      %3041 = vmatpush1.bf16.msra.mxu0 %v2945
      %3042 = vmatprep.subr.bf16.mxu0 0
      %3043 = vmatpush1.bf16.msra.mxu0 %v2944
      %3044 = vmatprep.subr.bf16.mxu0 0
      %3045 = vmatpush2.bf16.msra.mxu0 %v2959
      %3046 = vmatprep.subr.bf16.mxu0 0
      %3047 = vmatpush2.bf16.msra.mxu0 %v2958
      %3048 = vmatprep.subr.bf16.mxu0 0
      %3049 = vmatpush2.bf16.msra.mxu0 %v2957
      %3050 = vmatprep.subr.bf16.mxu0 0
      %3051 = vmatpush2.bf16.msra.mxu0 %v2956
      %3052 = vmatprep.subr.bf16.mxu0 0
      %3053 = vmatpush2.bf16.msra.mxu0 %v2955
      %3054 = vmatprep.subr.bf16.mxu0 0
      %3055 = vmatpush2.bf16.msra.mxu0 %v2954
      %3056 = vmatprep.subr.bf16.mxu0 0
      %3057 = vmatpush2.bf16.msra.mxu0 %v2953
      %3058 = vmatprep.subr.bf16.mxu0 0
      %3059 = vmatpush2.bf16.msra.mxu0 %v2952
      %3060 = vmatprep.mubr.bf16.mxu0 %v2771
      %3061 = vmatmul.mubr.bf16.gmra.mxu0 %v2770
      %v3062 = vpop.f32.mrf.mxu0
      %v3063 = vadd.f32 %v2768, %v3062
      %v3064 = vpop.f32.mrf.mxu0
      %v3065 = vpop.f32.mrf.mxu0
      %v3066 = vadd.f32 %v2768, %v3065
      %v3067 = vpop.f32.mrf.mxu0
      %3068 = vmatprep.mubr.bf16.mxu0 %v2775
      %3069 = vmatmul.mubr.bf16.gmra.mxu0 %v2773
      %v3070 = vpop.f32.mrf.mxu0
      %v3071 = vadd.f32 %v2768, %v3070
      %v3072 = vpop.f32.mrf.mxu0
      %v3073 = vpop.f32.mrf.mxu0
      %v3074 = vadd.f32 %v2768, %v3073
      %v3075 = vpop.f32.mrf.mxu0
      %3076 = vmatprep.mubr.bf16.mxu0 %v2779
      %3077 = vmatmul.mubr.bf16.gmra.mxu0 %v2777
      %v3078 = vpop.f32.mrf.mxu0
      %v3079 = vadd.f32 %v2768, %v3078
      %v3080 = vpop.f32.mrf.mxu0
      %v3081 = vpop.f32.mrf.mxu0
      %v3082 = vadd.f32 %v2768, %v3081
      %v3083 = vpop.f32.mrf.mxu0
      %3084 = vmatprep.mubr.bf16.mxu0 %v2783
      %3085 = vmatmul.mubr.bf16.gmra.mxu0 %v2781
      %v3086 = vpop.f32.mrf.mxu0
      %v3087 = vadd.f32 %v2768, %v3086
      %v3088 = vpop.f32.mrf.mxu0
      %v3089 = vpop.f32.mrf.mxu0
      %v3090 = vadd.f32 %v2768, %v3089
      %v3091 = vpop.f32.mrf.mxu0
      %3092 = vdwg.mxu0
      %3093 = vmatprep.subr.bf16.mxu0 0
      %3094 = vmatpush1.bf16.msra.mxu0 %v2967
      %3095 = vmatprep.subr.bf16.mxu0 0
      %3096 = vmatpush1.bf16.msra.mxu0 %v2966
      %3097 = vmatprep.subr.bf16.mxu0 0
      %3098 = vmatpush1.bf16.msra.mxu0 %v2965
      %3099 = vmatprep.subr.bf16.mxu0 0
      %3100 = vmatpush1.bf16.msra.mxu0 %v2964
      %3101 = vmatprep.subr.bf16.mxu0 0
      %3102 = vmatpush1.bf16.msra.mxu0 %v2963
      %3103 = vmatprep.subr.bf16.mxu0 0
      %3104 = vmatpush1.bf16.msra.mxu0 %v2962
      %3105 = vmatprep.subr.bf16.mxu0 0
      %3106 = vmatpush1.bf16.msra.mxu0 %v2961
      %3107 = vmatprep.subr.bf16.mxu0 0
      %3108 = vmatpush1.bf16.msra.mxu0 %v2960
      %3109 = vmatprep.subr.bf16.mxu0 0
      %3110 = vmatpush2.bf16.msra.mxu0 %v2975
      %3111 = vmatprep.subr.bf16.mxu0 0
      %3112 = vmatpush2.bf16.msra.mxu0 %v2974
      %3113 = vmatprep.subr.bf16.mxu0 0
      %3114 = vmatpush2.bf16.msra.mxu0 %v2973
      %3115 = vmatprep.subr.bf16.mxu0 0
      %3116 = vmatpush2.bf16.msra.mxu0 %v2972
      %3117 = vmatprep.subr.bf16.mxu0 0
      %3118 = vmatpush2.bf16.msra.mxu0 %v2971
      %3119 = vmatprep.subr.bf16.mxu0 0
      %3120 = vmatpush2.bf16.msra.mxu0 %v2970
      %3121 = vmatprep.subr.bf16.mxu0 0
      %3122 = vmatpush2.bf16.msra.mxu0 %v2969
      %3123 = vmatprep.subr.bf16.mxu0 0
      %3124 = vmatpush2.bf16.msra.mxu0 %v2968
      %3125 = vmatprep.mubr.bf16.mxu0 %v2773
      %3126 = vmatmul.mubr.bf16.gmra.mxu0 %v2772
      %v3127 = vpop.f32.mrf.mxu0
      %v3128 = vadd.f32 %v3063, %v3127
      %v3129 = vpop.f32.mrf.mxu0
      %v3130 = vpop.f32.mrf.mxu0
      %v3131 = vadd.f32 %v3066, %v3130
      %v3132 = vpop.f32.mrf.mxu0
      %3133 = vmatprep.mubr.bf16.mxu0 %v2777
      %3134 = vmatmul.mubr.bf16.gmra.mxu0 %v2776
      %v3135 = vpop.f32.mrf.mxu0
      %v3136 = vadd.f32 %v3071, %v3135
      %v3137 = vpop.f32.mrf.mxu0
      %v3138 = vpop.f32.mrf.mxu0
      %v3139 = vadd.f32 %v3074, %v3138
      %v3140 = vpop.f32.mrf.mxu0
      %3141 = vmatprep.mubr.bf16.mxu0 %v2781
      %3142 = vmatmul.mubr.bf16.gmra.mxu0 %v2780
      %v3143 = vpop.f32.mrf.mxu0
      %v3144 = vadd.f32 %v3079, %v3143
      %v3145 = vpop.f32.mrf.mxu0
      %v3146 = vpop.f32.mrf.mxu0
      %v3147 = vadd.f32 %v3082, %v3146
      %v3148 = vpop.f32.mrf.mxu0
      %3149 = vmatprep.mubr.bf16.mxu0 %v2785
      %3150 = vmatmul.mubr.bf16.gmra.mxu0 %v2784
      %v3151 = vpop.f32.mrf.mxu0
      %v3152 = vadd.f32 %v3087, %v3151
      %v3153 = vpop.f32.mrf.mxu0
      %v3154 = vpop.f32.mrf.mxu0
      %v3155 = vadd.f32 %v3090, %v3154
      %v3156 = vpop.f32.mrf.mxu0
      %3157 = vdwg.mxu0
      %3158 = vmatprep.subr.bf16.mxu0 0
      %3159 = vmatpush1.bf16.msra.mxu0 0
      %3160 = vmatprep.subr.bf16.mxu0 0
      %3161 = vmatpush1.bf16.msra.mxu0 0
      %3162 = vmatprep.subr.bf16.mxu0 0
      %3163 = vmatpush1.bf16.msra.mxu0 0
      %3164 = vmatprep.subr.bf16.mxu0 0
      %3165 = vmatpush1.bf16.msra.mxu0 0
      %3166 = vmatprep.subr.bf16.mxu0 0
      %3167 = vmatpush1.bf16.msra.mxu0 %v2979
      %3168 = vmatprep.subr.bf16.mxu0 0
      %3169 = vmatpush1.bf16.msra.mxu0 %v2978
      %3170 = vmatprep.subr.bf16.mxu0 0
      %3171 = vmatpush1.bf16.msra.mxu0 %v2977
      %3172 = vmatprep.subr.bf16.mxu0 0
      %3173 = vmatpush1.bf16.msra.mxu0 %v2976
      %3174 = vmatprep.subr.bf16.mxu0 0
      %3175 = vmatpush2.bf16.msra.mxu0 0
      %3176 = vmatprep.subr.bf16.mxu0 0
      %3177 = vmatpush2.bf16.msra.mxu0 0
      %3178 = vmatprep.subr.bf16.mxu0 0
      %3179 = vmatpush2.bf16.msra.mxu0 0
      %3180 = vmatprep.subr.bf16.mxu0 0
      %3181 = vmatpush2.bf16.msra.mxu0 0
      %3182 = vmatprep.subr.bf16.mxu0 0
      %3183 = vmatpush2.bf16.msra.mxu0 0
      %3184 = vmatprep.subr.bf16.mxu0 0
      %3185 = vmatpush2.bf16.msra.mxu0 0
      %3186 = vmatprep.subr.bf16.mxu0 0
      %3187 = vmatpush2.bf16.msra.mxu0 0
      %3188 = vmatprep.subr.bf16.mxu0 0
      %3189 = vmatpush2.bf16.msra.mxu0 0
      %3190 = vmatprep.mubr.bf16.mxu0 0
      %3191 = vmatmul.mubr.bf16.gmra.mxu0 %v3017
      %v3192 = vpop.f32.mrf.mxu0
      %v3193 = vadd.f32 %v3128, %v3192
      %v3194 = vpop.f32.mrf.mxu0
      %v3195 = vpop.f32.mrf.mxu0
      %v3196 = vadd.f32 %v3131, %v3195
      %v3197 = vpop.f32.mrf.mxu0
      %3198 = vmatprep.mubr.bf16.mxu0 0
      %3199 = vmatmul.mubr.bf16.gmra.mxu0 %v3020
      %v3200 = vpop.f32.mrf.mxu0
      %v3201 = vadd.f32 %v3136, %v3200
      %v3202 = vpop.f32.mrf.mxu0
      %v3203 = vpop.f32.mrf.mxu0
      %v3204 = vadd.f32 %v3139, %v3203
      %v3205 = vpop.f32.mrf.mxu0
      %3206 = vmatprep.mubr.bf16.mxu0 0
      %3207 = vmatmul.mubr.bf16.gmra.mxu0 %v3023
      %v3208 = vpop.f32.mrf.mxu0
      %v3209 = vadd.f32 %v3144, %v3208
      %v3210 = vpop.f32.mrf.mxu0
      %v3211 = vpop.f32.mrf.mxu0
      %v3212 = vadd.f32 %v3147, %v3211
      %v3213 = vpop.f32.mrf.mxu0
      %3214 = vmatprep.mubr.bf16.mxu0 0
      %3215 = vmatmul.mubr.bf16.gmra.mxu0 %v3026
      %v3216 = vpop.f32.mrf.mxu0
      %v3217 = vadd.f32 %v3152, %v3216
      %v3218 = vpop.f32.mrf.mxu0
      %v3219 = vpop.f32.mrf.mxu0
      %v3220 = vadd.f32 %v3155, %v3219
      %v3221 = vpop.f32.mrf.mxu0
      %3222 = vdwg.mxu0
      %v3223 = vmax.f32 %v3193, 0.0
      %v3224 = vmax.f32 %v3196, 0.0
      %v3225 = vmax.f32 %v3201, 0.0
      %v3226 = vmax.f32 %v3204, 0.0
      %v3227 = vmax.f32 %v3209, 0.0
      %v3228 = vmax.f32 %v3212, 0.0
      %v3229 = vmax.f32 %v3217, 0.0
      %v3230 = vmax.f32 %v3220, 0.0
      %v3239 = vcombine.high %v3223, %v3223
      %v3241 = vunpack.c.l.s4 1983009808
      %v3242 = vunpack.c.0.s8 %v3241
      %v3243 = vlaneseq
      %v3244 = vshrl.u32 %v3243, 7
      %v3245 = vsub.s32 %v3242, %v3244
      %v3246 = vrot.slane %v3223, %v3245
      %v3248 = vunpack.c.l.s4 1983009808
      %v3249 = vunpack.c.0.s8 %v3248
      %v3250 = vlaneseq
      %v3251 = vshrl.u32 %v3250, 7
      %v3252 = vsub.s32 %v3249, %v3251
      %v3253 = vrot.slane %v3239, %v3252
      %v3254 = vcombine.high %v3246, %v3246
      %v3255 = vcombine.high %v3253, %v3253
      %v3256 = vcombine.high %v3224, %v3224
      %v3258 = vunpack.c.l.s4 1983009808
      %v3259 = vunpack.c.0.s8 %v3258
      %v3260 = vlaneseq
      %v3261 = vshrl.u32 %v3260, 7
      %v3262 = vsub.s32 %v3259, %v3261
      %v3263 = vrot.slane %v3224, %v3262
      %v3265 = vunpack.c.l.s4 1983009808
      %v3266 = vunpack.c.0.s8 %v3265
      %v3267 = vlaneseq
      %v3268 = vshrl.u32 %v3267, 7
      %v3269 = vsub.s32 %v3266, %v3268
      %v3270 = vrot.slane %v3256, %v3269
      %v3271 = vcombine.high %v3263, %v3263
      %v3272 = vcombine.high %v3270, %v3270
      %v3273 = vcombine.high %v3225, %v3225
      %v3275 = vunpack.c.l.s4 1983009808
      %v3276 = vunpack.c.0.s8 %v3275
      %v3277 = vlaneseq
      %v3278 = vshrl.u32 %v3277, 7
      %v3279 = vsub.s32 %v3276, %v3278
      %v3280 = vrot.slane %v3225, %v3279
      %v3282 = vunpack.c.l.s4 1983009808
      %v3283 = vunpack.c.0.s8 %v3282
      %v3284 = vlaneseq
      %v3285 = vshrl.u32 %v3284, 7
      %v3286 = vsub.s32 %v3283, %v3285
      %v3287 = vrot.slane %v3273, %v3286
      %v3288 = vcombine.high %v3280, %v3280
      %v3289 = vcombine.high %v3287, %v3287
      %v3290 = vcombine.high %v3226, %v3226
      %v3292 = vunpack.c.l.s4 1983009808
      %v3293 = vunpack.c.0.s8 %v3292
      %v3294 = vlaneseq
      %v3295 = vshrl.u32 %v3294, 7
      %v3296 = vsub.s32 %v3293, %v3295
      %v3297 = vrot.slane %v3226, %v3296
      %v3299 = vunpack.c.l.s4 1983009808
      %v3300 = vunpack.c.0.s8 %v3299
      %v3301 = vlaneseq
      %v3302 = vshrl.u32 %v3301, 7
      %v3303 = vsub.s32 %v3300, %v3302
      %v3304 = vrot.slane %v3290, %v3303
      %v3305 = vcombine.high %v3297, %v3297
      %v3306 = vcombine.high %v3304, %v3304
      %v3307 = vcombine.high %v3227, %v3227
      %v3309 = vunpack.c.l.s4 1983009808
      %v3310 = vunpack.c.0.s8 %v3309
      %v3311 = vlaneseq
      %v3312 = vshrl.u32 %v3311, 7
      %v3313 = vsub.s32 %v3310, %v3312
      %v3314 = vrot.slane %v3227, %v3313
      %v3316 = vunpack.c.l.s4 1983009808
      %v3317 = vunpack.c.0.s8 %v3316
      %v3318 = vlaneseq
      %v3319 = vshrl.u32 %v3318, 7
      %v3320 = vsub.s32 %v3317, %v3319
      %v3321 = vrot.slane %v3307, %v3320
      %v3322 = vcombine.high %v3314, %v3314
      %v3323 = vcombine.high %v3321, %v3321
      %v3324 = vcombine.high %v3228, %v3228
      %v3326 = vunpack.c.l.s4 1983009808
      %v3327 = vunpack.c.0.s8 %v3326
      %v3328 = vlaneseq
      %v3329 = vshrl.u32 %v3328, 7
      %v3330 = vsub.s32 %v3327, %v3329
      %v3331 = vrot.slane %v3228, %v3330
      %v3333 = vunpack.c.l.s4 1983009808
      %v3334 = vunpack.c.0.s8 %v3333
      %v3335 = vlaneseq
      %v3336 = vshrl.u32 %v3335, 7
      %v3337 = vsub.s32 %v3334, %v3336
      %v3338 = vrot.slane %v3324, %v3337
      %v3339 = vcombine.high %v3331, %v3331
      %v3340 = vcombine.high %v3338, %v3338
      %v3341 = vcombine.high %v3229, %v3229
      %v3343 = vunpack.c.l.s4 1983009808
      %v3344 = vunpack.c.0.s8 %v3343
      %v3345 = vlaneseq
      %v3346 = vshrl.u32 %v3345, 7
      %v3347 = vsub.s32 %v3344, %v3346
      %v3348 = vrot.slane %v3229, %v3347
      %v3350 = vunpack.c.l.s4 1983009808
      %v3351 = vunpack.c.0.s8 %v3350
      %v3352 = vlaneseq
      %v3353 = vshrl.u32 %v3352, 7
      %v3354 = vsub.s32 %v3351, %v3353
      %v3355 = vrot.slane %v3341, %v3354
      %v3356 = vcombine.high %v3348, %v3348
      %v3357 = vcombine.high %v3355, %v3355
      %v3358 = vcombine.high %v3230, %v3230
      %v3360 = vunpack.c.l.s4 1983009808
      %v3361 = vunpack.c.0.s8 %v3360
      %v3362 = vlaneseq
      %v3363 = vshrl.u32 %v3362, 7
      %v3364 = vsub.s32 %v3361, %v3363
      %v3365 = vrot.slane %v3230, %v3364
      %v3367 = vunpack.c.l.s4 1983009808
      %v3368 = vunpack.c.0.s8 %v3367
      %v3369 = vlaneseq
      %v3370 = vshrl.u32 %v3369, 7
      %v3371 = vsub.s32 %v3368, %v3370
      %v3372 = vrot.slane %v3358, %v3371
      %v3373 = vcombine.high %v3365, %v3365
      %v3374 = vcombine.high %v3372, %v3372
      %v3407 = vmax.f32 %v3246, %v3263
      %v3408 = vmax.f32 %v3254, %v3271
      %v3409 = vmax.f32 %v3253, %v3270
      %v3410 = vmax.f32 %v3255, %v3272
      %v3411 = vmax.f32 %v3280, %v3297
      %v3412 = vmax.f32 %v3288, %v3305
      %v3413 = vmax.f32 %v3287, %v3304
      %v3414 = vmax.f32 %v3289, %v3306
      %v3415 = vmax.f32 %v3314, %v3331
      %v3416 = vmax.f32 %v3322, %v3339
      %v3417 = vmax.f32 %v3321, %v3338
      %v3418 = vmax.f32 %v3323, %v3340
      %v3419 = vmax.f32 %v3348, %v3365
      %v3420 = vmax.f32 %v3356, %v3373
      %v3421 = vmax.f32 %v3355, %v3372
      %v3422 = vmax.f32 %v3357, %v3374
      %v3439 = vrot.slane %v3407, 7
      %v3440 = vrot.slane %v3439, 2
      %v3441 = vrot.slane %v3408, 7
      %v3442 = vrot.slane %v3441, 2
      %v3443 = vrot.slane %v3409, 7
      %v3444 = vrot.slane %v3443, 2
      %v3445 = vrot.slane %v3410, 7
      %v3446 = vrot.slane %v3445, 2
      %v3447 = vrot.slane %v3411, 7
      %v3448 = vrot.slane %v3447, 2
      %v3449 = vrot.slane %v3412, 7
      %v3450 = vrot.slane %v3449, 2
      %v3451 = vrot.slane %v3413, 7
      %v3452 = vrot.slane %v3451, 2
      %v3453 = vrot.slane %v3414, 7
      %v3454 = vrot.slane %v3453, 2
      %v3455 = vrot.slane %v3415, 7
      %v3456 = vrot.slane %v3455, 2
      %v3457 = vrot.slane %v3416, 7
      %v3458 = vrot.slane %v3457, 2
      %v3459 = vrot.slane %v3417, 7
      %v3460 = vrot.slane %v3459, 2
      %v3461 = vrot.slane %v3418, 7
      %v3462 = vrot.slane %v3461, 2
      %v3463 = vrot.slane %v3419, 7
      %v3464 = vrot.slane %v3463, 2
      %v3465 = vrot.slane %v3420, 7
      %v3466 = vrot.slane %v3465, 2
      %v3467 = vrot.slane %v3421, 7
      %v3468 = vrot.slane %v3467, 2
      %v3469 = vrot.slane %v3422, 7
      %v3470 = vrot.slane %v3469, 2
      %v3487 = vmax.f32 %v3407, %v3440
      %v3488 = vmax.f32 %v3408, %v3442
      %v3489 = vmax.f32 %v3409, %v3444
      %v3490 = vmax.f32 %v3410, %v3446
      %v3491 = vmax.f32 %v3411, %v3448
      %v3492 = vmax.f32 %v3412, %v3450
      %v3493 = vmax.f32 %v3413, %v3452
      %v3494 = vmax.f32 %v3414, %v3454
      %v3495 = vmax.f32 %v3415, %v3456
      %v3496 = vmax.f32 %v3416, %v3458
      %v3497 = vmax.f32 %v3417, %v3460
      %v3498 = vmax.f32 %v3418, %v3462
      %v3499 = vmax.f32 %v3419, %v3464
      %v3500 = vmax.f32 %v3420, %v3466
      %v3501 = vmax.f32 %v3421, %v3468
      %v3502 = vmax.f32 %v3422, %v3470
      %3503 = vst [vmem:[#allocation3] sm:$0x7] 0
      %3504 = vst [vmem:[#allocation3 + $0x4] sm:$0x7] 0
      %3505 = vst [vmem:[#allocation3 + $0x8] sm:$0x7] 0
      %3506 = vst [vmem:[#allocation3 + $0xc] sm:$0x7] 0
      %3507 = vst [vmem:[#allocation3 + $0x10] sm:$0x7] 0
      %3508 = vst [vmem:[#allocation3 + $0x14] sm:$0x7] 0
      %v3509 = vpack.c.bf16 %v3487, %v3487
      %v3510 = vpack.c.bf16 %v3488, %v3488
      %v3511 = vpack.c.bf16 %v3489, %v3489
      %v3512 = vpack.c.bf16 %v3490, %v3490
      %v3513 = vpack.c.bf16 %v3491, %v3491
      %v3514 = vpack.c.bf16 %v3492, %v3492
      %v3515 = vpack.c.bf16 %v3493, %v3493
      %v3516 = vpack.c.bf16 %v3494, %v3494
      %v3517 = vpack.c.bf16 %v3495, %v3495
      %v3518 = vpack.c.bf16 %v3496, %v3496
      %v3519 = vpack.c.bf16 %v3497, %v3497
      %v3520 = vpack.c.bf16 %v3498, %v3498
      %v3521 = vpack.c.bf16 %v3499, %v3499
      %v3522 = vpack.c.bf16 %v3500, %v3500
      %v3523 = vpack.c.bf16 %v3501, %v3501
      %v3524 = vpack.c.bf16 %v3502, %v3502
      %v3541 = vunpack.c.l.b16 %v3509
      %v3542 = vunpack.c.l.b16 %v3510
      %v3543 = vunpack.c.l.b16 %v3511
      %v3544 = vunpack.c.l.b16 %v3512
      %v3545 = vunpack.c.l.b16 %v3513
      %v3546 = vunpack.c.l.b16 %v3514
      %v3547 = vunpack.c.l.b16 %v3515
      %v3548 = vunpack.c.l.b16 %v3516
      %v3549 = vunpack.c.l.b16 %v3517
      %v3550 = vunpack.c.l.b16 %v3518
      %v3551 = vunpack.c.l.b16 %v3519
      %v3552 = vunpack.c.l.b16 %v3520
      %v3553 = vunpack.c.l.b16 %v3521
      %v3554 = vunpack.c.l.b16 %v3522
      %v3555 = vunpack.c.l.b16 %v3523
      %v3556 = vunpack.c.l.b16 %v3524
      %v3557 = vpack.c.b16 %v3541, %v3541
      %v3558 = vpack.c.b16 %v3542, %v3542
      %v3559 = vpack.c.b16 %v3543, %v3543
      %v3560 = vpack.c.b16 %v3544, %v3544
      %v3561 = vpack.c.b16 %v3545, %v3545
      %v3562 = vpack.c.b16 %v3546, %v3546
      %v3563 = vpack.c.b16 %v3547, %v3547
      %v3564 = vpack.c.b16 %v3548, %v3548
      %v3565 = vpack.c.b16 %v3549, %v3549
      %v3566 = vpack.c.b16 %v3550, %v3550
      %v3567 = vpack.c.b16 %v3551, %v3551
      %v3568 = vpack.c.b16 %v3552, %v3552
      %v3569 = vpack.c.b16 %v3553, %v3553
      %v3570 = vpack.c.b16 %v3554, %v3554
      %v3571 = vpack.c.b16 %v3555, %v3555
      %v3572 = vpack.c.b16 %v3556, %v3556
      %v3573 = vunpack.c.l.b16 %v3557
      %v3574 = vunpack.c.l.b16 %v3558
      %v3575 = vunpack.c.l.b16 %v3559
      %v3576 = vunpack.c.l.b16 %v3560
      %v3577 = vunpack.c.l.b16 %v3561
      %v3578 = vunpack.c.l.b16 %v3562
      %v3579 = vunpack.c.l.b16 %v3563
      %v3580 = vunpack.c.l.b16 %v3564
      %v3581 = vunpack.c.l.b16 %v3565
      %v3582 = vunpack.c.l.b16 %v3566
      %v3583 = vunpack.c.l.b16 %v3567
      %v3584 = vunpack.c.l.b16 %v3568
      %v3585 = vunpack.c.l.b16 %v3569
      %v3586 = vunpack.c.l.b16 %v3570
      %v3587 = vunpack.c.l.b16 %v3571
      %v3588 = vunpack.c.l.b16 %v3572
      %v3589 = vrot.slane %v3573, 7
      %v3590 = vrot.slane %v3574, 6
      %v3591 = vsel %vm2147, %v3590, %v3589
      %v3592 = vrot.slane %v3575, 5
      %v3593 = vsel %vm2150, %v3592, %v3591
      %v3594 = vrot.slane %v3576, 4
      %v3595 = vsel %vm2153, %v3594, %v3593
      %v3596 = vrot.slane %v3577, 7
      %v3597 = vrot.slane %v3578, 6
      %v3598 = vsel %vm2147, %v3597, %v3596
      %v3599 = vrot.slane %v3579, 5
      %v3600 = vsel %vm2150, %v3599, %v3598
      %v3601 = vrot.slane %v3580, 4
      %v3602 = vsel %vm2153, %v3601, %v3600
      %v3603 = vrot.slane %v3581, 7
      %v3604 = vrot.slane %v3582, 6
      %v3605 = vsel %vm2147, %v3604, %v3603
      %v3606 = vrot.slane %v3583, 5
      %v3607 = vsel %vm2150, %v3606, %v3605
      %v3608 = vrot.slane %v3584, 4
      %v3609 = vsel %vm2153, %v3608, %v3607
      %v3610 = vrot.slane %v3585, 7
      %v3611 = vrot.slane %v3586, 6
      %v3612 = vsel %vm2147, %v3611, %v3610
      %v3613 = vrot.slane %v3587, 5
      %v3614 = vsel %vm2150, %v3613, %v3612
      %v3615 = vrot.slane %v3588, 4
      %v3616 = vsel %vm2153, %v3615, %v3614
      %v3617 = vpack.c.b16 %v3595, %v3595
      %v3618 = vpack.c.b16 %v3602, %v3602
      %v3619 = vpack.c.b16 %v3609, %v3609
      %v3620 = vpack.c.b16 %v3616, %v3616
      %s3625 = scalar_lea.vmem [#allocation3], 4
      %vm3626 = vcmask 1042432
      %vm3627 = vsmask.f32 2306
      %vm3628 = vmand %vm3626, %vm3627
      %v3629 = vld [vmem:[%s3625] sm:$0x7]
      %v3630 = vsel %vm3628, %v3617, %v3629
      %3631 = vst [vmem:[%s3625] sm:$0x7] %v3630
      %v3632 = vld [vmem:[%s3625 + $0x4] sm:$0x7]
      %v3633 = vsel %vm3628, %v3618, %v3632
      %3634 = vst [vmem:[%s3625 + $0x4] sm:$0x7] %v3633
      %v3635 = vld [vmem:[%s3625 + $0x8] sm:$0x7]
      %v3636 = vsel %vm3628, %v3619, %v3635
      %3637 = vst [vmem:[%s3625 + $0x8] sm:$0x7] %v3636
      %v3638 = vld [vmem:[%s3625 + $0xc] sm:$0x7]
      %v3639 = vsel %vm3628, %v3620, %v3638
      %3640 = vst [vmem:[%s3625 + $0xc] sm:$0x7] %v3639
      %v3641 = vld [vmem:[#allocation3] sm:$0x7]
      %v3642 = vld [vmem:[#allocation3 + $0x4] sm:$0x7]
      %v3643 = vld [vmem:[#allocation3 + $0x8] sm:$0x7]
      %v3644 = vld [vmem:[#allocation3 + $0xc] sm:$0x7]
      %v3645 = vld [vmem:[#allocation3 + $0x10] sm:$0x7]
      %v3646 = vld [vmem:[#allocation3 + $0x14] sm:$0x7]
      %v3651 = vunpack.c.l.b16 %v3641
      %v3652 = vunpack.c.l.b16 %v3642
      %v3653 = vunpack.c.l.b16 %v3643
      %v3654 = vunpack.c.l.b16 %v3644
      %v3655 = vpack.c.b16 %v3651, %v3651
      %v3656 = vpack.c.b16 %v3652, %v3652
      %v3657 = vpack.c.b16 %v3653, %v3653
      %v3658 = vpack.c.b16 %v3654, %v3654
      %v3660 = vshrl.u32 %v3655, 16
      %v3662 = vshll.u32 %v3655, 16
      %v3664 = vrot.slane %v3662, 1
      %v3665 = vor.u32 %v3660, %v3664
      %v3667 = vshrl.u32 %v3656, 16
      %v3669 = vshll.u32 %v3656, 16
      %v3671 = vrot.slane %v3669, 1
      %v3672 = vor.u32 %v3667, %v3671
      %v3674 = vshrl.u32 %v3657, 16
      %v3676 = vshll.u32 %v3657, 16
      %v3678 = vrot.slane %v3676, 1
      %v3679 = vor.u32 %v3674, %v3678
      %v3681 = vshrl.u32 %v3658, 16
      %v3683 = vshll.u32 %v3658, 16
      %v3685 = vrot.slane %v3683, 1
      %v3686 = vor.u32 %v3681, %v3685
      %v3687 = vrot.slane %v3655, 1
      %v3688 = vrot.slane %v3656, 1
      %v3689 = vrot.slane %v3657, 1
      %v3690 = vrot.slane %v3658, 1
      %v3692 = vunpack.c.l.b16 %v3645
      %v3693 = vpack.c.b16 %v3692, %v3692
      %v3695 = vshrl.u32 %v3693, 16
      %v3697 = vshll.u32 %v3693, 16
      %v3699 = vrot.slane %v3697, 1
      %v3700 = vor.u32 %v3695, %v3699
      %v3701 = vrot.slane %v3693, 1
      %v3703 = vunpack.c.l.b16 %v3646
      %v3704 = vpack.c.b16 %v3703, %v3703
      %v3706 = vshrl.u32 %v3704, 16
      %v3708 = vshll.u32 %v3704, 16
      %v3710 = vrot.slane %v3708, 1
      %v3711 = vor.u32 %v3706, %v3710
      %v3712 = vrot.slane %v3704, 1
      %v3713 = vcombine.low %v3641, %v3665
      %v3714 = vcombine.low %v3687, %v3642
      %v3716 = vunpack.c.l.s4 1983009808
      %v3717 = vunpack.c.0.s8 %v3716
      %v3718 = vlaneseq
      %v3719 = vshrl.u32 %v3718, 7
      %v3720 = vsub.s32 %v3717, %v3719
      %v3721 = vrot.slane %v3713, %v3720
      %v3723 = vunpack.c.l.s4 1983009808
      %v3724 = vunpack.c.0.s8 %v3723
      %v3725 = vlaneseq
      %v3726 = vshrl.u32 %v3725, 7
      %v3727 = vsub.s32 %v3724, %v3726
      %v3728 = vrot.slane %v3714, %v3727
      %v3729 = vcombine.low %v3721, %v3728
      %v3730 = vcombine.low %v3672, %v3688
      %v3731 = vcombine.low %v3643, %v3679
      %v3733 = vunpack.c.l.s4 1983009808
      %v3734 = vunpack.c.0.s8 %v3733
      %v3735 = vlaneseq
      %v3736 = vshrl.u32 %v3735, 7
      %v3737 = vsub.s32 %v3734, %v3736
      %v3738 = vrot.slane %v3730, %v3737
      %v3740 = vunpack.c.l.s4 1983009808
      %v3741 = vunpack.c.0.s8 %v3740
      %v3742 = vlaneseq
      %v3743 = vshrl.u32 %v3742, 7
      %v3744 = vsub.s32 %v3741, %v3743
      %v3745 = vrot.slane %v3731, %v3744
      %v3746 = vcombine.low %v3738, %v3745
      %v3748 = vunpack.c.l.s4 1983009808
      %v3749 = vunpack.c.0.s8 %v3748
      %v3750 = vlaneseq
      %v3751 = vshrl.u32 %v3750, 7
      %v3752 = vsub.s32 %v3749, %v3751
      %v3753 = vrot.slane %v3689, %v3752
      %v3754 = vcombine.low %v3642, %v3672
      %v3755 = vcombine.low %v3688, %v3643
      %v3757 = vunpack.c.l.s4 1983009808
      %v3758 = vunpack.c.0.s8 %v3757
      %v3759 = vlaneseq
      %v3760 = vshrl.u32 %v3759, 7
      %v3761 = vsub.s32 %v3758, %v3760
      %v3762 = vrot.slane %v3754, %v3761
      %v3764 = vunpack.c.l.s4 1983009808
      %v3765 = vunpack.c.0.s8 %v3764
      %v3766 = vlaneseq
      %v3767 = vshrl.u32 %v3766, 7
      %v3768 = vsub.s32 %v3765, %v3767
      %v3769 = vrot.slane %v3755, %v3768
      %v3770 = vcombine.low %v3762, %v3769
      %v3771 = vcombine.low %v3679, %v3689
      %v3772 = vcombine.low %v3644, %v3686
      %v3774 = vunpack.c.l.s4 1983009808
      %v3775 = vunpack.c.0.s8 %v3774
      %v3776 = vlaneseq
      %v3777 = vshrl.u32 %v3776, 7
      %v3778 = vsub.s32 %v3775, %v3777
      %v3779 = vrot.slane %v3771, %v3778
      %v3781 = vunpack.c.l.s4 1983009808
      %v3782 = vunpack.c.0.s8 %v3781
      %v3783 = vlaneseq
      %v3784 = vshrl.u32 %v3783, 7
      %v3785 = vsub.s32 %v3782, %v3784
      %v3786 = vrot.slane %v3772, %v3785
      %v3787 = vcombine.low %v3779, %v3786
      %v3789 = vunpack.c.l.s4 1983009808
      %v3790 = vunpack.c.0.s8 %v3789
      %v3791 = vlaneseq
      %v3792 = vshrl.u32 %v3791, 7
      %v3793 = vsub.s32 %v3790, %v3792
      %v3794 = vrot.slane %v3690, %v3793
      %v3795 = vcombine.low %v3689, %v3644
      %v3797 = vunpack.c.l.s4 1983009808
      %v3798 = vunpack.c.0.s8 %v3797
      %v3799 = vlaneseq
      %v3800 = vshrl.u32 %v3799, 7
      %v3801 = vsub.s32 %v3798, %v3800
      %v3802 = vrot.slane %v3795, %v3801
      %v3803 = vcombine.low %v3745, %v3802
      %v3804 = vcombine.low %v3686, %v3690
      %v3805 = vcombine.low %v3645, %v3700
      %v3807 = vunpack.c.l.s4 1983009808
      %v3808 = vunpack.c.0.s8 %v3807
      %v3809 = vlaneseq
      %v3810 = vshrl.u32 %v3809, 7
      %v3811 = vsub.s32 %v3808, %v3810
      %v3812 = vrot.slane %v3804, %v3811
      %v3814 = vunpack.c.l.s4 1983009808
      %v3815 = vunpack.c.0.s8 %v3814
      %v3816 = vlaneseq
      %v3817 = vshrl.u32 %v3816, 7
      %v3818 = vsub.s32 %v3815, %v3817
      %v3819 = vrot.slane %v3805, %v3818
      %v3820 = vcombine.low %v3812, %v3819
      %v3822 = vunpack.c.l.s4 1983009808
      %v3823 = vunpack.c.0.s8 %v3822
      %v3824 = vlaneseq
      %v3825 = vshrl.u32 %v3824, 7
      %v3826 = vsub.s32 %v3823, %v3825
      %v3827 = vrot.slane %v3701, %v3826
      %v3828 = vcombine.low %v3690, %v3645
      %v3830 = vunpack.c.l.s4 1983009808
      %v3831 = vunpack.c.0.s8 %v3830
      %v3832 = vlaneseq
      %v3833 = vshrl.u32 %v3832, 7
      %v3834 = vsub.s32 %v3831, %v3833
      %v3835 = vrot.slane %v3828, %v3834
      %v3836 = vcombine.low %v3786, %v3835
      %v3837 = vcombine.low %v3700, %v3701
      %v3838 = vcombine.low %v3646, %v3711
      %v3840 = vunpack.c.l.s4 1983009808
      %v3841 = vunpack.c.0.s8 %v3840
      %v3842 = vlaneseq
      %v3843 = vshrl.u32 %v3842, 7
      %v3844 = vsub.s32 %v3841, %v3843
      %v3845 = vrot.slane %v3837, %v3844
      %v3847 = vunpack.c.l.s4 1983009808
      %v3848 = vunpack.c.0.s8 %v3847
      %v3849 = vlaneseq
      %v3850 = vshrl.u32 %v3849, 7
      %v3851 = vsub.s32 %v3848, %v3850
      %v3852 = vrot.slane %v3838, %v3851
      %v3853 = vcombine.low %v3845, %v3852
      %v3855 = vunpack.c.l.s4 1983009808
      %v3856 = vunpack.c.0.s8 %v3855
      %v3857 = vlaneseq
      %v3858 = vshrl.u32 %v3857, 7
      %v3859 = vsub.s32 %v3856, %v3858
      %v3860 = vrot.slane %v3712, %v3859
      %v3861 = vld [vmem:[%s3] sm:$0xff]
      %v3862 = vld [vmem:[%s3 + $0x8] sm:$0xff]
      %v3863 = vld [vmem:[%s3 + $0x10] sm:$0xff]
      %v3864 = vld [vmem:[%s3 + $0x18] sm:$0xff]
      %v3865 = vld [vmem:[%s3 + $0x20] sm:$0xff]
      %v3866 = vld [vmem:[%s3 + $0x28] sm:$0xff]
      %v3867 = vld [vmem:[%s3 + $0x30] sm:$0xff]
      %v3868 = vld [vmem:[%s3 + $0x38] sm:$0xff]
      %v3869 = vld [vmem:[%s3 + $0x40] sm:$0xff]
      %v3870 = vld [vmem:[%s3 + $0x48] sm:$0xff]
      %v3871 = vld [vmem:[%s3 + $0x50] sm:$0xff]
      %v3872 = vld [vmem:[%s3 + $0x58] sm:$0xff]
      %v3873 = vld [vmem:[%s3 + $0x60] sm:$0xff]
      %v3874 = vld [vmem:[%s3 + $0x68] sm:$0xff]
      %v3875 = vld [vmem:[%s3 + $0x70] sm:$0xff]
      %v3876 = vld [vmem:[%s3 + $0x78] sm:$0xff]
      %v3877 = vld [vmem:[%s3 + $0x80] sm:$0xff]
      %v3878 = vld [vmem:[%s3 + $0x88] sm:$0xff]
      %v3879 = vld [vmem:[%s3 + $0x90] sm:$0xff]
      %v3880 = vld [vmem:[%s3 + $0x98] sm:$0xff]
      %v3881 = vld [vmem:[%s3 + $0xa0] sm:$0xff]
      %v3882 = vld [vmem:[%s3 + $0xa8] sm:$0xff]
      %v3883 = vld [vmem:[%s3 + $0xb0] sm:$0xff]
      %v3884 = vld [vmem:[%s3 + $0xb8] sm:$0xff]
      %v3885 = vld [vmem:[%s3 + $0xc0] sm:$0xff]
      %v3886 = vld [vmem:[%s3 + $0xc8] sm:$0xff]
      %v3887 = vld [vmem:[%s3 + $0xd0] sm:$0xff]
      %v3888 = vld [vmem:[%s3 + $0xd8] sm:$0xff]
      %v3889 = vld [vmem:[%s3 + $0xe0] sm:$0xff]
      %v3890 = vld [vmem:[%s3 + $0xe8] sm:$0xff]
      %v3891 = vld [vmem:[%s3 + $0xf0] sm:$0xff]
      %v3892 = vld [vmem:[%s3 + $0xf8] sm:$0xff]
      %v3893 = vld [vmem:[%s3 + $0x100] sm:$0xff]
      %v3894 = vld [vmem:[%s3 + $0x108] sm:$0xff]
      %v3895 = vld [vmem:[%s3 + $0x110] sm:$0xff]
      %v3896 = vld [vmem:[%s3 + $0x118] sm:$0xff]
      %v3897 = vld [vmem:[%s3 + $0x120] sm:$0xff]
      %v3898 = vld [vmem:[%s3 + $0x128] sm:$0xff]
      %v3899 = vld [vmem:[%s3 + $0x130] sm:$0xff]
      %v3900 = vld [vmem:[%s3 + $0x138] sm:$0xff]
      %v3901 = vld [vmem:[%s3 + $0x140] sm:$0xff]
      %v3902 = vld [vmem:[%s3 + $0x148] sm:$0xff]
      %v3903 = vld [vmem:[%s3 + $0x150] sm:$0xff]
      %v3904 = vld [vmem:[%s3 + $0x158] sm:$0xff]
      %v3905 = vld [vmem:[%s3 + $0x160] sm:$0xff]
      %v3906 = vld [vmem:[%s3 + $0x168] sm:$0xff]
      %v3907 = vld [vmem:[%s3 + $0x170] sm:$0xff]
      %v3908 = vld [vmem:[%s3 + $0x178] sm:$0xff]
      %v3909 = vld [vmem:[%s3 + $0x180] sm:$0xff]
      %v3910 = vld [vmem:[%s3 + $0x188] sm:$0xff]
      %v3911 = vld [vmem:[%s3 + $0x190] sm:$0xff]
      %v3912 = vld [vmem:[%s3 + $0x198] sm:$0xff]
      %v3913 = vld [vmem:[%s3 + $0x1a0] sm:$0xff]
      %v3914 = vld [vmem:[%s3 + $0x1a8] sm:$0xff]
      %v3915 = vld [vmem:[%s3 + $0x1b0] sm:$0xff]
      %v3916 = vld [vmem:[%s3 + $0x1b8] sm:$0xff]
      %v3917 = vld [vmem:[%s3 + $0x1c0] sm:$0xff]
      %v3918 = vld [vmem:[%s3 + $0x1c8] sm:$0xff]
      %v3919 = vld [vmem:[%s3 + $0x1d0] sm:$0xff]
      %v3920 = vld [vmem:[%s3 + $0x1d8] sm:$0xff]
      %v3921 = vld [vmem:[%s3 + $0x1e0] sm:$0xff]
      %v3922 = vld [vmem:[%s3 + $0x1e8] sm:$0xff]
      %v3923 = vld [vmem:[%s3 + $0x1f0] sm:$0xff]
      %v3924 = vld [vmem:[%s3 + $0x1f8] sm:$0xff]
      %v3925 = vld [vmem:[%s3 + $0x200] sm:$0xff]
      %v3926 = vld [vmem:[%s3 + $0x208] sm:$0xff]
      %v3927 = vld [vmem:[%s3 + $0x210] sm:$0xff]
      %v3928 = vld [vmem:[%s3 + $0x218] sm:$0xff]
      %v3929 = vld [vmem:[%s3 + $0x220] sm:$0xff]
      %v3930 = vld [vmem:[%s3 + $0x228] sm:$0xff]
      %v3931 = vld [vmem:[%s3 + $0x230] sm:$0xff]
      %v3932 = vld [vmem:[%s3 + $0x238] sm:$0xff]
      %v3933 = vld [vmem:[%s3 + $0x240] sm:$0xff]
      %v3934 = vld [vmem:[%s3 + $0x248] sm:$0xff]
      %v3935 = vld [vmem:[%s3 + $0x250] sm:$0xff]
      %v3936 = vld [vmem:[%s3 + $0x258] sm:$0xff]
      %v3937 = vld [vmem:[%s3 + $0x260] sm:$0xff]
      %v3938 = vld [vmem:[%s3 + $0x268] sm:$0xff]
      %v3939 = vld [vmem:[%s3 + $0x270] sm:$0xff]
      %v3940 = vld [vmem:[%s3 + $0x278] sm:$0xff]
      %v3941 = vld [vmem:[%s3 + $0x280] sm:$0xff]
      %v3942 = vld [vmem:[%s3 + $0x288] sm:$0xff]
      %v3943 = vld [vmem:[%s3 + $0x290] sm:$0xff]
      %v3944 = vld [vmem:[%s3 + $0x298] sm:$0xff]
      %v3945 = vld [vmem:[%s3 + $0x2a0] sm:$0xff]
      %v3946 = vld [vmem:[%s3 + $0x2a8] sm:$0xff]
      %v3947 = vld [vmem:[%s3 + $0x2b0] sm:$0xff]
      %v3948 = vld [vmem:[%s3 + $0x2b8] sm:$0xff]
      %v3949 = vld [vmem:[%s3 + $0x2c0] sm:$0xff]
      %v3950 = vld [vmem:[%s3 + $0x2c8] sm:$0xff]
      %v3951 = vld [vmem:[%s3 + $0x2d0] sm:$0xff]
      %v3952 = vld [vmem:[%s3 + $0x2d8] sm:$0xff]
      %v3953 = vld [vmem:[%s3 + $0x2e0] sm:$0xff]
      %v3954 = vld [vmem:[%s3 + $0x2e8] sm:$0xff]
      %v3955 = vld [vmem:[%s3 + $0x2f0] sm:$0xff]
      %v3956 = vld [vmem:[%s3 + $0x2f8] sm:$0xff]
      %v3957 = vld [vmem:[%s3 + $0x300] sm:$0xff]
      %v3958 = vld [vmem:[%s3 + $0x308] sm:$0xff]
      %v3959 = vld [vmem:[%s3 + $0x310] sm:$0xff]
      %v3960 = vld [vmem:[%s3 + $0x318] sm:$0xff]
      %v3961 = vld [vmem:[%s3 + $0x320] sm:$0xff]
      %v3962 = vld [vmem:[%s3 + $0x328] sm:$0xff]
      %v3963 = vld [vmem:[%s3 + $0x330] sm:$0xff]
      %v3964 = vld [vmem:[%s3 + $0x338] sm:$0xff]
      %v3965 = vld [vmem:[%s3 + $0x340] sm:$0xff]
      %v3966 = vld [vmem:[%s3 + $0x348] sm:$0xff]
      %v3967 = vld [vmem:[%s3 + $0x350] sm:$0xff]
      %v3968 = vld [vmem:[%s3 + $0x358] sm:$0xff]
      %v3969 = vld [vmem:[%s3 + $0x360] sm:$0xff]
      %v3970 = vld [vmem:[%s3 + $0x368] sm:$0xff]
      %v3971 = vld [vmem:[%s3 + $0x370] sm:$0xff]
      %v3972 = vld [vmem:[%s3 + $0x378] sm:$0xff]
      %v3973 = vld [vmem:[%s3 + $0x380] sm:$0xff]
      %v3974 = vld [vmem:[%s3 + $0x388] sm:$0xff]
      %v3975 = vld [vmem:[%s3 + $0x390] sm:$0xff]
      %v3976 = vld [vmem:[%s3 + $0x398] sm:$0xff]
      %v3977 = vld [vmem:[%s3 + $0x3a0] sm:$0xff]
      %v3978 = vld [vmem:[%s3 + $0x3a8] sm:$0xff]
      %v3979 = vld [vmem:[%s3 + $0x3b0] sm:$0xff]
      %v3980 = vld [vmem:[%s3 + $0x3b8] sm:$0xff]
      %v3981 = vld [vmem:[%s3 + $0x3c0] sm:$0xff]
      %v3982 = vld [vmem:[%s3 + $0x3c8] sm:$0xff]
      %v3983 = vld [vmem:[%s3 + $0x3d0] sm:$0xff]
      %v3984 = vld [vmem:[%s3 + $0x3d8] sm:$0xff]
      %v3985 = vld [vmem:[%s3 + $0x3e0] sm:$0xff]
      %v3986 = vld [vmem:[%s3 + $0x3e8] sm:$0xff]
      %v3987 = vld [vmem:[%s3 + $0x3f0] sm:$0xff]
      %v3988 = vld [vmem:[%s3 + $0x3f8] sm:$0xff]
      %v3989 = vld [vmem:[%s3 + $0x400] sm:$0xff]
      %v3990 = vld [vmem:[%s3 + $0x408] sm:$0xff]
      %v3991 = vld [vmem:[%s3 + $0x410] sm:$0xff]
      %v3992 = vld [vmem:[%s3 + $0x418] sm:$0xff]
      %v3993 = vld [vmem:[%s3 + $0x420] sm:$0xff]
      %v3994 = vld [vmem:[%s3 + $0x428] sm:$0xff]
      %v3995 = vld [vmem:[%s3 + $0x430] sm:$0xff]
      %v3996 = vld [vmem:[%s3 + $0x438] sm:$0xff]
      %v3997 = vld [vmem:[%s3 + $0x440] sm:$0xff]
      %v3998 = vld [vmem:[%s3 + $0x448] sm:$0xff]
      %v3999 = vld [vmem:[%s3 + $0x450] sm:$0xff]
      %v4000 = vld [vmem:[%s3 + $0x458] sm:$0xff]
      %v4001 = vld [vmem:[%s3 + $0x460] sm:$0xff]
      %v4002 = vld [vmem:[%s3 + $0x468] sm:$0xff]
      %v4003 = vld [vmem:[%s3 + $0x470] sm:$0xff]
      %v4004 = vld [vmem:[%s3 + $0x478] sm:$0xff]
      %v4005 = vld [vmem:[%s7] sm:$0x3]
      %v4007 = vlaneseq
      %v4008 = vshrl.u32 %v4007, 7
      %v4009 = vsub.s32 0, %v4008
      %v4010 = vrot.slane %v4005, %v4009
      %v4011 = vlaneseq
      %v4012 = vshrl.u32 %v4011, 7
      %v4013 = vsub.s32 1, %v4012
      %v4014 = vrot.slane %v4005, %v4013
      %v4017 = vcombine.low %v3729, %v3770
      %v4018 = vcombine.high %v3729, %v3770
      %v4019 = vcombine.low %v3803, %v3836
      %v4020 = vcombine.high %v3803, %v3836
      %v4022 = vunpack.c.l.s4 1983009808
      %v4023 = vunpack.c.0.s8 %v4022
      %v4024 = vlaneseq
      %v4025 = vshrl.u32 %v4024, 7
      %v4026 = vsub.s32 %v4023, %v4025
      %v4027 = vrot.slane %v4017, %v4026
      %v4029 = vunpack.c.l.s4 1983009808
      %v4030 = vunpack.c.0.s8 %v4029
      %v4031 = vlaneseq
      %v4032 = vshrl.u32 %v4031, 7
      %v4033 = vsub.s32 %v4030, %v4032
      %v4034 = vrot.slane %v4018, %v4033
      %v4036 = vunpack.c.l.s4 1983009808
      %v4037 = vunpack.c.0.s8 %v4036
      %v4038 = vlaneseq
      %v4039 = vshrl.u32 %v4038, 7
      %v4040 = vsub.s32 %v4037, %v4039
      %v4041 = vrot.slane %v4019, %v4040
      %v4043 = vunpack.c.l.s4 1983009808
      %v4044 = vunpack.c.0.s8 %v4043
      %v4045 = vlaneseq
      %v4046 = vshrl.u32 %v4045, 7
      %v4047 = vsub.s32 %v4044, %v4046
      %v4048 = vrot.slane %v4020, %v4047
      %v4049 = vcombine.low %v4027, %v4041
      %v4050 = vcombine.high %v4027, %v4041
      %v4051 = vcombine.low %v4034, %v4048
      %v4052 = vcombine.high %v4034, %v4048
      %v4053 = vcombine.low %v3746, %v3787
      %v4054 = vcombine.high %v3746, %v3787
      %v4055 = vcombine.low %v3820, %v3853
      %v4056 = vcombine.high %v3820, %v3853
      %v4058 = vunpack.c.l.s4 1983009808
      %v4059 = vunpack.c.0.s8 %v4058
      %v4060 = vlaneseq
      %v4061 = vshrl.u32 %v4060, 7
      %v4062 = vsub.s32 %v4059, %v4061
      %v4063 = vrot.slane %v4053, %v4062
      %v4065 = vunpack.c.l.s4 1983009808
      %v4066 = vunpack.c.0.s8 %v4065
      %v4067 = vlaneseq
      %v4068 = vshrl.u32 %v4067, 7
      %v4069 = vsub.s32 %v4066, %v4068
      %v4070 = vrot.slane %v4054, %v4069
      %v4072 = vunpack.c.l.s4 1983009808
      %v4073 = vunpack.c.0.s8 %v4072
      %v4074 = vlaneseq
      %v4075 = vshrl.u32 %v4074, 7
      %v4076 = vsub.s32 %v4073, %v4075
      %v4077 = vrot.slane %v4055, %v4076
      %v4079 = vunpack.c.l.s4 1983009808
      %v4080 = vunpack.c.0.s8 %v4079
      %v4081 = vlaneseq
      %v4082 = vshrl.u32 %v4081, 7
      %v4083 = vsub.s32 %v4080, %v4082
      %v4084 = vrot.slane %v4056, %v4083
      %v4085 = vcombine.low %v4063, %v4077
      %v4086 = vcombine.high %v4063, %v4077
      %v4087 = vcombine.low %v4070, %v4084
      %v4088 = vcombine.high %v4070, %v4084
      %v4089 = vcombine.low %v3753, %v3794
      %v4090 = vcombine.low %v3827, %v3860
      %v4092 = vunpack.c.l.s4 1983009808
      %v4093 = vunpack.c.0.s8 %v4092
      %v4094 = vlaneseq
      %v4095 = vshrl.u32 %v4094, 7
      %v4096 = vsub.s32 %v4093, %v4095
      %v4097 = vrot.slane %v4089, %v4096
      %v4099 = vunpack.c.l.s4 1983009808
      %v4100 = vunpack.c.0.s8 %v4099
      %v4101 = vlaneseq
      %v4102 = vshrl.u32 %v4101, 7
      %v4103 = vsub.s32 %v4100, %v4102
      %v4104 = vrot.slane %v4090, %v4103
      %v4105 = vcombine.low %v4097, %v4104
      %v4259 = vunpack.c.l.b16 %v3861
      %v4260 = vunpack.c.h.b16 %v3861
      %v4261 = vunpack.c.l.b16 %v3862
      %v4262 = vunpack.c.h.b16 %v3862
      %v4263 = vunpack.c.l.b16 %v3863
      %v4264 = vunpack.c.h.b16 %v3863
      %v4265 = vunpack.c.l.b16 %v3864
      %v4266 = vunpack.c.h.b16 %v3864
      %v4267 = vunpack.c.l.b16 %v3865
      %v4268 = vunpack.c.h.b16 %v3865
      %v4269 = vunpack.c.l.b16 %v3866
      %v4270 = vunpack.c.h.b16 %v3866
      %v4271 = vunpack.c.l.b16 %v3867
      %v4272 = vunpack.c.h.b16 %v3867
      %v4273 = vunpack.c.l.b16 %v3868
      %v4274 = vunpack.c.h.b16 %v3868
      %v4275 = vunpack.c.l.b16 %v3869
      %v4276 = vunpack.c.h.b16 %v3869
      %v4277 = vunpack.c.l.b16 %v3870
      %v4278 = vunpack.c.h.b16 %v3870
      %v4279 = vunpack.c.l.b16 %v3871
      %v4280 = vunpack.c.h.b16 %v3871
      %v4281 = vunpack.c.l.b16 %v3872
      %v4282 = vunpack.c.h.b16 %v3872
      %v4283 = vunpack.c.l.b16 %v3873
      %v4284 = vunpack.c.h.b16 %v3873
      %v4285 = vunpack.c.l.b16 %v3874
      %v4286 = vunpack.c.h.b16 %v3874
      %v4287 = vunpack.c.l.b16 %v3875
      %v4288 = vunpack.c.h.b16 %v3875
      %v4289 = vunpack.c.l.b16 %v3876
      %v4290 = vunpack.c.h.b16 %v3876
      %v4291 = vunpack.c.l.b16 %v3877
      %v4292 = vunpack.c.h.b16 %v3877
      %v4293 = vunpack.c.l.b16 %v3878
      %v4294 = vunpack.c.h.b16 %v3878
      %v4295 = vunpack.c.l.b16 %v3879
      %v4296 = vunpack.c.h.b16 %v3879
      %v4297 = vunpack.c.l.b16 %v3880
      %v4298 = vunpack.c.h.b16 %v3880
      %v4299 = vunpack.c.l.b16 %v3881
      %v4300 = vunpack.c.h.b16 %v3881
      %v4301 = vunpack.c.l.b16 %v3882
      %v4302 = vunpack.c.h.b16 %v3882
      %v4303 = vunpack.c.l.b16 %v3883
      %v4304 = vunpack.c.h.b16 %v3883
      %v4305 = vunpack.c.l.b16 %v3884
      %v4306 = vunpack.c.h.b16 %v3884
      %v4307 = vunpack.c.l.b16 %v3885
      %v4308 = vunpack.c.h.b16 %v3885
      %v4309 = vunpack.c.l.b16 %v3886
      %v4310 = vunpack.c.h.b16 %v3886
      %v4311 = vunpack.c.l.b16 %v3887
      %v4312 = vunpack.c.h.b16 %v3887
      %v4313 = vunpack.c.l.b16 %v3888
      %v4314 = vunpack.c.h.b16 %v3888
      %v4315 = vunpack.c.l.b16 %v3889
      %v4316 = vunpack.c.h.b16 %v3889
      %v4317 = vunpack.c.l.b16 %v3890
      %v4318 = vunpack.c.h.b16 %v3890
      %v4319 = vunpack.c.l.b16 %v3891
      %v4320 = vunpack.c.h.b16 %v3891
      %v4321 = vunpack.c.l.b16 %v3892
      %v4322 = vunpack.c.h.b16 %v3892
      %v4323 = vunpack.c.l.b16 %v3893
      %v4324 = vunpack.c.h.b16 %v3893
      %v4325 = vunpack.c.l.b16 %v3894
      %v4326 = vunpack.c.h.b16 %v3894
      %v4327 = vunpack.c.l.b16 %v3895
      %v4328 = vunpack.c.h.b16 %v3895
      %v4329 = vunpack.c.l.b16 %v3896
      %v4330 = vunpack.c.h.b16 %v3896
      %v4331 = vunpack.c.l.b16 %v3897
      %v4332 = vunpack.c.h.b16 %v3897
      %v4333 = vunpack.c.l.b16 %v3898
      %v4334 = vunpack.c.h.b16 %v3898
      %v4335 = vunpack.c.l.b16 %v3899
      %v4336 = vunpack.c.h.b16 %v3899
      %v4337 = vunpack.c.l.b16 %v3900
      %v4338 = vunpack.c.h.b16 %v3900
      %v4339 = vunpack.c.l.b16 %v3901
      %v4340 = vunpack.c.h.b16 %v3901
      %v4341 = vunpack.c.l.b16 %v3902
      %v4342 = vunpack.c.h.b16 %v3902
      %v4343 = vunpack.c.l.b16 %v3903
      %v4344 = vunpack.c.h.b16 %v3903
      %v4345 = vunpack.c.l.b16 %v3904
      %v4346 = vunpack.c.h.b16 %v3904
      %v4347 = vunpack.c.l.b16 %v3905
      %v4348 = vunpack.c.h.b16 %v3905
      %v4349 = vunpack.c.l.b16 %v3906
      %v4350 = vunpack.c.h.b16 %v3906
      %v4351 = vunpack.c.l.b16 %v3907
      %v4352 = vunpack.c.h.b16 %v3907
      %v4353 = vunpack.c.l.b16 %v3908
      %v4354 = vunpack.c.h.b16 %v3908
      %v4355 = vunpack.c.l.b16 %v3909
      %v4356 = vunpack.c.h.b16 %v3909
      %v4357 = vunpack.c.l.b16 %v3910
      %v4358 = vunpack.c.h.b16 %v3910
      %v4359 = vunpack.c.l.b16 %v3911
      %v4360 = vunpack.c.h.b16 %v3911
      %v4361 = vunpack.c.l.b16 %v3912
      %v4362 = vunpack.c.h.b16 %v3912
      %v4363 = vunpack.c.l.b16 %v3913
      %v4364 = vunpack.c.h.b16 %v3913
      %v4365 = vunpack.c.l.b16 %v3914
      %v4366 = vunpack.c.h.b16 %v3914
      %v4367 = vunpack.c.l.b16 %v3915
      %v4368 = vunpack.c.h.b16 %v3915
      %v4369 = vunpack.c.l.b16 %v3916
      %v4370 = vunpack.c.h.b16 %v3916
      %v4371 = vunpack.c.l.b16 %v3917
      %v4372 = vunpack.c.h.b16 %v3917
      %v4373 = vunpack.c.l.b16 %v3918
      %v4374 = vunpack.c.h.b16 %v3918
      %v4375 = vunpack.c.l.b16 %v3919
      %v4376 = vunpack.c.h.b16 %v3919
      %v4377 = vunpack.c.l.b16 %v3920
      %v4378 = vunpack.c.h.b16 %v3920
      %v4379 = vunpack.c.l.b16 %v3921
      %v4380 = vunpack.c.h.b16 %v3921
      %v4381 = vunpack.c.l.b16 %v3922
      %v4382 = vunpack.c.h.b16 %v3922
      %v4383 = vunpack.c.l.b16 %v3923
      %v4384 = vunpack.c.h.b16 %v3923
      %v4385 = vunpack.c.l.b16 %v3924
      %v4386 = vunpack.c.h.b16 %v3924
      %v4387 = vunpack.c.l.b16 %v3925
      %v4388 = vunpack.c.h.b16 %v3925
      %v4389 = vunpack.c.l.b16 %v3926
      %v4390 = vunpack.c.h.b16 %v3926
      %v4391 = vunpack.c.l.b16 %v3927
      %v4392 = vunpack.c.h.b16 %v3927
      %v4393 = vunpack.c.l.b16 %v3928
      %v4394 = vunpack.c.h.b16 %v3928
      %v4395 = vunpack.c.l.b16 %v3929
      %v4396 = vunpack.c.h.b16 %v3929
      %v4397 = vunpack.c.l.b16 %v3930
      %v4398 = vunpack.c.h.b16 %v3930
      %v4399 = vunpack.c.l.b16 %v3931
      %v4400 = vunpack.c.h.b16 %v3931
      %v4401 = vunpack.c.l.b16 %v3932
      %v4402 = vunpack.c.h.b16 %v3932
      %v4403 = vunpack.c.l.b16 %v3933
      %v4404 = vunpack.c.h.b16 %v3933
      %v4405 = vunpack.c.l.b16 %v3934
      %v4406 = vunpack.c.h.b16 %v3934
      %v4407 = vunpack.c.l.b16 %v3935
      %v4408 = vunpack.c.h.b16 %v3935
      %v4409 = vunpack.c.l.b16 %v3936
      %v4410 = vunpack.c.h.b16 %v3936
      %v4411 = vunpack.c.l.b16 %v3937
      %v4412 = vunpack.c.h.b16 %v3937
      %v4413 = vunpack.c.l.b16 %v3938
      %v4414 = vunpack.c.h.b16 %v3938
      %v4415 = vunpack.c.l.b16 %v3939
      %v4416 = vunpack.c.h.b16 %v3939
      %v4417 = vunpack.c.l.b16 %v3940
      %v4418 = vunpack.c.h.b16 %v3940
      %v4419 = vunpack.c.l.b16 %v3941
      %v4420 = vunpack.c.h.b16 %v3941
      %v4421 = vunpack.c.l.b16 %v3942
      %v4422 = vunpack.c.h.b16 %v3942
      %v4423 = vunpack.c.l.b16 %v3943
      %v4424 = vunpack.c.h.b16 %v3943
      %v4425 = vunpack.c.l.b16 %v3944
      %v4426 = vunpack.c.h.b16 %v3944
      %v4427 = vunpack.c.l.b16 %v3945
      %v4428 = vunpack.c.h.b16 %v3945
      %v4429 = vunpack.c.l.b16 %v3946
      %v4430 = vunpack.c.h.b16 %v3946
      %v4431 = vunpack.c.l.b16 %v3947
      %v4432 = vunpack.c.h.b16 %v3947
      %v4433 = vunpack.c.l.b16 %v3948
      %v4434 = vunpack.c.h.b16 %v3948
      %v4435 = vunpack.c.l.b16 %v3949
      %v4436 = vunpack.c.h.b16 %v3949
      %v4437 = vunpack.c.l.b16 %v3950
      %v4438 = vunpack.c.h.b16 %v3950
      %v4439 = vunpack.c.l.b16 %v3951
      %v4440 = vunpack.c.h.b16 %v3951
      %v4441 = vunpack.c.l.b16 %v3952
      %v4442 = vunpack.c.h.b16 %v3952
      %v4443 = vunpack.c.l.b16 %v3953
      %v4444 = vunpack.c.h.b16 %v3953
      %v4445 = vunpack.c.l.b16 %v3954
      %v4446 = vunpack.c.h.b16 %v3954
      %v4447 = vunpack.c.l.b16 %v3955
      %v4448 = vunpack.c.h.b16 %v3955
      %v4449 = vunpack.c.l.b16 %v3956
      %v4450 = vunpack.c.h.b16 %v3956
      %v4451 = vunpack.c.l.b16 %v3957
      %v4452 = vunpack.c.h.b16 %v3957
      %v4453 = vunpack.c.l.b16 %v3958
      %v4454 = vunpack.c.h.b16 %v3958
      %v4455 = vunpack.c.l.b16 %v3959
      %v4456 = vunpack.c.h.b16 %v3959
      %v4457 = vunpack.c.l.b16 %v3960
      %v4458 = vunpack.c.h.b16 %v3960
      %v4459 = vunpack.c.l.b16 %v3961
      %v4460 = vunpack.c.h.b16 %v3961
      %v4461 = vunpack.c.l.b16 %v3962
      %v4462 = vunpack.c.h.b16 %v3962
      %v4463 = vunpack.c.l.b16 %v3963
      %v4464 = vunpack.c.h.b16 %v3963
      %v4465 = vunpack.c.l.b16 %v3964
      %v4466 = vunpack.c.h.b16 %v3964
      %v4467 = vunpack.c.l.b16 %v3965
      %v4468 = vunpack.c.h.b16 %v3965
      %v4469 = vunpack.c.l.b16 %v3966
      %v4470 = vunpack.c.h.b16 %v3966
      %v4471 = vunpack.c.l.b16 %v3967
      %v4472 = vunpack.c.h.b16 %v3967
      %v4473 = vunpack.c.l.b16 %v3968
      %v4474 = vunpack.c.h.b16 %v3968
      %v4475 = vunpack.c.l.b16 %v3969
      %v4476 = vunpack.c.h.b16 %v3969
      %v4477 = vunpack.c.l.b16 %v3970
      %v4478 = vunpack.c.h.b16 %v3970
      %v4479 = vunpack.c.l.b16 %v3971
      %v4480 = vunpack.c.h.b16 %v3971
      %v4481 = vunpack.c.l.b16 %v3972
      %v4482 = vunpack.c.h.b16 %v3972
      %v4483 = vunpack.c.l.b16 %v3973
      %v4484 = vunpack.c.h.b16 %v3973
      %v4485 = vunpack.c.l.b16 %v3974
      %v4486 = vunpack.c.h.b16 %v3974
      %v4487 = vunpack.c.l.b16 %v3975
      %v4488 = vunpack.c.h.b16 %v3975
      %v4489 = vunpack.c.l.b16 %v3976
      %v4490 = vunpack.c.h.b16 %v3976
      %v4491 = vunpack.c.l.b16 %v3977
      %v4492 = vunpack.c.h.b16 %v3977
      %v4493 = vunpack.c.l.b16 %v3978
      %v4494 = vunpack.c.h.b16 %v3978
      %v4495 = vunpack.c.l.b16 %v3979
      %v4496 = vunpack.c.h.b16 %v3979
      %v4497 = vunpack.c.l.b16 %v3980
      %v4498 = vunpack.c.h.b16 %v3980
      %v4499 = vunpack.c.l.b16 %v3981
      %v4500 = vunpack.c.h.b16 %v3981
      %v4501 = vunpack.c.l.b16 %v3982
      %v4502 = vunpack.c.h.b16 %v3982
      %v4503 = vunpack.c.l.b16 %v3983
      %v4504 = vunpack.c.h.b16 %v3983
      %v4505 = vunpack.c.l.b16 %v3984
      %v4506 = vunpack.c.h.b16 %v3984
      %v4507 = vunpack.c.l.b16 %v3985
      %v4508 = vunpack.c.h.b16 %v3985
      %v4509 = vunpack.c.l.b16 %v3986
      %v4510 = vunpack.c.h.b16 %v3986
      %v4511 = vunpack.c.l.b16 %v3987
      %v4512 = vunpack.c.h.b16 %v3987
      %v4513 = vunpack.c.l.b16 %v3988
      %v4514 = vunpack.c.h.b16 %v3988
      %v4515 = vunpack.c.l.b16 %v3989
      %v4516 = vunpack.c.h.b16 %v3989
      %v4517 = vunpack.c.l.b16 %v3990
      %v4518 = vunpack.c.h.b16 %v3990
      %v4519 = vunpack.c.l.b16 %v3991
      %v4520 = vunpack.c.h.b16 %v3991
      %v4521 = vunpack.c.l.b16 %v3992
      %v4522 = vunpack.c.h.b16 %v3992
      %v4523 = vunpack.c.l.b16 %v3993
      %v4524 = vunpack.c.h.b16 %v3993
      %v4525 = vunpack.c.l.b16 %v3994
      %v4526 = vunpack.c.h.b16 %v3994
      %v4527 = vunpack.c.l.b16 %v3995
      %v4528 = vunpack.c.h.b16 %v3995
      %v4529 = vunpack.c.l.b16 %v3996
      %v4530 = vunpack.c.h.b16 %v3996
      %v4531 = vunpack.c.l.b16 %v3997
      %v4532 = vunpack.c.h.b16 %v3997
      %v4533 = vunpack.c.l.b16 %v3998
      %v4534 = vunpack.c.h.b16 %v3998
      %v4535 = vunpack.c.l.b16 %v3999
      %v4536 = vunpack.c.h.b16 %v3999
      %v4537 = vunpack.c.l.b16 %v4000
      %v4538 = vunpack.c.h.b16 %v4000
      %v4539 = vunpack.c.l.b16 %v4001
      %v4540 = vunpack.c.h.b16 %v4001
      %v4541 = vunpack.c.l.b16 %v4002
      %v4542 = vunpack.c.h.b16 %v4002
      %v4543 = vunpack.c.l.b16 %v4003
      %v4544 = vunpack.c.h.b16 %v4003
      %v4545 = vunpack.c.l.b16 %v4004
      %v4546 = vunpack.c.h.b16 %v4004
      %v4547 = vpack.c.b16 %v4261, %v4259
      %v4548 = vpack.c.b16 %v4262, %v4260
      %v4549 = vpack.c.b16 %v4265, %v4263
      %v4550 = vpack.c.b16 %v4266, %v4264
      %v4551 = vpack.c.b16 %v4269, %v4267
      %v4552 = vpack.c.b16 %v4270, %v4268
      %v4553 = vpack.c.b16 %v4273, %v4271
      %v4554 = vpack.c.b16 %v4274, %v4272
      %v4555 = vpack.c.b16 %v4277, %v4275
      %v4556 = vpack.c.b16 %v4278, %v4276
      %v4557 = vpack.c.b16 %v4281, %v4279
      %v4558 = vpack.c.b16 %v4282, %v4280
      %v4559 = vpack.c.b16 %v4285, %v4283
      %v4560 = vpack.c.b16 %v4286, %v4284
      %v4561 = vpack.c.b16 %v4289, %v4287
      %v4562 = vpack.c.b16 %v4290, %v4288
      %v4563 = vpack.c.b16 %v4293, %v4291
      %v4564 = vpack.c.b16 %v4294, %v4292
      %v4565 = vpack.c.b16 %v4297, %v4295
      %v4566 = vpack.c.b16 %v4298, %v4296
      %v4567 = vpack.c.b16 %v4301, %v4299
      %v4568 = vpack.c.b16 %v4302, %v4300
      %v4569 = vpack.c.b16 %v4305, %v4303
      %v4570 = vpack.c.b16 %v4306, %v4304
      %v4571 = vpack.c.b16 %v4309, %v4307
      %v4572 = vpack.c.b16 %v4310, %v4308
      %v4573 = vpack.c.b16 %v4313, %v4311
      %v4574 = vpack.c.b16 %v4314, %v4312
      %v4575 = vpack.c.b16 %v4317, %v4315
      %v4576 = vpack.c.b16 %v4318, %v4316
      %v4577 = vpack.c.b16 %v4321, %v4319
      %v4578 = vpack.c.b16 %v4322, %v4320
      %v4579 = vpack.c.b16 %v4325, %v4323
      %v4580 = vpack.c.b16 %v4326, %v4324
      %v4581 = vpack.c.b16 %v4329, %v4327
      %v4582 = vpack.c.b16 %v4330, %v4328
      %v4583 = vpack.c.b16 %v4333, %v4331
      %v4584 = vpack.c.b16 %v4334, %v4332
      %v4585 = vpack.c.b16 %v4337, %v4335
      %v4586 = vpack.c.b16 %v4338, %v4336
      %v4587 = vpack.c.b16 %v4341, %v4339
      %v4588 = vpack.c.b16 %v4342, %v4340
      %v4589 = vpack.c.b16 %v4345, %v4343
      %v4590 = vpack.c.b16 %v4346, %v4344
      %v4591 = vpack.c.b16 %v4349, %v4347
      %v4592 = vpack.c.b16 %v4350, %v4348
      %v4593 = vpack.c.b16 %v4353, %v4351
      %v4594 = vpack.c.b16 %v4354, %v4352
      %v4595 = vpack.c.b16 %v4357, %v4355
      %v4596 = vpack.c.b16 %v4358, %v4356
      %v4597 = vpack.c.b16 %v4361, %v4359
      %v4598 = vpack.c.b16 %v4362, %v4360
      %v4599 = vpack.c.b16 %v4365, %v4363
      %v4600 = vpack.c.b16 %v4366, %v4364
      %v4601 = vpack.c.b16 %v4369, %v4367
      %v4602 = vpack.c.b16 %v4370, %v4368
      %v4603 = vpack.c.b16 %v4373, %v4371
      %v4604 = vpack.c.b16 %v4374, %v4372
      %v4605 = vpack.c.b16 %v4377, %v4375
      %v4606 = vpack.c.b16 %v4378, %v4376
      %v4607 = vpack.c.b16 %v4381, %v4379
      %v4608 = vpack.c.b16 %v4382, %v4380
      %v4609 = vpack.c.b16 %v4385, %v4383
      %v4610 = vpack.c.b16 %v4386, %v4384
      %v4611 = vpack.c.b16 %v4389, %v4387
      %v4612 = vpack.c.b16 %v4390, %v4388
      %v4613 = vpack.c.b16 %v4393, %v4391
      %v4614 = vpack.c.b16 %v4394, %v4392
      %v4615 = vpack.c.b16 %v4397, %v4395
      %v4616 = vpack.c.b16 %v4398, %v4396
      %v4617 = vpack.c.b16 %v4401, %v4399
      %v4618 = vpack.c.b16 %v4402, %v4400
      %v4619 = vpack.c.b16 %v4405, %v4403
      %v4620 = vpack.c.b16 %v4406, %v4404
      %v4621 = vpack.c.b16 %v4409, %v4407
      %v4622 = vpack.c.b16 %v4410, %v4408
      %v4623 = vpack.c.b16 %v4413, %v4411
      %v4624 = vpack.c.b16 %v4414, %v4412
      %v4625 = vpack.c.b16 %v4417, %v4415
      %v4626 = vpack.c.b16 %v4418, %v4416
      %v4627 = vpack.c.b16 %v4421, %v4419
      %v4628 = vpack.c.b16 %v4422, %v4420
      %v4629 = vpack.c.b16 %v4425, %v4423
      %v4630 = vpack.c.b16 %v4426, %v4424
      %v4631 = vpack.c.b16 %v4429, %v4427
      %v4632 = vpack.c.b16 %v4430, %v4428
      %v4633 = vpack.c.b16 %v4433, %v4431
      %v4634 = vpack.c.b16 %v4434, %v4432
      %v4635 = vpack.c.b16 %v4437, %v4435
      %v4636 = vpack.c.b16 %v4438, %v4436
      %v4637 = vpack.c.b16 %v4441, %v4439
      %v4638 = vpack.c.b16 %v4442, %v4440
      %v4639 = vpack.c.b16 %v4445, %v4443
      %v4640 = vpack.c.b16 %v4446, %v4444
      %v4641 = vpack.c.b16 %v4449, %v4447
      %v4642 = vpack.c.b16 %v4450, %v4448
      %v4643 = vpack.c.b16 %v4453, %v4451
      %v4644 = vpack.c.b16 %v4454, %v4452
      %v4645 = vpack.c.b16 %v4457, %v4455
      %v4646 = vpack.c.b16 %v4458, %v4456
      %v4647 = vpack.c.b16 %v4461, %v4459
      %v4648 = vpack.c.b16 %v4462, %v4460
      %v4649 = vpack.c.b16 %v4465, %v4463
      %v4650 = vpack.c.b16 %v4466, %v4464
      %v4651 = vpack.c.b16 %v4469, %v4467
      %v4652 = vpack.c.b16 %v4470, %v4468
      %v4653 = vpack.c.b16 %v4473, %v4471
      %v4654 = vpack.c.b16 %v4474, %v4472
      %v4655 = vpack.c.b16 %v4477, %v4475
      %v4656 = vpack.c.b16 %v4478, %v4476
      %v4657 = vpack.c.b16 %v4481, %v4479
      %v4658 = vpack.c.b16 %v4482, %v4480
      %v4659 = vpack.c.b16 %v4485, %v4483
      %v4660 = vpack.c.b16 %v4486, %v4484
      %v4661 = vpack.c.b16 %v4489, %v4487
      %v4662 = vpack.c.b16 %v4490, %v4488
      %v4663 = vpack.c.b16 %v4493, %v4491
      %v4664 = vpack.c.b16 %v4494, %v4492
      %v4665 = vpack.c.b16 %v4497, %v4495
      %v4666 = vpack.c.b16 %v4498, %v4496
      %v4667 = vpack.c.b16 %v4501, %v4499
      %v4668 = vpack.c.b16 %v4502, %v4500
      %v4669 = vpack.c.b16 %v4505, %v4503
      %v4670 = vpack.c.b16 %v4506, %v4504
      %v4671 = vpack.c.b16 %v4509, %v4507
      %v4672 = vpack.c.b16 %v4510, %v4508
      %v4673 = vpack.c.b16 %v4513, %v4511
      %v4674 = vpack.c.b16 %v4514, %v4512
      %v4675 = vpack.c.b16 %v4517, %v4515
      %v4676 = vpack.c.b16 %v4518, %v4516
      %v4677 = vpack.c.b16 %v4521, %v4519
      %v4678 = vpack.c.b16 %v4522, %v4520
      %v4679 = vpack.c.b16 %v4525, %v4523
      %v4680 = vpack.c.b16 %v4526, %v4524
      %v4681 = vpack.c.b16 %v4529, %v4527
      %v4682 = vpack.c.b16 %v4530, %v4528
      %v4683 = vpack.c.b16 %v4533, %v4531
      %v4684 = vpack.c.b16 %v4534, %v4532
      %v4685 = vpack.c.b16 %v4537, %v4535
      %v4686 = vpack.c.b16 %v4538, %v4536
      %v4687 = vpack.c.b16 %v4541, %v4539
      %v4688 = vpack.c.b16 %v4542, %v4540
      %v4689 = vpack.c.b16 %v4545, %v4543
      %v4690 = vpack.c.b16 %v4546, %v4544
      %4835 = vmatprep.subr.bf16.mxu0 %v4562
      %4836 = vmatpush1.bf16.msra.mxu0 %v4561
      %4837 = vmatprep.subr.bf16.mxu0 %v4560
      %4838 = vmatpush1.bf16.msra.mxu0 %v4559
      %4839 = vmatprep.subr.bf16.mxu0 %v4558
      %4840 = vmatpush1.bf16.msra.mxu0 %v4557
      %4841 = vmatprep.subr.bf16.mxu0 %v4556
      %4842 = vmatpush1.bf16.msra.mxu0 %v4555
      %4843 = vmatprep.subr.bf16.mxu0 %v4554
      %4844 = vmatpush1.bf16.msra.mxu0 %v4553
      %4845 = vmatprep.subr.bf16.mxu0 %v4552
      %4846 = vmatpush1.bf16.msra.mxu0 %v4551
      %4847 = vmatprep.subr.bf16.mxu0 %v4550
      %4848 = vmatpush1.bf16.msra.mxu0 %v4549
      %4849 = vmatprep.subr.bf16.mxu0 %v4548
      %4850 = vmatpush1.bf16.msra.mxu0 %v4547
      %4851 = vmatprep.subr.bf16.mxu0 %v4578
      %4852 = vmatpush2.bf16.msra.mxu0 %v4577
      %4853 = vmatprep.subr.bf16.mxu0 %v4576
      %4854 = vmatpush2.bf16.msra.mxu0 %v4575
      %4855 = vmatprep.subr.bf16.mxu0 %v4574
      %4856 = vmatpush2.bf16.msra.mxu0 %v4573
      %4857 = vmatprep.subr.bf16.mxu0 %v4572
      %4858 = vmatpush2.bf16.msra.mxu0 %v4571
      %4859 = vmatprep.subr.bf16.mxu0 %v4570
      %4860 = vmatpush2.bf16.msra.mxu0 %v4569
      %4861 = vmatprep.subr.bf16.mxu0 %v4568
      %4862 = vmatpush2.bf16.msra.mxu0 %v4567
      %4863 = vmatprep.subr.bf16.mxu0 %v4566
      %4864 = vmatpush2.bf16.msra.mxu0 %v4565
      %4865 = vmatprep.subr.bf16.mxu0 %v4564
      %4866 = vmatpush2.bf16.msra.mxu0 %v4563
      %4867 = vmatprep.mubr.bf16.mxu0 %v4050
      %4868 = vmatmul.mubr.bf16.gmra.mxu0 %v4049
      %v4869 = vpop.f32.mrf.mxu0
      %v4870 = vadd.f32 %v4010, %v4869
      %v4871 = vpop.f32.mrf.mxu0
      %v4872 = vadd.f32 %v4014, %v4871
      %v4873 = vpop.f32.mrf.mxu0
      %v4874 = vadd.f32 %v4010, %v4873
      %v4875 = vpop.f32.mrf.mxu0
      %v4876 = vadd.f32 %v4014, %v4875
      %4877 = vdwg.mxu0
      %4878 = vmatprep.subr.bf16.mxu0 %v4594
      %4879 = vmatpush1.bf16.msra.mxu0 %v4593
      %4880 = vmatprep.subr.bf16.mxu0 %v4592
      %4881 = vmatpush1.bf16.msra.mxu0 %v4591
      %4882 = vmatprep.subr.bf16.mxu0 %v4590
      %4883 = vmatpush1.bf16.msra.mxu0 %v4589
      %4884 = vmatprep.subr.bf16.mxu0 %v4588
      %4885 = vmatpush1.bf16.msra.mxu0 %v4587
      %4886 = vmatprep.subr.bf16.mxu0 %v4586
      %4887 = vmatpush1.bf16.msra.mxu0 %v4585
      %4888 = vmatprep.subr.bf16.mxu0 %v4584
      %4889 = vmatpush1.bf16.msra.mxu0 %v4583
      %4890 = vmatprep.subr.bf16.mxu0 %v4582
      %4891 = vmatpush1.bf16.msra.mxu0 %v4581
      %4892 = vmatprep.subr.bf16.mxu0 %v4580
      %4893 = vmatpush1.bf16.msra.mxu0 %v4579
      %4894 = vmatprep.subr.bf16.mxu0 %v4610
      %4895 = vmatpush2.bf16.msra.mxu0 %v4609
      %4896 = vmatprep.subr.bf16.mxu0 %v4608
      %4897 = vmatpush2.bf16.msra.mxu0 %v4607
      %4898 = vmatprep.subr.bf16.mxu0 %v4606
      %4899 = vmatpush2.bf16.msra.mxu0 %v4605
      %4900 = vmatprep.subr.bf16.mxu0 %v4604
      %4901 = vmatpush2.bf16.msra.mxu0 %v4603
      %4902 = vmatprep.subr.bf16.mxu0 %v4602
      %4903 = vmatpush2.bf16.msra.mxu0 %v4601
      %4904 = vmatprep.subr.bf16.mxu0 %v4600
      %4905 = vmatpush2.bf16.msra.mxu0 %v4599
      %4906 = vmatprep.subr.bf16.mxu0 %v4598
      %4907 = vmatpush2.bf16.msra.mxu0 %v4597
      %4908 = vmatprep.subr.bf16.mxu0 %v4596
      %4909 = vmatpush2.bf16.msra.mxu0 %v4595
      %4910 = vmatprep.mubr.bf16.mxu0 %v4052
      %4911 = vmatmul.mubr.bf16.gmra.mxu0 %v4051
      %v4912 = vpop.f32.mrf.mxu0
      %v4913 = vadd.f32 %v4870, %v4912
      %v4914 = vpop.f32.mrf.mxu0
      %v4915 = vadd.f32 %v4872, %v4914
      %v4916 = vpop.f32.mrf.mxu0
      %v4917 = vadd.f32 %v4874, %v4916
      %v4918 = vpop.f32.mrf.mxu0
      %v4919 = vadd.f32 %v4876, %v4918
      %4920 = vdwg.mxu0
      %4921 = vmatprep.subr.bf16.mxu0 %v4626
      %4922 = vmatpush1.bf16.msra.mxu0 %v4625
      %4923 = vmatprep.subr.bf16.mxu0 %v4624
      %4924 = vmatpush1.bf16.msra.mxu0 %v4623
      %4925 = vmatprep.subr.bf16.mxu0 %v4622
      %4926 = vmatpush1.bf16.msra.mxu0 %v4621
      %4927 = vmatprep.subr.bf16.mxu0 %v4620
      %4928 = vmatpush1.bf16.msra.mxu0 %v4619
      %4929 = vmatprep.subr.bf16.mxu0 %v4618
      %4930 = vmatpush1.bf16.msra.mxu0 %v4617
      %4931 = vmatprep.subr.bf16.mxu0 %v4616
      %4932 = vmatpush1.bf16.msra.mxu0 %v4615
      %4933 = vmatprep.subr.bf16.mxu0 %v4614
      %4934 = vmatpush1.bf16.msra.mxu0 %v4613
      %4935 = vmatprep.subr.bf16.mxu0 %v4612
      %4936 = vmatpush1.bf16.msra.mxu0 %v4611
      %4937 = vmatprep.subr.bf16.mxu0 %v4642
      %4938 = vmatpush2.bf16.msra.mxu0 %v4641
      %4939 = vmatprep.subr.bf16.mxu0 %v4640
      %4940 = vmatpush2.bf16.msra.mxu0 %v4639
      %4941 = vmatprep.subr.bf16.mxu0 %v4638
      %4942 = vmatpush2.bf16.msra.mxu0 %v4637
      %4943 = vmatprep.subr.bf16.mxu0 %v4636
      %4944 = vmatpush2.bf16.msra.mxu0 %v4635
      %4945 = vmatprep.subr.bf16.mxu0 %v4634
      %4946 = vmatpush2.bf16.msra.mxu0 %v4633
      %4947 = vmatprep.subr.bf16.mxu0 %v4632
      %4948 = vmatpush2.bf16.msra.mxu0 %v4631
      %4949 = vmatprep.subr.bf16.mxu0 %v4630
      %4950 = vmatpush2.bf16.msra.mxu0 %v4629
      %4951 = vmatprep.subr.bf16.mxu0 %v4628
      %4952 = vmatpush2.bf16.msra.mxu0 %v4627
      %4953 = vmatprep.mubr.bf16.mxu0 %v4086
      %4954 = vmatmul.mubr.bf16.gmra.mxu0 %v4085
      %v4955 = vpop.f32.mrf.mxu0
      %v4956 = vadd.f32 %v4913, %v4955
      %v4957 = vpop.f32.mrf.mxu0
      %v4958 = vadd.f32 %v4915, %v4957
      %v4959 = vpop.f32.mrf.mxu0
      %v4960 = vadd.f32 %v4917, %v4959
      %v4961 = vpop.f32.mrf.mxu0
      %v4962 = vadd.f32 %v4919, %v4961
      %4963 = vdwg.mxu0
      %4964 = vmatprep.subr.bf16.mxu0 %v4658
      %4965 = vmatpush1.bf16.msra.mxu0 %v4657
      %4966 = vmatprep.subr.bf16.mxu0 %v4656
      %4967 = vmatpush1.bf16.msra.mxu0 %v4655
      %4968 = vmatprep.subr.bf16.mxu0 %v4654
      %4969 = vmatpush1.bf16.msra.mxu0 %v4653
      %4970 = vmatprep.subr.bf16.mxu0 %v4652
      %4971 = vmatpush1.bf16.msra.mxu0 %v4651
      %4972 = vmatprep.subr.bf16.mxu0 %v4650
      %4973 = vmatpush1.bf16.msra.mxu0 %v4649
      %4974 = vmatprep.subr.bf16.mxu0 %v4648
      %4975 = vmatpush1.bf16.msra.mxu0 %v4647
      %4976 = vmatprep.subr.bf16.mxu0 %v4646
      %4977 = vmatpush1.bf16.msra.mxu0 %v4645
      %4978 = vmatprep.subr.bf16.mxu0 %v4644
      %4979 = vmatpush1.bf16.msra.mxu0 %v4643
      %4980 = vmatprep.subr.bf16.mxu0 %v4674
      %4981 = vmatpush2.bf16.msra.mxu0 %v4673
      %4982 = vmatprep.subr.bf16.mxu0 %v4672
      %4983 = vmatpush2.bf16.msra.mxu0 %v4671
      %4984 = vmatprep.subr.bf16.mxu0 %v4670
      %4985 = vmatpush2.bf16.msra.mxu0 %v4669
      %4986 = vmatprep.subr.bf16.mxu0 %v4668
      %4987 = vmatpush2.bf16.msra.mxu0 %v4667
      %4988 = vmatprep.subr.bf16.mxu0 %v4666
      %4989 = vmatpush2.bf16.msra.mxu0 %v4665
      %4990 = vmatprep.subr.bf16.mxu0 %v4664
      %4991 = vmatpush2.bf16.msra.mxu0 %v4663
      %4992 = vmatprep.subr.bf16.mxu0 %v4662
      %4993 = vmatpush2.bf16.msra.mxu0 %v4661
      %4994 = vmatprep.subr.bf16.mxu0 %v4660
      %4995 = vmatpush2.bf16.msra.mxu0 %v4659
      %4996 = vmatprep.mubr.bf16.mxu0 %v4088
      %4997 = vmatmul.mubr.bf16.gmra.mxu0 %v4087
      %v4998 = vpop.f32.mrf.mxu0
      %v4999 = vadd.f32 %v4956, %v4998
      %v5000 = vpop.f32.mrf.mxu0
      %v5001 = vadd.f32 %v4958, %v5000
      %v5002 = vpop.f32.mrf.mxu0
      %v5003 = vadd.f32 %v4960, %v5002
      %v5004 = vpop.f32.mrf.mxu0
      %v5005 = vadd.f32 %v4962, %v5004
      %5006 = vdwg.mxu0
      %5007 = vmatprep.subr.bf16.mxu0 %v4690
      %5008 = vmatpush1.bf16.msra.mxu0 %v4689
      %5009 = vmatprep.subr.bf16.mxu0 %v4688
      %5010 = vmatpush1.bf16.msra.mxu0 %v4687
      %5011 = vmatprep.subr.bf16.mxu0 %v4686
      %5012 = vmatpush1.bf16.msra.mxu0 %v4685
      %5013 = vmatprep.subr.bf16.mxu0 %v4684
      %5014 = vmatpush1.bf16.msra.mxu0 %v4683
      %5015 = vmatprep.subr.bf16.mxu0 %v4682
      %5016 = vmatpush1.bf16.msra.mxu0 %v4681
      %5017 = vmatprep.subr.bf16.mxu0 %v4680
      %5018 = vmatpush1.bf16.msra.mxu0 %v4679
      %5019 = vmatprep.subr.bf16.mxu0 %v4678
      %5020 = vmatpush1.bf16.msra.mxu0 %v4677
      %5021 = vmatprep.subr.bf16.mxu0 %v4676
      %5022 = vmatpush1.bf16.msra.mxu0 %v4675
      %5023 = vmatprep.subr.bf16.mxu0 0
      %5024 = vmatpush2.bf16.msra.mxu0 0
      %5025 = vmatprep.subr.bf16.mxu0 0
      %5026 = vmatpush2.bf16.msra.mxu0 0
      %5027 = vmatprep.subr.bf16.mxu0 0
      %5028 = vmatpush2.bf16.msra.mxu0 0
      %5029 = vmatprep.subr.bf16.mxu0 0
      %5030 = vmatpush2.bf16.msra.mxu0 0
      %5031 = vmatprep.subr.bf16.mxu0 0
      %5032 = vmatpush2.bf16.msra.mxu0 0
      %5033 = vmatprep.subr.bf16.mxu0 0
      %5034 = vmatpush2.bf16.msra.mxu0 0
      %5035 = vmatprep.subr.bf16.mxu0 0
      %5036 = vmatpush2.bf16.msra.mxu0 0
      %5037 = vmatprep.subr.bf16.mxu0 0
      %5038 = vmatpush2.bf16.msra.mxu0 0
      %5039 = vmatprep.mubr.bf16.mxu0 0
      %5040 = vmatmul.mubr.bf16.gmra.mxu0 %v4105
      %v5041 = vpop.f32.mrf.mxu0
      %v5042 = vadd.f32 %v4999, %v5041
      %v5043 = vpop.f32.mrf.mxu0
      %v5044 = vadd.f32 %v5001, %v5043
      %v5045 = vpop.f32.mrf.mxu0
      %v5046 = vadd.f32 %v5003, %v5045
      %v5047 = vpop.f32.mrf.mxu0
      %v5048 = vadd.f32 %v5005, %v5047
      %5049 = vdwg.mxu0
      %v5050 = vmax.f32 %v5042, 0.0
      %v5051 = vmax.f32 %v5044, 0.0
      %v5052 = vmax.f32 %v5046, 0.0
      %v5053 = vmax.f32 %v5048, 0.0
      %v5058 = vcombine.low %v5050, %v5051
      %v5059 = vcombine.high %v5050, %v5051
      %v5061 = vunpack.c.l.s4 1983009808
      %v5062 = vunpack.c.0.s8 %v5061
      %v5063 = vlaneseq
      %v5064 = vshrl.u32 %v5063, 7
      %v5065 = vsub.s32 %v5062, %v5064
      %v5066 = vrot.slane %v5058, %v5065
      %v5068 = vunpack.c.l.s4 1983009808
      %v5069 = vunpack.c.0.s8 %v5068
      %v5070 = vlaneseq
      %v5071 = vshrl.u32 %v5070, 7
      %v5072 = vsub.s32 %v5069, %v5071
      %v5073 = vrot.slane %v5059, %v5072
      %v5074 = vcombine.high %v5066, %v5066
      %v5075 = vcombine.high %v5073, %v5073
      %v5076 = vcombine.low %v5052, %v5053
      %v5077 = vcombine.high %v5052, %v5053
      %v5079 = vunpack.c.l.s4 1983009808
      %v5080 = vunpack.c.0.s8 %v5079
      %v5081 = vlaneseq
      %v5082 = vshrl.u32 %v5081, 7
      %v5083 = vsub.s32 %v5080, %v5082
      %v5084 = vrot.slane %v5076, %v5083
      %v5086 = vunpack.c.l.s4 1983009808
      %v5087 = vunpack.c.0.s8 %v5086
      %v5088 = vlaneseq
      %v5089 = vshrl.u32 %v5088, 7
      %v5090 = vsub.s32 %v5087, %v5089
      %v5091 = vrot.slane %v5077, %v5090
      %v5092 = vcombine.high %v5084, %v5084
      %v5093 = vcombine.high %v5091, %v5091
      %v5102 = vmax.f32 %v5066, %v5073
      %v5103 = vmax.f32 %v5074, %v5075
      %v5104 = vmax.f32 %v5084, %v5091
      %v5105 = vmax.f32 %v5092, %v5093
      %v5110 = vrot.slane %v5102, 7
      %v5111 = vrot.slane %v5110, 2
      %v5112 = vrot.slane %v5103, 7
      %v5113 = vrot.slane %v5112, 2
      %v5114 = vrot.slane %v5104, 7
      %v5115 = vrot.slane %v5114, 2
      %v5116 = vrot.slane %v5105, 7
      %v5117 = vrot.slane %v5116, 2
      %v5122 = vmax.f32 %v5102, %v5111
      %v5123 = vmax.f32 %v5103, %v5113
      %v5124 = vmax.f32 %v5104, %v5115
      %v5125 = vmax.f32 %v5105, %v5117
      %5126 = vst [vmem:[#allocation4] sm:$0xf] 0
      %5127 = vst [vmem:[#allocation4 + $0x4] sm:$0xf] 0
      %5128 = vst [vmem:[#allocation4 + $0x8] sm:$0xf] 0
      %5129 = vst [vmem:[#allocation4 + $0xc] sm:$0xf] 0
      %v5134 = vlaneseq
      %v5135 = vshrl.u32 %v5134, 7
      %v5136 = vsub.s32 0, %v5135
      %v5137 = vrot.slane %v5122, %v5136
      %v5138 = vlaneseq
      %v5139 = vshrl.u32 %v5138, 7
      %v5140 = vsub.s32 2, %v5139
      %v5141 = vrot.slane %v5122, %v5140
      %v5142 = vlaneseq
      %v5143 = vshrl.u32 %v5142, 7
      %v5144 = vsub.s32 0, %v5143
      %v5145 = vrot.slane %v5123, %v5144
      %v5146 = vlaneseq
      %v5147 = vshrl.u32 %v5146, 7
      %v5148 = vsub.s32 2, %v5147
      %v5149 = vrot.slane %v5123, %v5148
      %v5150 = vlaneseq
      %v5151 = vshrl.u32 %v5150, 7
      %v5152 = vsub.s32 0, %v5151
      %v5153 = vrot.slane %v5124, %v5152
      %v5154 = vlaneseq
      %v5155 = vshrl.u32 %v5154, 7
      %v5156 = vsub.s32 2, %v5155
      %v5157 = vrot.slane %v5124, %v5156
      %v5158 = vlaneseq
      %v5159 = vshrl.u32 %v5158, 7
      %v5160 = vsub.s32 0, %v5159
      %v5161 = vrot.slane %v5125, %v5160
      %v5162 = vlaneseq
      %v5163 = vshrl.u32 %v5162, 7
      %v5164 = vsub.s32 2, %v5163
      %v5165 = vrot.slane %v5125, %v5164
      %v5174 = vpack.c.bf16 %v5137, %v5137
      %v5175 = vpack.c.bf16 %v5141, %v5141
      %v5176 = vpack.c.bf16 %v5145, %v5145
      %v5177 = vpack.c.bf16 %v5149, %v5149
      %v5178 = vpack.c.bf16 %v5153, %v5153
      %v5179 = vpack.c.bf16 %v5157, %v5157
      %v5180 = vpack.c.bf16 %v5161, %v5161
      %v5181 = vpack.c.bf16 %v5165, %v5165
      %v5190 = vcombine.low %v5174, %v5175
      %v5192 = vunpack.c.l.s4 1983009808
      %v5193 = vunpack.c.0.s8 %v5192
      %v5194 = vlaneseq
      %v5195 = vshrl.u32 %v5194, 7
      %v5196 = vsub.s32 %v5193, %v5195
      %v5197 = vrot.slane %v5190, %v5196
      %v5198 = vcombine.low %v5176, %v5177
      %v5200 = vunpack.c.l.s4 1983009808
      %v5201 = vunpack.c.0.s8 %v5200
      %v5202 = vlaneseq
      %v5203 = vshrl.u32 %v5202, 7
      %v5204 = vsub.s32 %v5201, %v5203
      %v5205 = vrot.slane %v5198, %v5204
      %v5206 = vcombine.low %v5178, %v5179
      %v5208 = vunpack.c.l.s4 1983009808
      %v5209 = vunpack.c.0.s8 %v5208
      %v5210 = vlaneseq
      %v5211 = vshrl.u32 %v5210, 7
      %v5212 = vsub.s32 %v5209, %v5211
      %v5213 = vrot.slane %v5206, %v5212
      %v5214 = vcombine.low %v5180, %v5181
      %v5216 = vunpack.c.l.s4 1983009808
      %v5217 = vunpack.c.0.s8 %v5216
      %v5218 = vlaneseq
      %v5219 = vshrl.u32 %v5218, 7
      %v5220 = vsub.s32 %v5217, %v5219
      %v5221 = vrot.slane %v5214, %v5220
      %v5223 = vunpack.c.l.s4 1983009808
      %v5224 = vunpack.c.0.s8 %v5223
      %v5225 = vlaneseq
      %v5226 = vshrl.u32 %v5225, 7
      %v5227 = vsub.s32 %v5224, %v5226
      %v5228 = vrot.slane %v5197, %v5227
      %v5230 = vunpack.c.l.s4 1983009808
      %v5231 = vunpack.c.0.s8 %v5230
      %v5232 = vlaneseq
      %v5233 = vshrl.u32 %v5232, 7
      %v5234 = vsub.s32 %v5231, %v5233
      %v5235 = vrot.slane %v5205, %v5234
      %v5237 = vunpack.c.l.s4 1983009808
      %v5238 = vunpack.c.0.s8 %v5237
      %v5239 = vlaneseq
      %v5240 = vshrl.u32 %v5239, 7
      %v5241 = vsub.s32 %v5238, %v5240
      %v5242 = vrot.slane %v5213, %v5241
      %v5244 = vunpack.c.l.s4 1983009808
      %v5245 = vunpack.c.0.s8 %v5244
      %v5246 = vlaneseq
      %v5247 = vshrl.u32 %v5246, 7
      %v5248 = vsub.s32 %v5245, %v5247
      %v5249 = vrot.slane %v5221, %v5248
      %v5250 = vunpack.c.l.b16 %v5228
      %v5251 = vunpack.c.h.b16 %v5228
      %v5252 = vunpack.c.l.b16 %v5235
      %v5253 = vunpack.c.h.b16 %v5235
      %v5254 = vunpack.c.l.b16 %v5242
      %v5255 = vunpack.c.h.b16 %v5242
      %v5256 = vunpack.c.l.b16 %v5249
      %v5257 = vunpack.c.h.b16 %v5249
      %v5258 = vrot.slane %v5250, 7
      %v5259 = vrot.slane %v5252, 6
      %v5260 = vsel %vm2147, %v5259, %v5258
      %v5261 = vrot.slane %v5251, 7
      %v5262 = vrot.slane %v5253, 6
      %v5263 = vsel %vm2147, %v5262, %v5261
      %v5264 = vrot.slane %v5254, 7
      %v5265 = vrot.slane %v5256, 6
      %v5266 = vsel %vm2147, %v5265, %v5264
      %v5267 = vrot.slane %v5255, 7
      %v5268 = vrot.slane %v5257, 6
      %v5269 = vsel %vm2147, %v5268, %v5267
      %v5270 = vpack.c.b16 %v5263, %v5260
      %v5271 = vpack.c.b16 %v5269, %v5266
      %v5273 = vunpack.c.l.s4 1983009808
      %v5274 = vunpack.c.0.s8 %v5273
      %v5275 = vlaneseq
      %v5276 = vshrl.u32 %v5275, 7
      %v5277 = vsub.s32 %v5274, %v5276
      %v5278 = vrot.slane %v5270, %v5277
      %v5280 = vunpack.c.l.s4 1983009808
      %v5281 = vunpack.c.0.s8 %v5280
      %v5282 = vlaneseq
      %v5283 = vshrl.u32 %v5282, 7
      %v5284 = vsub.s32 %v5281, %v5283
      %v5285 = vrot.slane %v5271, %v5284
      %s5288 = scalar_lea.vmem [#allocation4], 4
      %vm5289 = vcmask 1041408
      %vm5290 = vsmask.f32 1282
      %vm5291 = vmand %vm5289, %vm5290
      %vm5292 = vcmask 1043458
      %vm5293 = vsmask.f32 3338
      %vm5294 = vmand %vm5292, %vm5293
      %vm5295 = vmor %vm5294, %vm5291
      %v5296 = vld [vmem:[%s5288] sm:$0xf]
      %v5297 = vsel %vm5295, %v5278, %v5296
      %5298 = vst [vmem:[%s5288] sm:$0xf] %v5297
      %v5299 = vld [vmem:[%s5288 + $0x4] sm:$0xf]
      %v5300 = vsel %vm5295, %v5285, %v5299
      %5301 = vst [vmem:[%s5288 + $0x4] sm:$0xf] %v5300
      %v5302 = vld [vmem:[#allocation4] sm:$0xf]
      %v5303 = vld [vmem:[#allocation4 + $0x4] sm:$0xf]
      %v5304 = vld [vmem:[#allocation4 + $0x8] sm:$0xf]
      %v5305 = vld [vmem:[#allocation4 + $0xc] sm:$0xf]
      %v5309 = vunpack.c.l.s4 1983009808
      %v5310 = vunpack.c.0.s8 %v5309
      %v5311 = vlaneseq
      %v5312 = vshrl.u32 %v5311, 7
      %v5313 = vsub.s32 %v5310, %v5312
      %v5314 = vrot.slane %v5302, %v5313
      %v5315 = vcombine.high %v5314, %v5314
      %v5317 = vunpack.c.l.s4 1983009808
      %v5318 = vunpack.c.0.s8 %v5317
      %v5319 = vlaneseq
      %v5320 = vshrl.u32 %v5319, 7
      %v5321 = vsub.s32 %v5318, %v5320
      %v5322 = vrot.slane %v5303, %v5321
      %v5323 = vcombine.high %v5322, %v5322
      %v5325 = vshrl.u32 %v5314, 16
      %v5327 = vshll.u32 %v5314, 16
      %v5329 = vrot.slane %v5327, 1
      %v5330 = vor.u32 %v5325, %v5329
      %v5332 = vshrl.u32 %v5315, 16
      %v5334 = vshll.u32 %v5315, 16
      %v5336 = vrot.slane %v5334, 1
      %v5337 = vor.u32 %v5332, %v5336
      %v5339 = vshrl.u32 %v5322, 16
      %v5341 = vshll.u32 %v5322, 16
      %v5343 = vrot.slane %v5341, 1
      %v5344 = vor.u32 %v5339, %v5343
      %v5346 = vshrl.u32 %v5323, 16
      %v5348 = vshll.u32 %v5323, 16
      %v5350 = vrot.slane %v5348, 1
      %v5351 = vor.u32 %v5346, %v5350
      %v5352 = vrot.slane %v5314, 1
      %v5353 = vrot.slane %v5315, 1
      %v5354 = vrot.slane %v5322, 1
      %v5355 = vrot.slane %v5323, 1
      %v5358 = vunpack.c.l.s4 1983009808
      %v5359 = vunpack.c.0.s8 %v5358
      %v5360 = vlaneseq
      %v5361 = vshrl.u32 %v5360, 7
      %v5362 = vsub.s32 %v5359, %v5361
      %v5363 = vrot.slane %v5304, %v5362
      %v5364 = vcombine.high %v5363, %v5363
      %v5366 = vshrl.u32 %v5363, 16
      %v5368 = vshll.u32 %v5363, 16
      %v5370 = vrot.slane %v5368, 1
      %v5371 = vor.u32 %v5366, %v5370
      %v5373 = vshrl.u32 %v5364, 16
      %v5375 = vshll.u32 %v5364, 16
      %v5377 = vrot.slane %v5375, 1
      %v5378 = vor.u32 %v5373, %v5377
      %v5379 = vrot.slane %v5363, 1
      %v5380 = vrot.slane %v5364, 1
      %v5383 = vunpack.c.l.s4 1983009808
      %v5384 = vunpack.c.0.s8 %v5383
      %v5385 = vlaneseq
      %v5386 = vshrl.u32 %v5385, 7
      %v5387 = vsub.s32 %v5384, %v5386
      %v5388 = vrot.slane %v5305, %v5387
      %v5389 = vcombine.high %v5388, %v5388
      %v5391 = vshrl.u32 %v5388, 16
      %v5393 = vshll.u32 %v5388, 16
      %v5395 = vrot.slane %v5393, 1
      %v5396 = vor.u32 %v5391, %v5395
      %v5398 = vshrl.u32 %v5389, 16
      %v5400 = vshll.u32 %v5389, 16
      %v5402 = vrot.slane %v5400, 1
      %v5403 = vor.u32 %v5398, %v5402
      %v5404 = vrot.slane %v5388, 1
      %v5405 = vrot.slane %v5389, 1
      %v5406 = vcombine.low %v5314, %v5315
      %v5407 = vcombine.low %v5330, %v5337
      %v5408 = vcombine.low %v5352, %v5353
      %v5409 = vcombine.low %v5322, %v5323
      %v5411 = vunpack.c.l.s4 1966171168
      %v5412 = vunpack.c.0.s8 %v5411
      %v5413 = vlaneseq
      %v5414 = vshrl.u32 %v5413, 7
      %v5415 = vsub.s32 %v5412, %v5414
      %v5416 = vrot.slane %v5406, %v5415
      %v5418 = vunpack.c.l.s4 1966171168
      %v5419 = vunpack.c.0.s8 %v5418
      %v5420 = vlaneseq
      %v5421 = vshrl.u32 %v5420, 7
      %v5422 = vsub.s32 %v5419, %v5421
      %v5423 = vrot.slane %v5407, %v5422
      %v5425 = vunpack.c.l.s4 1966171168
      %v5426 = vunpack.c.0.s8 %v5425
      %v5427 = vlaneseq
      %v5428 = vshrl.u32 %v5427, 7
      %v5429 = vsub.s32 %v5426, %v5428
      %v5430 = vrot.slane %v5408, %v5429
      %v5432 = vunpack.c.l.s4 1966171168
      %v5433 = vunpack.c.0.s8 %v5432
      %v5434 = vlaneseq
      %v5435 = vshrl.u32 %v5434, 7
      %v5436 = vsub.s32 %v5433, %v5435
      %v5437 = vrot.slane %v5409, %v5436
      %v5438 = vcombine.low %v5416, %v5423
      %v5439 = vcombine.low %v5430, %v5437
      %v5441 = vunpack.c.l.s4 1966171168
      %v5442 = vunpack.c.0.s8 %v5441
      %v5443 = vlaneseq
      %v5444 = vshrl.u32 %v5443, 7
      %v5445 = vsub.s32 %v5442, %v5444
      %v5446 = vrot.slane %v5438, %v5445
      %v5448 = vunpack.c.l.s4 1966171168
      %v5449 = vunpack.c.0.s8 %v5448
      %v5450 = vlaneseq
      %v5451 = vshrl.u32 %v5450, 7
      %v5452 = vsub.s32 %v5449, %v5451
      %v5453 = vrot.slane %v5439, %v5452
      %v5454 = vcombine.low %v5446, %v5453
      %v5455 = vcombine.low %v5344, %v5351
      %v5456 = vcombine.low %v5354, %v5355
      %v5457 = vcombine.low %v5363, %v5364
      %v5458 = vcombine.low %v5371, %v5378
      %v5460 = vunpack.c.l.s4 1966171168
      %v5461 = vunpack.c.0.s8 %v5460
      %v5462 = vlaneseq
      %v5463 = vshrl.u32 %v5462, 7
      %v5464 = vsub.s32 %v5461, %v5463
      %v5465 = vrot.slane %v5455, %v5464
      %v5467 = vunpack.c.l.s4 1966171168
      %v5468 = vunpack.c.0.s8 %v5467
      %v5469 = vlaneseq
      %v5470 = vshrl.u32 %v5469, 7
      %v5471 = vsub.s32 %v5468, %v5470
      %v5472 = vrot.slane %v5456, %v5471
      %v5474 = vunpack.c.l.s4 1966171168
      %v5475 = vunpack.c.0.s8 %v5474
      %v5476 = vlaneseq
      %v5477 = vshrl.u32 %v5476, 7
      %v5478 = vsub.s32 %v5475, %v5477
      %v5479 = vrot.slane %v5457, %v5478
      %v5481 = vunpack.c.l.s4 1966171168
      %v5482 = vunpack.c.0.s8 %v5481
      %v5483 = vlaneseq
      %v5484 = vshrl.u32 %v5483, 7
      %v5485 = vsub.s32 %v5482, %v5484
      %v5486 = vrot.slane %v5458, %v5485
      %v5487 = vcombine.low %v5465, %v5472
      %v5488 = vcombine.low %v5479, %v5486
      %v5490 = vunpack.c.l.s4 1966171168
      %v5491 = vunpack.c.0.s8 %v5490
      %v5492 = vlaneseq
      %v5493 = vshrl.u32 %v5492, 7
      %v5494 = vsub.s32 %v5491, %v5493
      %v5495 = vrot.slane %v5487, %v5494
      %v5497 = vunpack.c.l.s4 1966171168
      %v5498 = vunpack.c.0.s8 %v5497
      %v5499 = vlaneseq
      %v5500 = vshrl.u32 %v5499, 7
      %v5501 = vsub.s32 %v5498, %v5500
      %v5502 = vrot.slane %v5488, %v5501
      %v5503 = vcombine.low %v5495, %v5502
      %v5504 = vcombine.low %v5379, %v5380
      %v5506 = vunpack.c.l.s4 1966171168
      %v5507 = vunpack.c.0.s8 %v5506
      %v5508 = vlaneseq
      %v5509 = vshrl.u32 %v5508, 7
      %v5510 = vsub.s32 %v5507, %v5509
      %v5511 = vrot.slane %v5504, %v5510
      %v5513 = vunpack.c.l.s4 1966171168
      %v5514 = vunpack.c.0.s8 %v5513
      %v5515 = vlaneseq
      %v5516 = vshrl.u32 %v5515, 7
      %v5517 = vsub.s32 %v5514, %v5516
      %v5518 = vrot.slane %v5511, %v5517
      %v5519 = vcombine.low %v5437, %v5465
      %v5520 = vcombine.low %v5472, %v5479
      %v5522 = vunpack.c.l.s4 1966171168
      %v5523 = vunpack.c.0.s8 %v5522
      %v5524 = vlaneseq
      %v5525 = vshrl.u32 %v5524, 7
      %v5526 = vsub.s32 %v5523, %v5525
      %v5527 = vrot.slane %v5519, %v5526
      %v5529 = vunpack.c.l.s4 1966171168
      %v5530 = vunpack.c.0.s8 %v5529
      %v5531 = vlaneseq
      %v5532 = vshrl.u32 %v5531, 7
      %v5533 = vsub.s32 %v5530, %v5532
      %v5534 = vrot.slane %v5520, %v5533
      %v5535 = vcombine.low %v5527, %v5534
      %v5536 = vcombine.low %v5388, %v5389
      %v5537 = vcombine.low %v5396, %v5403
      %v5539 = vunpack.c.l.s4 1966171168
      %v5540 = vunpack.c.0.s8 %v5539
      %v5541 = vlaneseq
      %v5542 = vshrl.u32 %v5541, 7
      %v5543 = vsub.s32 %v5540, %v5542
      %v5544 = vrot.slane %v5536, %v5543
      %v5546 = vunpack.c.l.s4 1966171168
      %v5547 = vunpack.c.0.s8 %v5546
      %v5548 = vlaneseq
      %v5549 = vshrl.u32 %v5548, 7
      %v5550 = vsub.s32 %v5547, %v5549
      %v5551 = vrot.slane %v5537, %v5550
      %v5552 = vcombine.low %v5486, %v5511
      %v5553 = vcombine.low %v5544, %v5551
      %v5555 = vunpack.c.l.s4 1966171168
      %v5556 = vunpack.c.0.s8 %v5555
      %v5557 = vlaneseq
      %v5558 = vshrl.u32 %v5557, 7
      %v5559 = vsub.s32 %v5556, %v5558
      %v5560 = vrot.slane %v5552, %v5559
      %v5562 = vunpack.c.l.s4 1966171168
      %v5563 = vunpack.c.0.s8 %v5562
      %v5564 = vlaneseq
      %v5565 = vshrl.u32 %v5564, 7
      %v5566 = vsub.s32 %v5563, %v5565
      %v5567 = vrot.slane %v5553, %v5566
      %v5568 = vcombine.low %v5560, %v5567
      %v5569 = vcombine.low %v5404, %v5405
      %v5571 = vunpack.c.l.s4 1966171168
      %v5572 = vunpack.c.0.s8 %v5571
      %v5573 = vlaneseq
      %v5574 = vshrl.u32 %v5573, 7
      %v5575 = vsub.s32 %v5572, %v5574
      %v5576 = vrot.slane %v5569, %v5575
      %v5578 = vunpack.c.l.s4 1966171168
      %v5579 = vunpack.c.0.s8 %v5578
      %v5580 = vlaneseq
      %v5581 = vshrl.u32 %v5580, 7
      %v5582 = vsub.s32 %v5579, %v5581
      %v5583 = vrot.slane %v5576, %v5582
      %v5584 = vld [vmem:[%s4] sm:$0xff]
      %v5585 = vld [vmem:[%s4 + $0x8] sm:$0xff]
      %v5586 = vld [vmem:[%s4 + $0x10] sm:$0xff]
      %v5587 = vld [vmem:[%s4 + $0x18] sm:$0xff]
      %v5588 = vld [vmem:[%s4 + $0x20] sm:$0xff]
      %v5589 = vld [vmem:[%s4 + $0x28] sm:$0xff]
      %v5590 = vld [vmem:[%s4 + $0x30] sm:$0xff]
      %v5591 = vld [vmem:[%s4 + $0x38] sm:$0xff]
      %v5592 = vld [vmem:[%s4 + $0x40] sm:$0xff]
      %v5593 = vld [vmem:[%s4 + $0x48] sm:$0xff]
      %v5594 = vld [vmem:[%s4 + $0x50] sm:$0xff]
      %v5595 = vld [vmem:[%s4 + $0x58] sm:$0xff]
      %v5596 = vld [vmem:[%s4 + $0x60] sm:$0xff]
      %v5597 = vld [vmem:[%s4 + $0x68] sm:$0xff]
      %v5598 = vld [vmem:[%s4 + $0x70] sm:$0xff]
      %v5599 = vld [vmem:[%s4 + $0x78] sm:$0xff]
      %v5600 = vld [vmem:[%s4 + $0x80] sm:$0xff]
      %v5601 = vld [vmem:[%s4 + $0x88] sm:$0xff]
      %v5602 = vld [vmem:[%s4 + $0x90] sm:$0xff]
      %v5603 = vld [vmem:[%s4 + $0x98] sm:$0xff]
      %v5604 = vld [vmem:[%s4 + $0xa0] sm:$0xff]
      %v5605 = vld [vmem:[%s4 + $0xa8] sm:$0xff]
      %v5606 = vld [vmem:[%s4 + $0xb0] sm:$0xff]
      %v5607 = vld [vmem:[%s4 + $0xb8] sm:$0xff]
      %v5608 = vld [vmem:[%s4 + $0xc0] sm:$0xff]
      %v5609 = vld [vmem:[%s4 + $0xc8] sm:$0xff]
      %v5610 = vld [vmem:[%s4 + $0xd0] sm:$0xff]
      %v5611 = vld [vmem:[%s4 + $0xd8] sm:$0xff]
      %v5612 = vld [vmem:[%s4 + $0xe0] sm:$0xff]
      %v5613 = vld [vmem:[%s4 + $0xe8] sm:$0xff]
      %v5614 = vld [vmem:[%s4 + $0xf0] sm:$0xff]
      %v5615 = vld [vmem:[%s4 + $0xf8] sm:$0xff]
      %v5616 = vld [vmem:[%s4 + $0x100] sm:$0xff]
      %v5617 = vld [vmem:[%s4 + $0x108] sm:$0xff]
      %v5618 = vld [vmem:[%s4 + $0x110] sm:$0xff]
      %v5619 = vld [vmem:[%s4 + $0x118] sm:$0xff]
      %v5620 = vld [vmem:[%s4 + $0x120] sm:$0xff]
      %v5621 = vld [vmem:[%s4 + $0x128] sm:$0xff]
      %v5622 = vld [vmem:[%s4 + $0x130] sm:$0xff]
      %v5623 = vld [vmem:[%s4 + $0x138] sm:$0xff]
      %v5624 = vld [vmem:[%s4 + $0x140] sm:$0xff]
      %v5625 = vld [vmem:[%s4 + $0x148] sm:$0xff]
      %v5626 = vld [vmem:[%s4 + $0x150] sm:$0xff]
      %v5627 = vld [vmem:[%s4 + $0x158] sm:$0xff]
      %v5628 = vld [vmem:[%s4 + $0x160] sm:$0xff]
      %v5629 = vld [vmem:[%s4 + $0x168] sm:$0xff]
      %v5630 = vld [vmem:[%s4 + $0x170] sm:$0xff]
      %v5631 = vld [vmem:[%s4 + $0x178] sm:$0xff]
      %v5632 = vld [vmem:[%s4 + $0x180] sm:$0xff]
      %v5633 = vld [vmem:[%s4 + $0x188] sm:$0xff]
      %v5634 = vld [vmem:[%s4 + $0x190] sm:$0xff]
      %v5635 = vld [vmem:[%s4 + $0x198] sm:$0xff]
      %v5636 = vld [vmem:[%s4 + $0x1a0] sm:$0xff]
      %v5637 = vld [vmem:[%s4 + $0x1a8] sm:$0xff]
      %v5638 = vld [vmem:[%s4 + $0x1b0] sm:$0xff]
      %v5639 = vld [vmem:[%s4 + $0x1b8] sm:$0xff]
      %v5640 = vld [vmem:[%s4 + $0x1c0] sm:$0xff]
      %v5641 = vld [vmem:[%s4 + $0x1c8] sm:$0xff]
      %v5642 = vld [vmem:[%s4 + $0x1d0] sm:$0xff]
      %v5643 = vld [vmem:[%s4 + $0x1d8] sm:$0xff]
      %v5644 = vld [vmem:[%s4 + $0x1e0] sm:$0xff]
      %v5645 = vld [vmem:[%s4 + $0x1e8] sm:$0xff]
      %v5646 = vld [vmem:[%s4 + $0x1f0] sm:$0xff]
      %v5647 = vld [vmem:[%s4 + $0x1f8] sm:$0xff]
      %v5648 = vld [vmem:[%s4 + $0x200] sm:$0xff]
      %v5649 = vld [vmem:[%s4 + $0x208] sm:$0xff]
      %v5650 = vld [vmem:[%s4 + $0x210] sm:$0xff]
      %v5651 = vld [vmem:[%s4 + $0x218] sm:$0xff]
      %v5652 = vld [vmem:[%s4 + $0x220] sm:$0xff]
      %v5653 = vld [vmem:[%s4 + $0x228] sm:$0xff]
      %v5654 = vld [vmem:[%s4 + $0x230] sm:$0xff]
      %v5655 = vld [vmem:[%s4 + $0x238] sm:$0xff]
      %v5656 = vld [vmem:[%s4 + $0x240] sm:$0xff]
      %v5657 = vld [vmem:[%s4 + $0x248] sm:$0xff]
      %v5658 = vld [vmem:[%s4 + $0x250] sm:$0xff]
      %v5659 = vld [vmem:[%s4 + $0x258] sm:$0xff]
      %v5660 = vld [vmem:[%s4 + $0x260] sm:$0xff]
      %v5661 = vld [vmem:[%s4 + $0x268] sm:$0xff]
      %v5662 = vld [vmem:[%s4 + $0x270] sm:$0xff]
      %v5663 = vld [vmem:[%s4 + $0x278] sm:$0xff]
      %v5664 = vld [vmem:[%s4 + $0x280] sm:$0xff]
      %v5665 = vld [vmem:[%s4 + $0x288] sm:$0xff]
      %v5666 = vld [vmem:[%s4 + $0x290] sm:$0xff]
      %v5667 = vld [vmem:[%s4 + $0x298] sm:$0xff]
      %v5668 = vld [vmem:[%s4 + $0x2a0] sm:$0xff]
      %v5669 = vld [vmem:[%s4 + $0x2a8] sm:$0xff]
      %v5670 = vld [vmem:[%s4 + $0x2b0] sm:$0xff]
      %v5671 = vld [vmem:[%s4 + $0x2b8] sm:$0xff]
      %v5672 = vld [vmem:[%s4 + $0x2c0] sm:$0xff]
      %v5673 = vld [vmem:[%s4 + $0x2c8] sm:$0xff]
      %v5674 = vld [vmem:[%s4 + $0x2d0] sm:$0xff]
      %v5675 = vld [vmem:[%s4 + $0x2d8] sm:$0xff]
      %v5676 = vld [vmem:[%s4 + $0x2e0] sm:$0xff]
      %v5677 = vld [vmem:[%s4 + $0x2e8] sm:$0xff]
      %v5678 = vld [vmem:[%s4 + $0x2f0] sm:$0xff]
      %v5679 = vld [vmem:[%s4 + $0x2f8] sm:$0xff]
      %v5680 = vld [vmem:[%s4 + $0x300] sm:$0xff]
      %v5681 = vld [vmem:[%s4 + $0x308] sm:$0xff]
      %v5682 = vld [vmem:[%s4 + $0x310] sm:$0xff]
      %v5683 = vld [vmem:[%s4 + $0x318] sm:$0xff]
      %v5684 = vld [vmem:[%s4 + $0x320] sm:$0xff]
      %v5685 = vld [vmem:[%s4 + $0x328] sm:$0xff]
      %v5686 = vld [vmem:[%s4 + $0x330] sm:$0xff]
      %v5687 = vld [vmem:[%s4 + $0x338] sm:$0xff]
      %v5688 = vld [vmem:[%s4 + $0x340] sm:$0xff]
      %v5689 = vld [vmem:[%s4 + $0x348] sm:$0xff]
      %v5690 = vld [vmem:[%s4 + $0x350] sm:$0xff]
      %v5691 = vld [vmem:[%s4 + $0x358] sm:$0xff]
      %v5692 = vld [vmem:[%s4 + $0x360] sm:$0xff]
      %v5693 = vld [vmem:[%s4 + $0x368] sm:$0xff]
      %v5694 = vld [vmem:[%s4 + $0x370] sm:$0xff]
      %v5695 = vld [vmem:[%s4 + $0x378] sm:$0xff]
      %v5696 = vld [vmem:[%s4 + $0x380] sm:$0xff]
      %v5697 = vld [vmem:[%s4 + $0x388] sm:$0xff]
      %v5698 = vld [vmem:[%s4 + $0x390] sm:$0xff]
      %v5699 = vld [vmem:[%s4 + $0x398] sm:$0xff]
      %v5700 = vld [vmem:[%s4 + $0x3a0] sm:$0xff]
      %v5701 = vld [vmem:[%s4 + $0x3a8] sm:$0xff]
      %v5702 = vld [vmem:[%s4 + $0x3b0] sm:$0xff]
      %v5703 = vld [vmem:[%s4 + $0x3b8] sm:$0xff]
      %v5704 = vld [vmem:[%s4 + $0x3c0] sm:$0xff]
      %v5705 = vld [vmem:[%s4 + $0x3c8] sm:$0xff]
      %v5706 = vld [vmem:[%s4 + $0x3d0] sm:$0xff]
      %v5707 = vld [vmem:[%s4 + $0x3d8] sm:$0xff]
      %v5708 = vld [vmem:[%s4 + $0x3e0] sm:$0xff]
      %v5709 = vld [vmem:[%s4 + $0x3e8] sm:$0xff]
      %v5710 = vld [vmem:[%s4 + $0x3f0] sm:$0xff]
      %v5711 = vld [vmem:[%s4 + $0x3f8] sm:$0xff]
      %v5712 = vld [vmem:[%s4 + $0x400] sm:$0xff]
      %v5713 = vld [vmem:[%s4 + $0x408] sm:$0xff]
      %v5714 = vld [vmem:[%s4 + $0x410] sm:$0xff]
      %v5715 = vld [vmem:[%s4 + $0x418] sm:$0xff]
      %v5716 = vld [vmem:[%s4 + $0x420] sm:$0xff]
      %v5717 = vld [vmem:[%s4 + $0x428] sm:$0xff]
      %v5718 = vld [vmem:[%s4 + $0x430] sm:$0xff]
      %v5719 = vld [vmem:[%s4 + $0x438] sm:$0xff]
      %v5720 = vld [vmem:[%s4 + $0x440] sm:$0xff]
      %v5721 = vld [vmem:[%s4 + $0x448] sm:$0xff]
      %v5722 = vld [vmem:[%s4 + $0x450] sm:$0xff]
      %v5723 = vld [vmem:[%s4 + $0x458] sm:$0xff]
      %v5724 = vld [vmem:[%s4 + $0x460] sm:$0xff]
      %v5725 = vld [vmem:[%s4 + $0x468] sm:$0xff]
      %v5726 = vld [vmem:[%s4 + $0x470] sm:$0xff]
      %v5727 = vld [vmem:[%s4 + $0x478] sm:$0xff]
      %v5728 = vld [vmem:[%s4 + $0x480] sm:$0xff]
      %v5729 = vld [vmem:[%s4 + $0x488] sm:$0xff]
      %v5730 = vld [vmem:[%s4 + $0x490] sm:$0xff]
      %v5731 = vld [vmem:[%s4 + $0x498] sm:$0xff]
      %v5732 = vld [vmem:[%s4 + $0x4a0] sm:$0xff]
      %v5733 = vld [vmem:[%s4 + $0x4a8] sm:$0xff]
      %v5734 = vld [vmem:[%s4 + $0x4b0] sm:$0xff]
      %v5735 = vld [vmem:[%s4 + $0x4b8] sm:$0xff]
      %v5736 = vld [vmem:[%s4 + $0x4c0] sm:$0xff]
      %v5737 = vld [vmem:[%s4 + $0x4c8] sm:$0xff]
      %v5738 = vld [vmem:[%s4 + $0x4d0] sm:$0xff]
      %v5739 = vld [vmem:[%s4 + $0x4d8] sm:$0xff]
      %v5740 = vld [vmem:[%s4 + $0x4e0] sm:$0xff]
      %v5741 = vld [vmem:[%s4 + $0x4e8] sm:$0xff]
      %v5742 = vld [vmem:[%s4 + $0x4f0] sm:$0xff]
      %v5743 = vld [vmem:[%s4 + $0x4f8] sm:$0xff]
      %v5744 = vld [vmem:[%s4 + $0x500] sm:$0xff]
      %v5745 = vld [vmem:[%s4 + $0x508] sm:$0xff]
      %v5746 = vld [vmem:[%s4 + $0x510] sm:$0xff]
      %v5747 = vld [vmem:[%s4 + $0x518] sm:$0xff]
      %v5748 = vld [vmem:[%s4 + $0x520] sm:$0xff]
      %v5749 = vld [vmem:[%s4 + $0x528] sm:$0xff]
      %v5750 = vld [vmem:[%s4 + $0x530] sm:$0xff]
      %v5751 = vld [vmem:[%s4 + $0x538] sm:$0xff]
      %v5752 = vld [vmem:[%s4 + $0x540] sm:$0xff]
      %v5753 = vld [vmem:[%s4 + $0x548] sm:$0xff]
      %v5754 = vld [vmem:[%s4 + $0x550] sm:$0xff]
      %v5755 = vld [vmem:[%s4 + $0x558] sm:$0xff]
      %v5756 = vld [vmem:[%s4 + $0x560] sm:$0xff]
      %v5757 = vld [vmem:[%s4 + $0x568] sm:$0xff]
      %v5758 = vld [vmem:[%s4 + $0x570] sm:$0xff]
      %v5759 = vld [vmem:[%s4 + $0x578] sm:$0xff]
      %v5760 = vld [vmem:[%s4 + $0x580] sm:$0xff]
      %v5761 = vld [vmem:[%s4 + $0x588] sm:$0xff]
      %v5762 = vld [vmem:[%s4 + $0x590] sm:$0xff]
      %v5763 = vld [vmem:[%s4 + $0x598] sm:$0xff]
      %v5764 = vld [vmem:[%s4 + $0x5a0] sm:$0xff]
      %v5765 = vld [vmem:[%s4 + $0x5a8] sm:$0xff]
      %v5766 = vld [vmem:[%s4 + $0x5b0] sm:$0xff]
      %v5767 = vld [vmem:[%s4 + $0x5b8] sm:$0xff]
      %v5768 = vld [vmem:[%s4 + $0x5c0] sm:$0xff]
      %v5769 = vld [vmem:[%s4 + $0x5c8] sm:$0xff]
      %v5770 = vld [vmem:[%s4 + $0x5d0] sm:$0xff]
      %v5771 = vld [vmem:[%s4 + $0x5d8] sm:$0xff]
      %v5772 = vld [vmem:[%s4 + $0x5e0] sm:$0xff]
      %v5773 = vld [vmem:[%s4 + $0x5e8] sm:$0xff]
      %v5774 = vld [vmem:[%s4 + $0x5f0] sm:$0xff]
      %v5775 = vld [vmem:[%s4 + $0x5f8] sm:$0xff]
      %v5776 = vld [vmem:[%s4 + $0x600] sm:$0xff]
      %v5777 = vld [vmem:[%s4 + $0x608] sm:$0xff]
      %v5778 = vld [vmem:[%s4 + $0x610] sm:$0xff]
      %v5779 = vld [vmem:[%s4 + $0x618] sm:$0xff]
      %v5780 = vld [vmem:[%s4 + $0x620] sm:$0xff]
      %v5781 = vld [vmem:[%s4 + $0x628] sm:$0xff]
      %v5782 = vld [vmem:[%s4 + $0x630] sm:$0xff]
      %v5783 = vld [vmem:[%s4 + $0x638] sm:$0xff]
      %v5784 = vld [vmem:[%s4 + $0x640] sm:$0xff]
      %v5785 = vld [vmem:[%s4 + $0x648] sm:$0xff]
      %v5786 = vld [vmem:[%s4 + $0x650] sm:$0xff]
      %v5787 = vld [vmem:[%s4 + $0x658] sm:$0xff]
      %v5788 = vld [vmem:[%s4 + $0x660] sm:$0xff]
      %v5789 = vld [vmem:[%s4 + $0x668] sm:$0xff]
      %v5790 = vld [vmem:[%s4 + $0x670] sm:$0xff]
      %v5791 = vld [vmem:[%s4 + $0x678] sm:$0xff]
      %v5792 = vld [vmem:[%s4 + $0x680] sm:$0xff]
      %v5793 = vld [vmem:[%s4 + $0x688] sm:$0xff]
      %v5794 = vld [vmem:[%s4 + $0x690] sm:$0xff]
      %v5795 = vld [vmem:[%s4 + $0x698] sm:$0xff]
      %v5796 = vld [vmem:[%s4 + $0x6a0] sm:$0xff]
      %v5797 = vld [vmem:[%s4 + $0x6a8] sm:$0xff]
      %v5798 = vld [vmem:[%s4 + $0x6b0] sm:$0xff]
      %v5799 = vld [vmem:[%s4 + $0x6b8] sm:$0xff]
      %v5800 = vld [vmem:[%s4 + $0x6c0] sm:$0xff]
      %v5801 = vld [vmem:[%s4 + $0x6c8] sm:$0xff]
      %v5802 = vld [vmem:[%s4 + $0x6d0] sm:$0xff]
      %v5803 = vld [vmem:[%s4 + $0x6d8] sm:$0xff]
      %v5804 = vld [vmem:[%s4 + $0x6e0] sm:$0xff]
      %v5805 = vld [vmem:[%s4 + $0x6e8] sm:$0xff]
      %v5806 = vld [vmem:[%s4 + $0x6f0] sm:$0xff]
      %v5807 = vld [vmem:[%s4 + $0x6f8] sm:$0xff]
      %v5808 = vld [vmem:[%s4 + $0x700] sm:$0xff]
      %v5809 = vld [vmem:[%s4 + $0x708] sm:$0xff]
      %v5810 = vld [vmem:[%s4 + $0x710] sm:$0xff]
      %v5811 = vld [vmem:[%s4 + $0x718] sm:$0xff]
      %v5812 = vld [vmem:[%s4 + $0x720] sm:$0xff]
      %v5813 = vld [vmem:[%s4 + $0x728] sm:$0xff]
      %v5814 = vld [vmem:[%s4 + $0x730] sm:$0xff]
      %v5815 = vld [vmem:[%s4 + $0x738] sm:$0xff]
      %v5816 = vld [vmem:[%s4 + $0x740] sm:$0xff]
      %v5817 = vld [vmem:[%s4 + $0x748] sm:$0xff]
      %v5818 = vld [vmem:[%s4 + $0x750] sm:$0xff]
      %v5819 = vld [vmem:[%s4 + $0x758] sm:$0xff]
      %v5820 = vld [vmem:[%s4 + $0x760] sm:$0xff]
      %v5821 = vld [vmem:[%s4 + $0x768] sm:$0xff]
      %v5822 = vld [vmem:[%s4 + $0x770] sm:$0xff]
      %v5823 = vld [vmem:[%s4 + $0x778] sm:$0xff]
      %v5824 = vld [vmem:[%s4 + $0x780] sm:$0xff]
      %v5825 = vld [vmem:[%s4 + $0x788] sm:$0xff]
      %v5826 = vld [vmem:[%s4 + $0x790] sm:$0xff]
      %v5827 = vld [vmem:[%s4 + $0x798] sm:$0xff]
      %v5828 = vld [vmem:[%s4 + $0x7a0] sm:$0xff]
      %v5829 = vld [vmem:[%s4 + $0x7a8] sm:$0xff]
      %v5830 = vld [vmem:[%s4 + $0x7b0] sm:$0xff]
      %v5831 = vld [vmem:[%s4 + $0x7b8] sm:$0xff]
      %v5832 = vld [vmem:[%s4 + $0x7c0] sm:$0xff]
      %v5833 = vld [vmem:[%s4 + $0x7c8] sm:$0xff]
      %v5834 = vld [vmem:[%s4 + $0x7d0] sm:$0xff]
      %v5835 = vld [vmem:[%s4 + $0x7d8] sm:$0xff]
      %v5836 = vld [vmem:[%s4 + $0x7e0] sm:$0xff]
      %v5837 = vld [vmem:[%s4 + $0x7e8] sm:$0xff]
      %v5838 = vld [vmem:[%s4 + $0x7f0] sm:$0xff]
      %v5839 = vld [vmem:[%s4 + $0x7f8] sm:$0xff]
      %v5840 = vld [vmem:[%s4 + $0x800] sm:$0xff]
      %v5841 = vld [vmem:[%s4 + $0x808] sm:$0xff]
      %v5842 = vld [vmem:[%s4 + $0x810] sm:$0xff]
      %v5843 = vld [vmem:[%s4 + $0x818] sm:$0xff]
      %v5844 = vld [vmem:[%s4 + $0x820] sm:$0xff]
      %v5845 = vld [vmem:[%s4 + $0x828] sm:$0xff]
      %v5846 = vld [vmem:[%s4 + $0x830] sm:$0xff]
      %v5847 = vld [vmem:[%s4 + $0x838] sm:$0xff]
      %v5848 = vld [vmem:[%s4 + $0x840] sm:$0xff]
      %v5849 = vld [vmem:[%s4 + $0x848] sm:$0xff]
      %v5850 = vld [vmem:[%s4 + $0x850] sm:$0xff]
      %v5851 = vld [vmem:[%s4 + $0x858] sm:$0xff]
      %v5852 = vld [vmem:[%s4 + $0x860] sm:$0xff]
      %v5853 = vld [vmem:[%s4 + $0x868] sm:$0xff]
      %v5854 = vld [vmem:[%s4 + $0x870] sm:$0xff]
      %v5855 = vld [vmem:[%s4 + $0x878] sm:$0xff]
      %v5856 = vld [vmem:[%s4 + $0x880] sm:$0xff]
      %v5857 = vld [vmem:[%s4 + $0x888] sm:$0xff]
      %v5858 = vld [vmem:[%s4 + $0x890] sm:$0xff]
      %v5859 = vld [vmem:[%s4 + $0x898] sm:$0xff]
      %v5860 = vld [vmem:[%s4 + $0x8a0] sm:$0xff]
      %v5861 = vld [vmem:[%s4 + $0x8a8] sm:$0xff]
      %v5862 = vld [vmem:[%s4 + $0x8b0] sm:$0xff]
      %v5863 = vld [vmem:[%s4 + $0x8b8] sm:$0xff]
      %v5864 = vld [vmem:[%s4 + $0x8c0] sm:$0xff]
      %v5865 = vld [vmem:[%s4 + $0x8c8] sm:$0xff]
      %v5866 = vld [vmem:[%s4 + $0x8d0] sm:$0xff]
      %v5867 = vld [vmem:[%s4 + $0x8d8] sm:$0xff]
      %v5868 = vld [vmem:[%s4 + $0x8e0] sm:$0xff]
      %v5869 = vld [vmem:[%s4 + $0x8e8] sm:$0xff]
      %v5870 = vld [vmem:[%s4 + $0x8f0] sm:$0xff]
      %v5871 = vld [vmem:[%s4 + $0x8f8] sm:$0xff]
      %v5872 = vld [vmem:[%s8] sm:$0x3]
      %v5874 = vlaneseq
      %v5875 = vshrl.u32 %v5874, 7
      %v5876 = vsub.s32 0, %v5875
      %v5877 = vrot.slane %v5872, %v5876
      %v5878 = vlaneseq
      %v5879 = vshrl.u32 %v5878, 7
      %v5880 = vsub.s32 1, %v5879
      %v5881 = vrot.slane %v5872, %v5880
      %v5884 = vcombine.low %v5454, %v5535
      %v5885 = vcombine.high %v5454, %v5535
      %v5887 = vunpack.c.l.s4 1966171168
      %v5888 = vunpack.c.0.s8 %v5887
      %v5889 = vlaneseq
      %v5890 = vshrl.u32 %v5889, 7
      %v5891 = vsub.s32 %v5888, %v5890
      %v5892 = vrot.slane %v5884, %v5891
      %v5894 = vunpack.c.l.s4 1966171168
      %v5895 = vunpack.c.0.s8 %v5894
      %v5896 = vlaneseq
      %v5897 = vshrl.u32 %v5896, 7
      %v5898 = vsub.s32 %v5895, %v5897
      %v5899 = vrot.slane %v5885, %v5898
      %v5900 = vcombine.high %v5892, %v5892
      %v5901 = vcombine.high %v5899, %v5899
      %v5903 = vunpack.c.l.s4 1966171168
      %v5904 = vunpack.c.0.s8 %v5903
      %v5905 = vlaneseq
      %v5906 = vshrl.u32 %v5905, 7
      %v5907 = vsub.s32 %v5904, %v5906
      %v5908 = vrot.slane %v5892, %v5907
      %v5910 = vunpack.c.l.s4 1966171168
      %v5911 = vunpack.c.0.s8 %v5910
      %v5912 = vlaneseq
      %v5913 = vshrl.u32 %v5912, 7
      %v5914 = vsub.s32 %v5911, %v5913
      %v5915 = vrot.slane %v5899, %v5914
      %v5917 = vunpack.c.l.s4 1966171168
      %v5918 = vunpack.c.0.s8 %v5917
      %v5919 = vlaneseq
      %v5920 = vshrl.u32 %v5919, 7
      %v5921 = vsub.s32 %v5918, %v5920
      %v5922 = vrot.slane %v5900, %v5921
      %v5924 = vunpack.c.l.s4 1966171168
      %v5925 = vunpack.c.0.s8 %v5924
      %v5926 = vlaneseq
      %v5927 = vshrl.u32 %v5926, 7
      %v5928 = vsub.s32 %v5925, %v5927
      %v5929 = vrot.slane %v5901, %v5928
      %v5930 = vcombine.high %v5908, %v5908
      %v5931 = vcombine.high %v5915, %v5915
      %v5932 = vcombine.high %v5922, %v5922
      %v5933 = vcombine.high %v5929, %v5929
      %v5934 = vcombine.low %v5503, %v5568
      %v5935 = vcombine.high %v5503, %v5568
      %v5937 = vunpack.c.l.s4 1966171168
      %v5938 = vunpack.c.0.s8 %v5937
      %v5939 = vlaneseq
      %v5940 = vshrl.u32 %v5939, 7
      %v5941 = vsub.s32 %v5938, %v5940
      %v5942 = vrot.slane %v5934, %v5941
      %v5944 = vunpack.c.l.s4 1966171168
      %v5945 = vunpack.c.0.s8 %v5944
      %v5946 = vlaneseq
      %v5947 = vshrl.u32 %v5946, 7
      %v5948 = vsub.s32 %v5945, %v5947
      %v5949 = vrot.slane %v5935, %v5948
      %v5950 = vcombine.high %v5942, %v5942
      %v5951 = vcombine.high %v5949, %v5949
      %v5953 = vunpack.c.l.s4 1966171168
      %v5954 = vunpack.c.0.s8 %v5953
      %v5955 = vlaneseq
      %v5956 = vshrl.u32 %v5955, 7
      %v5957 = vsub.s32 %v5954, %v5956
      %v5958 = vrot.slane %v5942, %v5957
      %v5960 = vunpack.c.l.s4 1966171168
      %v5961 = vunpack.c.0.s8 %v5960
      %v5962 = vlaneseq
      %v5963 = vshrl.u32 %v5962, 7
      %v5964 = vsub.s32 %v5961, %v5963
      %v5965 = vrot.slane %v5949, %v5964
      %v5967 = vunpack.c.l.s4 1966171168
      %v5968 = vunpack.c.0.s8 %v5967
      %v5969 = vlaneseq
      %v5970 = vshrl.u32 %v5969, 7
      %v5971 = vsub.s32 %v5968, %v5970
      %v5972 = vrot.slane %v5950, %v5971
      %v5974 = vunpack.c.l.s4 1966171168
      %v5975 = vunpack.c.0.s8 %v5974
      %v5976 = vlaneseq
      %v5977 = vshrl.u32 %v5976, 7
      %v5978 = vsub.s32 %v5975, %v5977
      %v5979 = vrot.slane %v5951, %v5978
      %v5980 = vcombine.high %v5958, %v5958
      %v5981 = vcombine.high %v5965, %v5965
      %v5982 = vcombine.high %v5972, %v5972
      %v5983 = vcombine.high %v5979, %v5979
      %v5984 = vcombine.low %v5518, %v5583
      %v5986 = vunpack.c.l.s4 1966171168
      %v5987 = vunpack.c.0.s8 %v5986
      %v5988 = vlaneseq
      %v5989 = vshrl.u32 %v5988, 7
      %v5990 = vsub.s32 %v5987, %v5989
      %v5991 = vrot.slane %v5984, %v5990
      %v5992 = vcombine.high %v5991, %v5991
      %v5994 = vunpack.c.l.s4 1966171168
      %v5995 = vunpack.c.0.s8 %v5994
      %v5996 = vlaneseq
      %v5997 = vshrl.u32 %v5996, 7
      %v5998 = vsub.s32 %v5995, %v5997
      %v5999 = vrot.slane %v5991, %v5998
      %v6001 = vunpack.c.l.s4 1966171168
      %v6002 = vunpack.c.0.s8 %v6001
      %v6003 = vlaneseq
      %v6004 = vshrl.u32 %v6003, 7
      %v6005 = vsub.s32 %v6002, %v6004
      %v6006 = vrot.slane %v5992, %v6005
      %v6313 = vunpack.c.l.b16 %v5584
      %v6314 = vunpack.c.h.b16 %v5584
      %v6315 = vunpack.c.l.b16 %v5585
      %v6316 = vunpack.c.h.b16 %v5585
      %v6317 = vunpack.c.l.b16 %v5586
      %v6318 = vunpack.c.h.b16 %v5586
      %v6319 = vunpack.c.l.b16 %v5587
      %v6320 = vunpack.c.h.b16 %v5587
      %v6321 = vunpack.c.l.b16 %v5588
      %v6322 = vunpack.c.h.b16 %v5588
      %v6323 = vunpack.c.l.b16 %v5589
      %v6324 = vunpack.c.h.b16 %v5589
      %v6325 = vunpack.c.l.b16 %v5590
      %v6326 = vunpack.c.h.b16 %v5590
      %v6327 = vunpack.c.l.b16 %v5591
      %v6328 = vunpack.c.h.b16 %v5591
      %v6329 = vunpack.c.l.b16 %v5592
      %v6330 = vunpack.c.h.b16 %v5592
      %v6331 = vunpack.c.l.b16 %v5593
      %v6332 = vunpack.c.h.b16 %v5593
      %v6333 = vunpack.c.l.b16 %v5594
      %v6334 = vunpack.c.h.b16 %v5594
      %v6335 = vunpack.c.l.b16 %v5595
      %v6336 = vunpack.c.h.b16 %v5595
      %v6337 = vunpack.c.l.b16 %v5596
      %v6338 = vunpack.c.h.b16 %v5596
      %v6339 = vunpack.c.l.b16 %v5597
      %v6340 = vunpack.c.h.b16 %v5597
      %v6341 = vunpack.c.l.b16 %v5598
      %v6342 = vunpack.c.h.b16 %v5598
      %v6343 = vunpack.c.l.b16 %v5599
      %v6344 = vunpack.c.h.b16 %v5599
      %v6345 = vunpack.c.l.b16 %v5600
      %v6346 = vunpack.c.h.b16 %v5600
      %v6347 = vunpack.c.l.b16 %v5601
      %v6348 = vunpack.c.h.b16 %v5601
      %v6349 = vunpack.c.l.b16 %v5602
      %v6350 = vunpack.c.h.b16 %v5602
      %v6351 = vunpack.c.l.b16 %v5603
      %v6352 = vunpack.c.h.b16 %v5603
      %v6353 = vunpack.c.l.b16 %v5604
      %v6354 = vunpack.c.h.b16 %v5604
      %v6355 = vunpack.c.l.b16 %v5605
      %v6356 = vunpack.c.h.b16 %v5605
      %v6357 = vunpack.c.l.b16 %v5606
      %v6358 = vunpack.c.h.b16 %v5606
      %v6359 = vunpack.c.l.b16 %v5607
      %v6360 = vunpack.c.h.b16 %v5607
      %v6361 = vunpack.c.l.b16 %v5608
      %v6362 = vunpack.c.h.b16 %v5608
      %v6363 = vunpack.c.l.b16 %v5609
      %v6364 = vunpack.c.h.b16 %v5609
      %v6365 = vunpack.c.l.b16 %v5610
      %v6366 = vunpack.c.h.b16 %v5610
      %v6367 = vunpack.c.l.b16 %v5611
      %v6368 = vunpack.c.h.b16 %v5611
      %v6369 = vunpack.c.l.b16 %v5612
      %v6370 = vunpack.c.h.b16 %v5612
      %v6371 = vunpack.c.l.b16 %v5613
      %v6372 = vunpack.c.h.b16 %v5613
      %v6373 = vunpack.c.l.b16 %v5614
      %v6374 = vunpack.c.h.b16 %v5614
      %v6375 = vunpack.c.l.b16 %v5615
      %v6376 = vunpack.c.h.b16 %v5615
      %v6377 = vunpack.c.l.b16 %v5616
      %v6378 = vunpack.c.h.b16 %v5616
      %v6379 = vunpack.c.l.b16 %v5617
      %v6380 = vunpack.c.h.b16 %v5617
      %v6381 = vunpack.c.l.b16 %v5618
      %v6382 = vunpack.c.h.b16 %v5618
      %v6383 = vunpack.c.l.b16 %v5619
      %v6384 = vunpack.c.h.b16 %v5619
      %v6385 = vunpack.c.l.b16 %v5620
      %v6386 = vunpack.c.h.b16 %v5620
      %v6387 = vunpack.c.l.b16 %v5621
      %v6388 = vunpack.c.h.b16 %v5621
      %v6389 = vunpack.c.l.b16 %v5622
      %v6390 = vunpack.c.h.b16 %v5622
      %v6391 = vunpack.c.l.b16 %v5623
      %v6392 = vunpack.c.h.b16 %v5623
      %v6393 = vunpack.c.l.b16 %v5624
      %v6394 = vunpack.c.h.b16 %v5624
      %v6395 = vunpack.c.l.b16 %v5625
      %v6396 = vunpack.c.h.b16 %v5625
      %v6397 = vunpack.c.l.b16 %v5626
      %v6398 = vunpack.c.h.b16 %v5626
      %v6399 = vunpack.c.l.b16 %v5627
      %v6400 = vunpack.c.h.b16 %v5627
      %v6401 = vunpack.c.l.b16 %v5628
      %v6402 = vunpack.c.h.b16 %v5628
      %v6403 = vunpack.c.l.b16 %v5629
      %v6404 = vunpack.c.h.b16 %v5629
      %v6405 = vunpack.c.l.b16 %v5630
      %v6406 = vunpack.c.h.b16 %v5630
      %v6407 = vunpack.c.l.b16 %v5631
      %v6408 = vunpack.c.h.b16 %v5631
      %v6409 = vunpack.c.l.b16 %v5632
      %v6410 = vunpack.c.h.b16 %v5632
      %v6411 = vunpack.c.l.b16 %v5633
      %v6412 = vunpack.c.h.b16 %v5633
      %v6413 = vunpack.c.l.b16 %v5634
      %v6414 = vunpack.c.h.b16 %v5634
      %v6415 = vunpack.c.l.b16 %v5635
      %v6416 = vunpack.c.h.b16 %v5635
      %v6417 = vunpack.c.l.b16 %v5636
      %v6418 = vunpack.c.h.b16 %v5636
      %v6419 = vunpack.c.l.b16 %v5637
      %v6420 = vunpack.c.h.b16 %v5637
      %v6421 = vunpack.c.l.b16 %v5638
      %v6422 = vunpack.c.h.b16 %v5638
      %v6423 = vunpack.c.l.b16 %v5639
      %v6424 = vunpack.c.h.b16 %v5639
      %v6425 = vunpack.c.l.b16 %v5640
      %v6426 = vunpack.c.h.b16 %v5640
      %v6427 = vunpack.c.l.b16 %v5641
      %v6428 = vunpack.c.h.b16 %v5641
      %v6429 = vunpack.c.l.b16 %v5642
      %v6430 = vunpack.c.h.b16 %v5642
      %v6431 = vunpack.c.l.b16 %v5643
      %v6432 = vunpack.c.h.b16 %v5643
      %v6433 = vunpack.c.l.b16 %v5644
      %v6434 = vunpack.c.h.b16 %v5644
      %v6435 = vunpack.c.l.b16 %v5645
      %v6436 = vunpack.c.h.b16 %v5645
      %v6437 = vunpack.c.l.b16 %v5646
      %v6438 = vunpack.c.h.b16 %v5646
      %v6439 = vunpack.c.l.b16 %v5647
      %v6440 = vunpack.c.h.b16 %v5647
      %v6441 = vunpack.c.l.b16 %v5648
      %v6442 = vunpack.c.h.b16 %v5648
      %v6443 = vunpack.c.l.b16 %v5649
      %v6444 = vunpack.c.h.b16 %v5649
      %v6445 = vunpack.c.l.b16 %v5650
      %v6446 = vunpack.c.h.b16 %v5650
      %v6447 = vunpack.c.l.b16 %v5651
      %v6448 = vunpack.c.h.b16 %v5651
      %v6449 = vunpack.c.l.b16 %v5652
      %v6450 = vunpack.c.h.b16 %v5652
      %v6451 = vunpack.c.l.b16 %v5653
      %v6452 = vunpack.c.h.b16 %v5653
      %v6453 = vunpack.c.l.b16 %v5654
      %v6454 = vunpack.c.h.b16 %v5654
      %v6455 = vunpack.c.l.b16 %v5655
      %v6456 = vunpack.c.h.b16 %v5655
      %v6457 = vunpack.c.l.b16 %v5656
      %v6458 = vunpack.c.h.b16 %v5656
      %v6459 = vunpack.c.l.b16 %v5657
      %v6460 = vunpack.c.h.b16 %v5657
      %v6461 = vunpack.c.l.b16 %v5658
      %v6462 = vunpack.c.h.b16 %v5658
      %v6463 = vunpack.c.l.b16 %v5659
      %v6464 = vunpack.c.h.b16 %v5659
      %v6465 = vunpack.c.l.b16 %v5660
      %v6466 = vunpack.c.h.b16 %v5660
      %v6467 = vunpack.c.l.b16 %v5661
      %v6468 = vunpack.c.h.b16 %v5661
      %v6469 = vunpack.c.l.b16 %v5662
      %v6470 = vunpack.c.h.b16 %v5662
      %v6471 = vunpack.c.l.b16 %v5663
      %v6472 = vunpack.c.h.b16 %v5663
      %v6473 = vunpack.c.l.b16 %v5664
      %v6474 = vunpack.c.h.b16 %v5664
      %v6475 = vunpack.c.l.b16 %v5665
      %v6476 = vunpack.c.h.b16 %v5665
      %v6477 = vunpack.c.l.b16 %v5666
      %v6478 = vunpack.c.h.b16 %v5666
      %v6479 = vunpack.c.l.b16 %v5667
      %v6480 = vunpack.c.h.b16 %v5667
      %v6481 = vunpack.c.l.b16 %v5668
      %v6482 = vunpack.c.h.b16 %v5668
      %v6483 = vunpack.c.l.b16 %v5669
      %v6484 = vunpack.c.h.b16 %v5669
      %v6485 = vunpack.c.l.b16 %v5670
      %v6486 = vunpack.c.h.b16 %v5670
      %v6487 = vunpack.c.l.b16 %v5671
      %v6488 = vunpack.c.h.b16 %v5671
      %v6489 = vunpack.c.l.b16 %v5672
      %v6490 = vunpack.c.h.b16 %v5672
      %v6491 = vunpack.c.l.b16 %v5673
      %v6492 = vunpack.c.h.b16 %v5673
      %v6493 = vunpack.c.l.b16 %v5674
      %v6494 = vunpack.c.h.b16 %v5674
      %v6495 = vunpack.c.l.b16 %v5675
      %v6496 = vunpack.c.h.b16 %v5675
      %v6497 = vunpack.c.l.b16 %v5676
      %v6498 = vunpack.c.h.b16 %v5676
      %v6499 = vunpack.c.l.b16 %v5677
      %v6500 = vunpack.c.h.b16 %v5677
      %v6501 = vunpack.c.l.b16 %v5678
      %v6502 = vunpack.c.h.b16 %v5678
      %v6503 = vunpack.c.l.b16 %v5679
      %v6504 = vunpack.c.h.b16 %v5679
      %v6505 = vunpack.c.l.b16 %v5680
      %v6506 = vunpack.c.h.b16 %v5680
      %v6507 = vunpack.c.l.b16 %v5681
      %v6508 = vunpack.c.h.b16 %v5681
      %v6509 = vunpack.c.l.b16 %v5682
      %v6510 = vunpack.c.h.b16 %v5682
      %v6511 = vunpack.c.l.b16 %v5683
      %v6512 = vunpack.c.h.b16 %v5683
      %v6513 = vunpack.c.l.b16 %v5684
      %v6514 = vunpack.c.h.b16 %v5684
      %v6515 = vunpack.c.l.b16 %v5685
      %v6516 = vunpack.c.h.b16 %v5685
      %v6517 = vunpack.c.l.b16 %v5686
      %v6518 = vunpack.c.h.b16 %v5686
      %v6519 = vunpack.c.l.b16 %v5687
      %v6520 = vunpack.c.h.b16 %v5687
      %v6521 = vunpack.c.l.b16 %v5688
      %v6522 = vunpack.c.h.b16 %v5688
      %v6523 = vunpack.c.l.b16 %v5689
      %v6524 = vunpack.c.h.b16 %v5689
      %v6525 = vunpack.c.l.b16 %v5690
      %v6526 = vunpack.c.h.b16 %v5690
      %v6527 = vunpack.c.l.b16 %v5691
      %v6528 = vunpack.c.h.b16 %v5691
      %v6529 = vunpack.c.l.b16 %v5692
      %v6530 = vunpack.c.h.b16 %v5692
      %v6531 = vunpack.c.l.b16 %v5693
      %v6532 = vunpack.c.h.b16 %v5693
      %v6533 = vunpack.c.l.b16 %v5694
      %v6534 = vunpack.c.h.b16 %v5694
      %v6535 = vunpack.c.l.b16 %v5695
      %v6536 = vunpack.c.h.b16 %v5695
      %v6537 = vunpack.c.l.b16 %v5696
      %v6538 = vunpack.c.h.b16 %v5696
      %v6539 = vunpack.c.l.b16 %v5697
      %v6540 = vunpack.c.h.b16 %v5697
      %v6541 = vunpack.c.l.b16 %v5698
      %v6542 = vunpack.c.h.b16 %v5698
      %v6543 = vunpack.c.l.b16 %v5699
      %v6544 = vunpack.c.h.b16 %v5699
      %v6545 = vunpack.c.l.b16 %v5700
      %v6546 = vunpack.c.h.b16 %v5700
      %v6547 = vunpack.c.l.b16 %v5701
      %v6548 = vunpack.c.h.b16 %v5701
      %v6549 = vunpack.c.l.b16 %v5702
      %v6550 = vunpack.c.h.b16 %v5702
      %v6551 = vunpack.c.l.b16 %v5703
      %v6552 = vunpack.c.h.b16 %v5703
      %v6553 = vunpack.c.l.b16 %v5704
      %v6554 = vunpack.c.h.b16 %v5704
      %v6555 = vunpack.c.l.b16 %v5705
      %v6556 = vunpack.c.h.b16 %v5705
      %v6557 = vunpack.c.l.b16 %v5706
      %v6558 = vunpack.c.h.b16 %v5706
      %v6559 = vunpack.c.l.b16 %v5707
      %v6560 = vunpack.c.h.b16 %v5707
      %v6561 = vunpack.c.l.b16 %v5708
      %v6562 = vunpack.c.h.b16 %v5708
      %v6563 = vunpack.c.l.b16 %v5709
      %v6564 = vunpack.c.h.b16 %v5709
      %v6565 = vunpack.c.l.b16 %v5710
      %v6566 = vunpack.c.h.b16 %v5710
      %v6567 = vunpack.c.l.b16 %v5711
      %v6568 = vunpack.c.h.b16 %v5711
      %v6569 = vunpack.c.l.b16 %v5712
      %v6570 = vunpack.c.h.b16 %v5712
      %v6571 = vunpack.c.l.b16 %v5713
      %v6572 = vunpack.c.h.b16 %v5713
      %v6573 = vunpack.c.l.b16 %v5714
      %v6574 = vunpack.c.h.b16 %v5714
      %v6575 = vunpack.c.l.b16 %v5715
      %v6576 = vunpack.c.h.b16 %v5715
      %v6577 = vunpack.c.l.b16 %v5716
      %v6578 = vunpack.c.h.b16 %v5716
      %v6579 = vunpack.c.l.b16 %v5717
      %v6580 = vunpack.c.h.b16 %v5717
      %v6581 = vunpack.c.l.b16 %v5718
      %v6582 = vunpack.c.h.b16 %v5718
      %v6583 = vunpack.c.l.b16 %v5719
      %v6584 = vunpack.c.h.b16 %v5719
      %v6585 = vunpack.c.l.b16 %v5720
      %v6586 = vunpack.c.h.b16 %v5720
      %v6587 = vunpack.c.l.b16 %v5721
      %v6588 = vunpack.c.h.b16 %v5721
      %v6589 = vunpack.c.l.b16 %v5722
      %v6590 = vunpack.c.h.b16 %v5722
      %v6591 = vunpack.c.l.b16 %v5723
      %v6592 = vunpack.c.h.b16 %v5723
      %v6593 = vunpack.c.l.b16 %v5724
      %v6594 = vunpack.c.h.b16 %v5724
      %v6595 = vunpack.c.l.b16 %v5725
      %v6596 = vunpack.c.h.b16 %v5725
      %v6597 = vunpack.c.l.b16 %v5726
      %v6598 = vunpack.c.h.b16 %v5726
      %v6599 = vunpack.c.l.b16 %v5727
      %v6600 = vunpack.c.h.b16 %v5727
      %v6601 = vunpack.c.l.b16 %v5728
      %v6602 = vunpack.c.h.b16 %v5728
      %v6603 = vunpack.c.l.b16 %v5729
      %v6604 = vunpack.c.h.b16 %v5729
      %v6605 = vunpack.c.l.b16 %v5730
      %v6606 = vunpack.c.h.b16 %v5730
      %v6607 = vunpack.c.l.b16 %v5731
      %v6608 = vunpack.c.h.b16 %v5731
      %v6609 = vunpack.c.l.b16 %v5732
      %v6610 = vunpack.c.h.b16 %v5732
      %v6611 = vunpack.c.l.b16 %v5733
      %v6612 = vunpack.c.h.b16 %v5733
      %v6613 = vunpack.c.l.b16 %v5734
      %v6614 = vunpack.c.h.b16 %v5734
      %v6615 = vunpack.c.l.b16 %v5735
      %v6616 = vunpack.c.h.b16 %v5735
      %v6617 = vunpack.c.l.b16 %v5736
      %v6618 = vunpack.c.h.b16 %v5736
      %v6619 = vunpack.c.l.b16 %v5737
      %v6620 = vunpack.c.h.b16 %v5737
      %v6621 = vunpack.c.l.b16 %v5738
      %v6622 = vunpack.c.h.b16 %v5738
      %v6623 = vunpack.c.l.b16 %v5739
      %v6624 = vunpack.c.h.b16 %v5739
      %v6625 = vunpack.c.l.b16 %v5740
      %v6626 = vunpack.c.h.b16 %v5740
      %v6627 = vunpack.c.l.b16 %v5741
      %v6628 = vunpack.c.h.b16 %v5741
      %v6629 = vunpack.c.l.b16 %v5742
      %v6630 = vunpack.c.h.b16 %v5742
      %v6631 = vunpack.c.l.b16 %v5743
      %v6632 = vunpack.c.h.b16 %v5743
      %v6633 = vunpack.c.l.b16 %v5744
      %v6634 = vunpack.c.h.b16 %v5744
      %v6635 = vunpack.c.l.b16 %v5745
      %v6636 = vunpack.c.h.b16 %v5745
      %v6637 = vunpack.c.l.b16 %v5746
      %v6638 = vunpack.c.h.b16 %v5746
      %v6639 = vunpack.c.l.b16 %v5747
      %v6640 = vunpack.c.h.b16 %v5747
      %v6641 = vunpack.c.l.b16 %v5748
      %v6642 = vunpack.c.h.b16 %v5748
      %v6643 = vunpack.c.l.b16 %v5749
      %v6644 = vunpack.c.h.b16 %v5749
      %v6645 = vunpack.c.l.b16 %v5750
      %v6646 = vunpack.c.h.b16 %v5750
      %v6647 = vunpack.c.l.b16 %v5751
      %v6648 = vunpack.c.h.b16 %v5751
      %v6649 = vunpack.c.l.b16 %v5752
      %v6650 = vunpack.c.h.b16 %v5752
      %v6651 = vunpack.c.l.b16 %v5753
      %v6652 = vunpack.c.h.b16 %v5753
      %v6653 = vunpack.c.l.b16 %v5754
      %v6654 = vunpack.c.h.b16 %v5754
      %v6655 = vunpack.c.l.b16 %v5755
      %v6656 = vunpack.c.h.b16 %v5755
      %v6657 = vunpack.c.l.b16 %v5756
      %v6658 = vunpack.c.h.b16 %v5756
      %v6659 = vunpack.c.l.b16 %v5757
      %v6660 = vunpack.c.h.b16 %v5757
      %v6661 = vunpack.c.l.b16 %v5758
      %v6662 = vunpack.c.h.b16 %v5758
      %v6663 = vunpack.c.l.b16 %v5759
      %v6664 = vunpack.c.h.b16 %v5759
      %v6665 = vunpack.c.l.b16 %v5760
      %v6666 = vunpack.c.h.b16 %v5760
      %v6667 = vunpack.c.l.b16 %v5761
      %v6668 = vunpack.c.h.b16 %v5761
      %v6669 = vunpack.c.l.b16 %v5762
      %v6670 = vunpack.c.h.b16 %v5762
      %v6671 = vunpack.c.l.b16 %v5763
      %v6672 = vunpack.c.h.b16 %v5763
      %v6673 = vunpack.c.l.b16 %v5764
      %v6674 = vunpack.c.h.b16 %v5764
      %v6675 = vunpack.c.l.b16 %v5765
      %v6676 = vunpack.c.h.b16 %v5765
      %v6677 = vunpack.c.l.b16 %v5766
      %v6678 = vunpack.c.h.b16 %v5766
      %v6679 = vunpack.c.l.b16 %v5767
      %v6680 = vunpack.c.h.b16 %v5767
      %v6681 = vunpack.c.l.b16 %v5768
      %v6682 = vunpack.c.h.b16 %v5768
      %v6683 = vunpack.c.l.b16 %v5769
      %v6684 = vunpack.c.h.b16 %v5769
      %v6685 = vunpack.c.l.b16 %v5770
      %v6686 = vunpack.c.h.b16 %v5770
      %v6687 = vunpack.c.l.b16 %v5771
      %v6688 = vunpack.c.h.b16 %v5771
      %v6689 = vunpack.c.l.b16 %v5772
      %v6690 = vunpack.c.h.b16 %v5772
      %v6691 = vunpack.c.l.b16 %v5773
      %v6692 = vunpack.c.h.b16 %v5773
      %v6693 = vunpack.c.l.b16 %v5774
      %v6694 = vunpack.c.h.b16 %v5774
      %v6695 = vunpack.c.l.b16 %v5775
      %v6696 = vunpack.c.h.b16 %v5775
      %v6697 = vunpack.c.l.b16 %v5776
      %v6698 = vunpack.c.h.b16 %v5776
      %v6699 = vunpack.c.l.b16 %v5777
      %v6700 = vunpack.c.h.b16 %v5777
      %v6701 = vunpack.c.l.b16 %v5778
      %v6702 = vunpack.c.h.b16 %v5778
      %v6703 = vunpack.c.l.b16 %v5779
      %v6704 = vunpack.c.h.b16 %v5779
      %v6705 = vunpack.c.l.b16 %v5780
      %v6706 = vunpack.c.h.b16 %v5780
      %v6707 = vunpack.c.l.b16 %v5781
      %v6708 = vunpack.c.h.b16 %v5781
      %v6709 = vunpack.c.l.b16 %v5782
      %v6710 = vunpack.c.h.b16 %v5782
      %v6711 = vunpack.c.l.b16 %v5783
      %v6712 = vunpack.c.h.b16 %v5783
      %v6713 = vunpack.c.l.b16 %v5784
      %v6714 = vunpack.c.h.b16 %v5784
      %v6715 = vunpack.c.l.b16 %v5785
      %v6716 = vunpack.c.h.b16 %v5785
      %v6717 = vunpack.c.l.b16 %v5786
      %v6718 = vunpack.c.h.b16 %v5786
      %v6719 = vunpack.c.l.b16 %v5787
      %v6720 = vunpack.c.h.b16 %v5787
      %v6721 = vunpack.c.l.b16 %v5788
      %v6722 = vunpack.c.h.b16 %v5788
      %v6723 = vunpack.c.l.b16 %v5789
      %v6724 = vunpack.c.h.b16 %v5789
      %v6725 = vunpack.c.l.b16 %v5790
      %v6726 = vunpack.c.h.b16 %v5790
      %v6727 = vunpack.c.l.b16 %v5791
      %v6728 = vunpack.c.h.b16 %v5791
      %v6729 = vunpack.c.l.b16 %v5792
      %v6730 = vunpack.c.h.b16 %v5792
      %v6731 = vunpack.c.l.b16 %v5793
      %v6732 = vunpack.c.h.b16 %v5793
      %v6733 = vunpack.c.l.b16 %v5794
      %v6734 = vunpack.c.h.b16 %v5794
      %v6735 = vunpack.c.l.b16 %v5795
      %v6736 = vunpack.c.h.b16 %v5795
      %v6737 = vunpack.c.l.b16 %v5796
      %v6738 = vunpack.c.h.b16 %v5796
      %v6739 = vunpack.c.l.b16 %v5797
      %v6740 = vunpack.c.h.b16 %v5797
      %v6741 = vunpack.c.l.b16 %v5798
      %v6742 = vunpack.c.h.b16 %v5798
      %v6743 = vunpack.c.l.b16 %v5799
      %v6744 = vunpack.c.h.b16 %v5799
      %v6745 = vunpack.c.l.b16 %v5800
      %v6746 = vunpack.c.h.b16 %v5800
      %v6747 = vunpack.c.l.b16 %v5801
      %v6748 = vunpack.c.h.b16 %v5801
      %v6749 = vunpack.c.l.b16 %v5802
      %v6750 = vunpack.c.h.b16 %v5802
      %v6751 = vunpack.c.l.b16 %v5803
      %v6752 = vunpack.c.h.b16 %v5803
      %v6753 = vunpack.c.l.b16 %v5804
      %v6754 = vunpack.c.h.b16 %v5804
      %v6755 = vunpack.c.l.b16 %v5805
      %v6756 = vunpack.c.h.b16 %v5805
      %v6757 = vunpack.c.l.b16 %v5806
      %v6758 = vunpack.c.h.b16 %v5806
      %v6759 = vunpack.c.l.b16 %v5807
      %v6760 = vunpack.c.h.b16 %v5807
      %v6761 = vunpack.c.l.b16 %v5808
      %v6762 = vunpack.c.h.b16 %v5808
      %v6763 = vunpack.c.l.b16 %v5809
      %v6764 = vunpack.c.h.b16 %v5809
      %v6765 = vunpack.c.l.b16 %v5810
      %v6766 = vunpack.c.h.b16 %v5810
      %v6767 = vunpack.c.l.b16 %v5811
      %v6768 = vunpack.c.h.b16 %v5811
      %v6769 = vunpack.c.l.b16 %v5812
      %v6770 = vunpack.c.h.b16 %v5812
      %v6771 = vunpack.c.l.b16 %v5813
      %v6772 = vunpack.c.h.b16 %v5813
      %v6773 = vunpack.c.l.b16 %v5814
      %v6774 = vunpack.c.h.b16 %v5814
      %v6775 = vunpack.c.l.b16 %v5815
      %v6776 = vunpack.c.h.b16 %v5815
      %v6777 = vunpack.c.l.b16 %v5816
      %v6778 = vunpack.c.h.b16 %v5816
      %v6779 = vunpack.c.l.b16 %v5817
      %v6780 = vunpack.c.h.b16 %v5817
      %v6781 = vunpack.c.l.b16 %v5818
      %v6782 = vunpack.c.h.b16 %v5818
      %v6783 = vunpack.c.l.b16 %v5819
      %v6784 = vunpack.c.h.b16 %v5819
      %v6785 = vunpack.c.l.b16 %v5820
      %v6786 = vunpack.c.h.b16 %v5820
      %v6787 = vunpack.c.l.b16 %v5821
      %v6788 = vunpack.c.h.b16 %v5821
      %v6789 = vunpack.c.l.b16 %v5822
      %v6790 = vunpack.c.h.b16 %v5822
      %v6791 = vunpack.c.l.b16 %v5823
      %v6792 = vunpack.c.h.b16 %v5823
      %v6793 = vunpack.c.l.b16 %v5824
      %v6794 = vunpack.c.h.b16 %v5824
      %v6795 = vunpack.c.l.b16 %v5825
      %v6796 = vunpack.c.h.b16 %v5825
      %v6797 = vunpack.c.l.b16 %v5826
      %v6798 = vunpack.c.h.b16 %v5826
      %v6799 = vunpack.c.l.b16 %v5827
      %v6800 = vunpack.c.h.b16 %v5827
      %v6801 = vunpack.c.l.b16 %v5828
      %v6802 = vunpack.c.h.b16 %v5828
      %v6803 = vunpack.c.l.b16 %v5829
      %v6804 = vunpack.c.h.b16 %v5829
      %v6805 = vunpack.c.l.b16 %v5830
      %v6806 = vunpack.c.h.b16 %v5830
      %v6807 = vunpack.c.l.b16 %v5831
      %v6808 = vunpack.c.h.b16 %v5831
      %v6809 = vunpack.c.l.b16 %v5832
      %v6810 = vunpack.c.h.b16 %v5832
      %v6811 = vunpack.c.l.b16 %v5833
      %v6812 = vunpack.c.h.b16 %v5833
      %v6813 = vunpack.c.l.b16 %v5834
      %v6814 = vunpack.c.h.b16 %v5834
      %v6815 = vunpack.c.l.b16 %v5835
      %v6816 = vunpack.c.h.b16 %v5835
      %v6817 = vunpack.c.l.b16 %v5836
      %v6818 = vunpack.c.h.b16 %v5836
      %v6819 = vunpack.c.l.b16 %v5837
      %v6820 = vunpack.c.h.b16 %v5837
      %v6821 = vunpack.c.l.b16 %v5838
      %v6822 = vunpack.c.h.b16 %v5838
      %v6823 = vunpack.c.l.b16 %v5839
      %v6824 = vunpack.c.h.b16 %v5839
      %v6825 = vunpack.c.l.b16 %v5840
      %v6826 = vunpack.c.h.b16 %v5840
      %v6827 = vunpack.c.l.b16 %v5841
      %v6828 = vunpack.c.h.b16 %v5841
      %v6829 = vunpack.c.l.b16 %v5842
      %v6830 = vunpack.c.h.b16 %v5842
      %v6831 = vunpack.c.l.b16 %v5843
      %v6832 = vunpack.c.h.b16 %v5843
      %v6833 = vunpack.c.l.b16 %v5844
      %v6834 = vunpack.c.h.b16 %v5844
      %v6835 = vunpack.c.l.b16 %v5845
      %v6836 = vunpack.c.h.b16 %v5845
      %v6837 = vunpack.c.l.b16 %v5846
      %v6838 = vunpack.c.h.b16 %v5846
      %v6839 = vunpack.c.l.b16 %v5847
      %v6840 = vunpack.c.h.b16 %v5847
      %v6841 = vunpack.c.l.b16 %v5848
      %v6842 = vunpack.c.h.b16 %v5848
      %v6843 = vunpack.c.l.b16 %v5849
      %v6844 = vunpack.c.h.b16 %v5849
      %v6845 = vunpack.c.l.b16 %v5850
      %v6846 = vunpack.c.h.b16 %v5850
      %v6847 = vunpack.c.l.b16 %v5851
      %v6848 = vunpack.c.h.b16 %v5851
      %v6849 = vunpack.c.l.b16 %v5852
      %v6850 = vunpack.c.h.b16 %v5852
      %v6851 = vunpack.c.l.b16 %v5853
      %v6852 = vunpack.c.h.b16 %v5853
      %v6853 = vunpack.c.l.b16 %v5854
      %v6854 = vunpack.c.h.b16 %v5854
      %v6855 = vunpack.c.l.b16 %v5855
      %v6856 = vunpack.c.h.b16 %v5855
      %v6857 = vunpack.c.l.b16 %v5856
      %v6858 = vunpack.c.h.b16 %v5856
      %v6859 = vunpack.c.l.b16 %v5857
      %v6860 = vunpack.c.h.b16 %v5857
      %v6861 = vunpack.c.l.b16 %v5858
      %v6862 = vunpack.c.h.b16 %v5858
      %v6863 = vunpack.c.l.b16 %v5859
      %v6864 = vunpack.c.h.b16 %v5859
      %v6865 = vunpack.c.l.b16 %v5860
      %v6866 = vunpack.c.h.b16 %v5860
      %v6867 = vunpack.c.l.b16 %v5861
      %v6868 = vunpack.c.h.b16 %v5861
      %v6869 = vunpack.c.l.b16 %v5862
      %v6870 = vunpack.c.h.b16 %v5862
      %v6871 = vunpack.c.l.b16 %v5863
      %v6872 = vunpack.c.h.b16 %v5863
      %v6873 = vunpack.c.l.b16 %v5864
      %v6874 = vunpack.c.h.b16 %v5864
      %v6875 = vunpack.c.l.b16 %v5865
      %v6876 = vunpack.c.h.b16 %v5865
      %v6877 = vunpack.c.l.b16 %v5866
      %v6878 = vunpack.c.h.b16 %v5866
      %v6879 = vunpack.c.l.b16 %v5867
      %v6880 = vunpack.c.h.b16 %v5867
      %v6881 = vunpack.c.l.b16 %v5868
      %v6882 = vunpack.c.h.b16 %v5868
      %v6883 = vunpack.c.l.b16 %v5869
      %v6884 = vunpack.c.h.b16 %v5869
      %v6885 = vunpack.c.l.b16 %v5870
      %v6886 = vunpack.c.h.b16 %v5870
      %v6887 = vunpack.c.l.b16 %v5871
      %v6888 = vunpack.c.h.b16 %v5871
      %v6889 = vpack.c.b16 %v6315, %v6313
      %v6890 = vpack.c.b16 %v6316, %v6314
      %v6891 = vpack.c.b16 %v6319, %v6317
      %v6892 = vpack.c.b16 %v6320, %v6318
      %v6893 = vpack.c.b16 %v6323, %v6321
      %v6894 = vpack.c.b16 %v6324, %v6322
      %v6895 = vpack.c.b16 %v6327, %v6325
      %v6896 = vpack.c.b16 %v6328, %v6326
      %v6897 = vpack.c.b16 %v6331, %v6329
      %v6898 = vpack.c.b16 %v6332, %v6330
      %v6899 = vpack.c.b16 %v6335, %v6333
      %v6900 = vpack.c.b16 %v6336, %v6334
      %v6901 = vpack.c.b16 %v6339, %v6337
      %v6902 = vpack.c.b16 %v6340, %v6338
      %v6903 = vpack.c.b16 %v6343, %v6341
      %v6904 = vpack.c.b16 %v6344, %v6342
      %v6905 = vpack.c.b16 %v6347, %v6345
      %v6906 = vpack.c.b16 %v6348, %v6346
      %v6907 = vpack.c.b16 %v6351, %v6349
      %v6908 = vpack.c.b16 %v6352, %v6350
      %v6909 = vpack.c.b16 %v6355, %v6353
      %v6910 = vpack.c.b16 %v6356, %v6354
      %v6911 = vpack.c.b16 %v6359, %v6357
      %v6912 = vpack.c.b16 %v6360, %v6358
      %v6913 = vpack.c.b16 %v6363, %v6361
      %v6914 = vpack.c.b16 %v6364, %v6362
      %v6915 = vpack.c.b16 %v6367, %v6365
      %v6916 = vpack.c.b16 %v6368, %v6366
      %v6917 = vpack.c.b16 %v6371, %v6369
      %v6918 = vpack.c.b16 %v6372, %v6370
      %v6919 = vpack.c.b16 %v6375, %v6373
      %v6920 = vpack.c.b16 %v6376, %v6374
      %v6921 = vpack.c.b16 %v6379, %v6377
      %v6922 = vpack.c.b16 %v6380, %v6378
      %v6923 = vpack.c.b16 %v6383, %v6381
      %v6924 = vpack.c.b16 %v6384, %v6382
      %v6925 = vpack.c.b16 %v6387, %v6385
      %v6926 = vpack.c.b16 %v6388, %v6386
      %v6927 = vpack.c.b16 %v6391, %v6389
      %v6928 = vpack.c.b16 %v6392, %v6390
      %v6929 = vpack.c.b16 %v6395, %v6393
      %v6930 = vpack.c.b16 %v6396, %v6394
      %v6931 = vpack.c.b16 %v6399, %v6397
      %v6932 = vpack.c.b16 %v6400, %v6398
      %v6933 = vpack.c.b16 %v6403, %v6401
      %v6934 = vpack.c.b16 %v6404, %v6402
      %v6935 = vpack.c.b16 %v6407, %v6405
      %v6936 = vpack.c.b16 %v6408, %v6406
      %v6937 = vpack.c.b16 %v6411, %v6409
      %v6938 = vpack.c.b16 %v6412, %v6410
      %v6939 = vpack.c.b16 %v6415, %v6413
      %v6940 = vpack.c.b16 %v6416, %v6414
      %v6941 = vpack.c.b16 %v6419, %v6417
      %v6942 = vpack.c.b16 %v6420, %v6418
      %v6943 = vpack.c.b16 %v6423, %v6421
      %v6944 = vpack.c.b16 %v6424, %v6422
      %v6945 = vpack.c.b16 %v6427, %v6425
      %v6946 = vpack.c.b16 %v6428, %v6426
      %v6947 = vpack.c.b16 %v6431, %v6429
      %v6948 = vpack.c.b16 %v6432, %v6430
      %v6949 = vpack.c.b16 %v6435, %v6433
      %v6950 = vpack.c.b16 %v6436, %v6434
      %v6951 = vpack.c.b16 %v6439, %v6437
      %v6952 = vpack.c.b16 %v6440, %v6438
      %v6953 = vpack.c.b16 %v6443, %v6441
      %v6954 = vpack.c.b16 %v6444, %v6442
      %v6955 = vpack.c.b16 %v6447, %v6445
      %v6956 = vpack.c.b16 %v6448, %v6446
      %v6957 = vpack.c.b16 %v6451, %v6449
      %v6958 = vpack.c.b16 %v6452, %v6450
      %v6959 = vpack.c.b16 %v6455, %v6453
      %v6960 = vpack.c.b16 %v6456, %v6454
      %v6961 = vpack.c.b16 %v6459, %v6457
      %v6962 = vpack.c.b16 %v6460, %v6458
      %v6963 = vpack.c.b16 %v6463, %v6461
      %v6964 = vpack.c.b16 %v6464, %v6462
      %v6965 = vpack.c.b16 %v6467, %v6465
      %v6966 = vpack.c.b16 %v6468, %v6466
      %v6967 = vpack.c.b16 %v6471, %v6469
      %v6968 = vpack.c.b16 %v6472, %v6470
      %v6969 = vpack.c.b16 %v6475, %v6473
      %v6970 = vpack.c.b16 %v6476, %v6474
      %v6971 = vpack.c.b16 %v6479, %v6477
      %v6972 = vpack.c.b16 %v6480, %v6478
      %v6973 = vpack.c.b16 %v6483, %v6481
      %v6974 = vpack.c.b16 %v6484, %v6482
      %v6975 = vpack.c.b16 %v6487, %v6485
      %v6976 = vpack.c.b16 %v6488, %v6486
      %v6977 = vpack.c.b16 %v6491, %v6489
      %v6978 = vpack.c.b16 %v6492, %v6490
      %v6979 = vpack.c.b16 %v6495, %v6493
      %v6980 = vpack.c.b16 %v6496, %v6494
      %v6981 = vpack.c.b16 %v6499, %v6497
      %v6982 = vpack.c.b16 %v6500, %v6498
      %v6983 = vpack.c.b16 %v6503, %v6501
      %v6984 = vpack.c.b16 %v6504, %v6502
      %v6985 = vpack.c.b16 %v6507, %v6505
      %v6986 = vpack.c.b16 %v6508, %v6506
      %v6987 = vpack.c.b16 %v6511, %v6509
      %v6988 = vpack.c.b16 %v6512, %v6510
      %v6989 = vpack.c.b16 %v6515, %v6513
      %v6990 = vpack.c.b16 %v6516, %v6514
      %v6991 = vpack.c.b16 %v6519, %v6517
      %v6992 = vpack.c.b16 %v6520, %v6518
      %v6993 = vpack.c.b16 %v6523, %v6521
      %v6994 = vpack.c.b16 %v6524, %v6522
      %v6995 = vpack.c.b16 %v6527, %v6525
      %v6996 = vpack.c.b16 %v6528, %v6526
      %v6997 = vpack.c.b16 %v6531, %v6529
      %v6998 = vpack.c.b16 %v6532, %v6530
      %v6999 = vpack.c.b16 %v6535, %v6533
      %v7000 = vpack.c.b16 %v6536, %v6534
      %v7001 = vpack.c.b16 %v6539, %v6537
      %v7002 = vpack.c.b16 %v6540, %v6538
      %v7003 = vpack.c.b16 %v6543, %v6541
      %v7004 = vpack.c.b16 %v6544, %v6542
      %v7005 = vpack.c.b16 %v6547, %v6545
      %v7006 = vpack.c.b16 %v6548, %v6546
      %v7007 = vpack.c.b16 %v6551, %v6549
      %v7008 = vpack.c.b16 %v6552, %v6550
      %v7009 = vpack.c.b16 %v6555, %v6553
      %v7010 = vpack.c.b16 %v6556, %v6554
      %v7011 = vpack.c.b16 %v6559, %v6557
      %v7012 = vpack.c.b16 %v6560, %v6558
      %v7013 = vpack.c.b16 %v6563, %v6561
      %v7014 = vpack.c.b16 %v6564, %v6562
      %v7015 = vpack.c.b16 %v6567, %v6565
      %v7016 = vpack.c.b16 %v6568, %v6566
      %v7017 = vpack.c.b16 %v6571, %v6569
      %v7018 = vpack.c.b16 %v6572, %v6570
      %v7019 = vpack.c.b16 %v6575, %v6573
      %v7020 = vpack.c.b16 %v6576, %v6574
      %v7021 = vpack.c.b16 %v6579, %v6577
      %v7022 = vpack.c.b16 %v6580, %v6578
      %v7023 = vpack.c.b16 %v6583, %v6581
      %v7024 = vpack.c.b16 %v6584, %v6582
      %v7025 = vpack.c.b16 %v6587, %v6585
      %v7026 = vpack.c.b16 %v6588, %v6586
      %v7027 = vpack.c.b16 %v6591, %v6589
      %v7028 = vpack.c.b16 %v6592, %v6590
      %v7029 = vpack.c.b16 %v6595, %v6593
      %v7030 = vpack.c.b16 %v6596, %v6594
      %v7031 = vpack.c.b16 %v6599, %v6597
      %v7032 = vpack.c.b16 %v6600, %v6598
      %v7033 = vpack.c.b16 %v6603, %v6601
      %v7034 = vpack.c.b16 %v6604, %v6602
      %v7035 = vpack.c.b16 %v6607, %v6605
      %v7036 = vpack.c.b16 %v6608, %v6606
      %v7037 = vpack.c.b16 %v6611, %v6609
      %v7038 = vpack.c.b16 %v6612, %v6610
      %v7039 = vpack.c.b16 %v6615, %v6613
      %v7040 = vpack.c.b16 %v6616, %v6614
      %v7041 = vpack.c.b16 %v6619, %v6617
      %v7042 = vpack.c.b16 %v6620, %v6618
      %v7043 = vpack.c.b16 %v6623, %v6621
      %v7044 = vpack.c.b16 %v6624, %v6622
      %v7045 = vpack.c.b16 %v6627, %v6625
      %v7046 = vpack.c.b16 %v6628, %v6626
      %v7047 = vpack.c.b16 %v6631, %v6629
      %v7048 = vpack.c.b16 %v6632, %v6630
      %v7049 = vpack.c.b16 %v6635, %v6633
      %v7050 = vpack.c.b16 %v6636, %v6634
      %v7051 = vpack.c.b16 %v6639, %v6637
      %v7052 = vpack.c.b16 %v6640, %v6638
      %v7053 = vpack.c.b16 %v6643, %v6641
      %v7054 = vpack.c.b16 %v6644, %v6642
      %v7055 = vpack.c.b16 %v6647, %v6645
      %v7056 = vpack.c.b16 %v6648, %v6646
      %v7057 = vpack.c.b16 %v6651, %v6649
      %v7058 = vpack.c.b16 %v6652, %v6650
      %v7059 = vpack.c.b16 %v6655, %v6653
      %v7060 = vpack.c.b16 %v6656, %v6654
      %v7061 = vpack.c.b16 %v6659, %v6657
      %v7062 = vpack.c.b16 %v6660, %v6658
      %v7063 = vpack.c.b16 %v6663, %v6661
      %v7064 = vpack.c.b16 %v6664, %v6662
      %v7065 = vpack.c.b16 %v6667, %v6665
      %v7066 = vpack.c.b16 %v6668, %v6666
      %v7067 = vpack.c.b16 %v6671, %v6669
      %v7068 = vpack.c.b16 %v6672, %v6670
      %v7069 = vpack.c.b16 %v6675, %v6673
      %v7070 = vpack.c.b16 %v6676, %v6674
      %v7071 = vpack.c.b16 %v6679, %v6677
      %v7072 = vpack.c.b16 %v6680, %v6678
      %v7073 = vpack.c.b16 %v6683, %v6681
      %v7074 = vpack.c.b16 %v6684, %v6682
      %v7075 = vpack.c.b16 %v6687, %v6685
      %v7076 = vpack.c.b16 %v6688, %v6686
      %v7077 = vpack.c.b16 %v6691, %v6689
      %v7078 = vpack.c.b16 %v6692, %v6690
      %v7079 = vpack.c.b16 %v6695, %v6693
      %v7080 = vpack.c.b16 %v6696, %v6694
      %v7081 = vpack.c.b16 %v6699, %v6697
      %v7082 = vpack.c.b16 %v6700, %v6698
      %v7083 = vpack.c.b16 %v6703, %v6701
      %v7084 = vpack.c.b16 %v6704, %v6702
      %v7085 = vpack.c.b16 %v6707, %v6705
      %v7086 = vpack.c.b16 %v6708, %v6706
      %v7087 = vpack.c.b16 %v6711, %v6709
      %v7088 = vpack.c.b16 %v6712, %v6710
      %v7089 = vpack.c.b16 %v6715, %v6713
      %v7090 = vpack.c.b16 %v6716, %v6714
      %v7091 = vpack.c.b16 %v6719, %v6717
      %v7092 = vpack.c.b16 %v6720, %v6718
      %v7093 = vpack.c.b16 %v6723, %v6721
      %v7094 = vpack.c.b16 %v6724, %v6722
      %v7095 = vpack.c.b16 %v6727, %v6725
      %v7096 = vpack.c.b16 %v6728, %v6726
      %v7097 = vpack.c.b16 %v6731, %v6729
      %v7098 = vpack.c.b16 %v6732, %v6730
      %v7099 = vpack.c.b16 %v6735, %v6733
      %v7100 = vpack.c.b16 %v6736, %v6734
      %v7101 = vpack.c.b16 %v6739, %v6737
      %v7102 = vpack.c.b16 %v6740, %v6738
      %v7103 = vpack.c.b16 %v6743, %v6741
      %v7104 = vpack.c.b16 %v6744, %v6742
      %v7105 = vpack.c.b16 %v6747, %v6745
      %v7106 = vpack.c.b16 %v6748, %v6746
      %v7107 = vpack.c.b16 %v6751, %v6749
      %v7108 = vpack.c.b16 %v6752, %v6750
      %v7109 = vpack.c.b16 %v6755, %v6753
      %v7110 = vpack.c.b16 %v6756, %v6754
      %v7111 = vpack.c.b16 %v6759, %v6757
      %v7112 = vpack.c.b16 %v6760, %v6758
      %v7113 = vpack.c.b16 %v6763, %v6761
      %v7114 = vpack.c.b16 %v6764, %v6762
      %v7115 = vpack.c.b16 %v6767, %v6765
      %v7116 = vpack.c.b16 %v6768, %v6766
      %v7117 = vpack.c.b16 %v6771, %v6769
      %v7118 = vpack.c.b16 %v6772, %v6770
      %v7119 = vpack.c.b16 %v6775, %v6773
      %v7120 = vpack.c.b16 %v6776, %v6774
      %v7121 = vpack.c.b16 %v6779, %v6777
      %v7122 = vpack.c.b16 %v6780, %v6778
      %v7123 = vpack.c.b16 %v6783, %v6781
      %v7124 = vpack.c.b16 %v6784, %v6782
      %v7125 = vpack.c.b16 %v6787, %v6785
      %v7126 = vpack.c.b16 %v6788, %v6786
      %v7127 = vpack.c.b16 %v6791, %v6789
      %v7128 = vpack.c.b16 %v6792, %v6790
      %v7129 = vpack.c.b16 %v6795, %v6793
      %v7130 = vpack.c.b16 %v6796, %v6794
      %v7131 = vpack.c.b16 %v6799, %v6797
      %v7132 = vpack.c.b16 %v6800, %v6798
      %v7133 = vpack.c.b16 %v6803, %v6801
      %v7134 = vpack.c.b16 %v6804, %v6802
      %v7135 = vpack.c.b16 %v6807, %v6805
      %v7136 = vpack.c.b16 %v6808, %v6806
      %v7137 = vpack.c.b16 %v6811, %v6809
      %v7138 = vpack.c.b16 %v6812, %v6810
      %v7139 = vpack.c.b16 %v6815, %v6813
      %v7140 = vpack.c.b16 %v6816, %v6814
      %v7141 = vpack.c.b16 %v6819, %v6817
      %v7142 = vpack.c.b16 %v6820, %v6818
      %v7143 = vpack.c.b16 %v6823, %v6821
      %v7144 = vpack.c.b16 %v6824, %v6822
      %v7145 = vpack.c.b16 %v6827, %v6825
      %v7146 = vpack.c.b16 %v6828, %v6826
      %v7147 = vpack.c.b16 %v6831, %v6829
      %v7148 = vpack.c.b16 %v6832, %v6830
      %v7149 = vpack.c.b16 %v6835, %v6833
      %v7150 = vpack.c.b16 %v6836, %v6834
      %v7151 = vpack.c.b16 %v6839, %v6837
      %v7152 = vpack.c.b16 %v6840, %v6838
      %v7153 = vpack.c.b16 %v6843, %v6841
      %v7154 = vpack.c.b16 %v6844, %v6842
      %v7155 = vpack.c.b16 %v6847, %v6845
      %v7156 = vpack.c.b16 %v6848, %v6846
      %v7157 = vpack.c.b16 %v6851, %v6849
      %v7158 = vpack.c.b16 %v6852, %v6850
      %v7159 = vpack.c.b16 %v6855, %v6853
      %v7160 = vpack.c.b16 %v6856, %v6854
      %v7161 = vpack.c.b16 %v6859, %v6857
      %v7162 = vpack.c.b16 %v6860, %v6858
      %v7163 = vpack.c.b16 %v6863, %v6861
      %v7164 = vpack.c.b16 %v6864, %v6862
      %v7165 = vpack.c.b16 %v6867, %v6865
      %v7166 = vpack.c.b16 %v6868, %v6866
      %v7167 = vpack.c.b16 %v6871, %v6869
      %v7168 = vpack.c.b16 %v6872, %v6870
      %v7169 = vpack.c.b16 %v6875, %v6873
      %v7170 = vpack.c.b16 %v6876, %v6874
      %v7171 = vpack.c.b16 %v6879, %v6877
      %v7172 = vpack.c.b16 %v6880, %v6878
      %v7173 = vpack.c.b16 %v6883, %v6881
      %v7174 = vpack.c.b16 %v6884, %v6882
      %v7175 = vpack.c.b16 %v6887, %v6885
      %v7176 = vpack.c.b16 %v6888, %v6886
      %7465 = vmatprep.subr.bf16.mxu0 %v6904
      %7466 = vmatpush1.bf16.msra.mxu0 %v6903
      %7467 = vmatprep.subr.bf16.mxu0 %v6902
      %7468 = vmatpush1.bf16.msra.mxu0 %v6901
      %7469 = vmatprep.subr.bf16.mxu0 %v6900
      %7470 = vmatpush1.bf16.msra.mxu0 %v6899
      %7471 = vmatprep.subr.bf16.mxu0 %v6898
      %7472 = vmatpush1.bf16.msra.mxu0 %v6897
      %7473 = vmatprep.subr.bf16.mxu0 %v6896
      %7474 = vmatpush1.bf16.msra.mxu0 %v6895
      %7475 = vmatprep.subr.bf16.mxu0 %v6894
      %7476 = vmatpush1.bf16.msra.mxu0 %v6893
      %7477 = vmatprep.subr.bf16.mxu0 %v6892
      %7478 = vmatpush1.bf16.msra.mxu0 %v6891
      %7479 = vmatprep.subr.bf16.mxu0 %v6890
      %7480 = vmatpush1.bf16.msra.mxu0 %v6889
      %7481 = vmatprep.subr.bf16.mxu0 %v6920
      %7482 = vmatpush2.bf16.msra.mxu0 %v6919
      %7483 = vmatprep.subr.bf16.mxu0 %v6918
      %7484 = vmatpush2.bf16.msra.mxu0 %v6917
      %7485 = vmatprep.subr.bf16.mxu0 %v6916
      %7486 = vmatpush2.bf16.msra.mxu0 %v6915
      %7487 = vmatprep.subr.bf16.mxu0 %v6914
      %7488 = vmatpush2.bf16.msra.mxu0 %v6913
      %7489 = vmatprep.subr.bf16.mxu0 %v6912
      %7490 = vmatpush2.bf16.msra.mxu0 %v6911
      %7491 = vmatprep.subr.bf16.mxu0 %v6910
      %7492 = vmatpush2.bf16.msra.mxu0 %v6909
      %7493 = vmatprep.subr.bf16.mxu0 %v6908
      %7494 = vmatpush2.bf16.msra.mxu0 %v6907
      %7495 = vmatprep.subr.bf16.mxu0 %v6906
      %7496 = vmatpush2.bf16.msra.mxu0 %v6905
      %7497 = vmatprep.mubr.bf16.mxu0 %v5922
      %7498 = vmatmul.mubr.bf16.gmra.mxu0 %v5908
      %v7499 = vpop.f32.mrf.mxu0
      %v7500 = vadd.f32 %v5877, %v7499
      %v7501 = vpop.f32.mrf.mxu0
      %v7502 = vadd.f32 %v5881, %v7501
      %v7503 = vpop.f32.mrf.mxu0
      %v7504 = vpop.f32.mrf.mxu0
      %7505 = vdwg.mxu0
      %7506 = vmatprep.subr.bf16.mxu0 %v6936
      %7507 = vmatpush1.bf16.msra.mxu0 %v6935
      %7508 = vmatprep.subr.bf16.mxu0 %v6934
      %7509 = vmatpush1.bf16.msra.mxu0 %v6933
      %7510 = vmatprep.subr.bf16.mxu0 %v6932
      %7511 = vmatpush1.bf16.msra.mxu0 %v6931
      %7512 = vmatprep.subr.bf16.mxu0 %v6930
      %7513 = vmatpush1.bf16.msra.mxu0 %v6929
      %7514 = vmatprep.subr.bf16.mxu0 %v6928
      %7515 = vmatpush1.bf16.msra.mxu0 %v6927
      %7516 = vmatprep.subr.bf16.mxu0 %v6926
      %7517 = vmatpush1.bf16.msra.mxu0 %v6925
      %7518 = vmatprep.subr.bf16.mxu0 %v6924
      %7519 = vmatpush1.bf16.msra.mxu0 %v6923
      %7520 = vmatprep.subr.bf16.mxu0 %v6922
      %7521 = vmatpush1.bf16.msra.mxu0 %v6921
      %7522 = vmatprep.subr.bf16.mxu0 %v6952
      %7523 = vmatpush2.bf16.msra.mxu0 %v6951
      %7524 = vmatprep.subr.bf16.mxu0 %v6950
      %7525 = vmatpush2.bf16.msra.mxu0 %v6949
      %7526 = vmatprep.subr.bf16.mxu0 %v6948
      %7527 = vmatpush2.bf16.msra.mxu0 %v6947
      %7528 = vmatprep.subr.bf16.mxu0 %v6946
      %7529 = vmatpush2.bf16.msra.mxu0 %v6945
      %7530 = vmatprep.subr.bf16.mxu0 %v6944
      %7531 = vmatpush2.bf16.msra.mxu0 %v6943
      %7532 = vmatprep.subr.bf16.mxu0 %v6942
      %7533 = vmatpush2.bf16.msra.mxu0 %v6941
      %7534 = vmatprep.subr.bf16.mxu0 %v6940
      %7535 = vmatpush2.bf16.msra.mxu0 %v6939
      %7536 = vmatprep.subr.bf16.mxu0 %v6938
      %7537 = vmatpush2.bf16.msra.mxu0 %v6937
      %7538 = vmatprep.mubr.bf16.mxu0 %v5932
      %7539 = vmatmul.mubr.bf16.gmra.mxu0 %v5930
      %v7540 = vpop.f32.mrf.mxu0
      %v7541 = vadd.f32 %v7500, %v7540
      %v7542 = vpop.f32.mrf.mxu0
      %v7543 = vadd.f32 %v7502, %v7542
      %v7544 = vpop.f32.mrf.mxu0
      %v7545 = vpop.f32.mrf.mxu0
      %7546 = vdwg.mxu0
      %7547 = vmatprep.subr.bf16.mxu0 %v6968
      %7548 = vmatpush1.bf16.msra.mxu0 %v6967
      %7549 = vmatprep.subr.bf16.mxu0 %v6966
      %7550 = vmatpush1.bf16.msra.mxu0 %v6965
      %7551 = vmatprep.subr.bf16.mxu0 %v6964
      %7552 = vmatpush1.bf16.msra.mxu0 %v6963
      %7553 = vmatprep.subr.bf16.mxu0 %v6962
      %7554 = vmatpush1.bf16.msra.mxu0 %v6961
      %7555 = vmatprep.subr.bf16.mxu0 %v6960
      %7556 = vmatpush1.bf16.msra.mxu0 %v6959
      %7557 = vmatprep.subr.bf16.mxu0 %v6958
      %7558 = vmatpush1.bf16.msra.mxu0 %v6957
      %7559 = vmatprep.subr.bf16.mxu0 %v6956
      %7560 = vmatpush1.bf16.msra.mxu0 %v6955
      %7561 = vmatprep.subr.bf16.mxu0 %v6954
      %7562 = vmatpush1.bf16.msra.mxu0 %v6953
      %7563 = vmatprep.subr.bf16.mxu0 %v6984
      %7564 = vmatpush2.bf16.msra.mxu0 %v6983
      %7565 = vmatprep.subr.bf16.mxu0 %v6982
      %7566 = vmatpush2.bf16.msra.mxu0 %v6981
      %7567 = vmatprep.subr.bf16.mxu0 %v6980
      %7568 = vmatpush2.bf16.msra.mxu0 %v6979
      %7569 = vmatprep.subr.bf16.mxu0 %v6978
      %7570 = vmatpush2.bf16.msra.mxu0 %v6977
      %7571 = vmatprep.subr.bf16.mxu0 %v6976
      %7572 = vmatpush2.bf16.msra.mxu0 %v6975
      %7573 = vmatprep.subr.bf16.mxu0 %v6974
      %7574 = vmatpush2.bf16.msra.mxu0 %v6973
      %7575 = vmatprep.subr.bf16.mxu0 %v6972
      %7576 = vmatpush2.bf16.msra.mxu0 %v6971
      %7577 = vmatprep.subr.bf16.mxu0 %v6970
      %7578 = vmatpush2.bf16.msra.mxu0 %v6969
      %7579 = vmatprep.mubr.bf16.mxu0 %v5929
      %7580 = vmatmul.mubr.bf16.gmra.mxu0 %v5915
      %v7581 = vpop.f32.mrf.mxu0
      %v7582 = vadd.f32 %v7541, %v7581
      %v7583 = vpop.f32.mrf.mxu0
      %v7584 = vadd.f32 %v7543, %v7583
      %v7585 = vpop.f32.mrf.mxu0
      %v7586 = vpop.f32.mrf.mxu0
      %7587 = vdwg.mxu0
      %7588 = vmatprep.subr.bf16.mxu0 %v7000
      %7589 = vmatpush1.bf16.msra.mxu0 %v6999
      %7590 = vmatprep.subr.bf16.mxu0 %v6998
      %7591 = vmatpush1.bf16.msra.mxu0 %v6997
      %7592 = vmatprep.subr.bf16.mxu0 %v6996
      %7593 = vmatpush1.bf16.msra.mxu0 %v6995
      %7594 = vmatprep.subr.bf16.mxu0 %v6994
      %7595 = vmatpush1.bf16.msra.mxu0 %v6993
      %7596 = vmatprep.subr.bf16.mxu0 %v6992
      %7597 = vmatpush1.bf16.msra.mxu0 %v6991
      %7598 = vmatprep.subr.bf16.mxu0 %v6990
      %7599 = vmatpush1.bf16.msra.mxu0 %v6989
      %7600 = vmatprep.subr.bf16.mxu0 %v6988
      %7601 = vmatpush1.bf16.msra.mxu0 %v6987
      %7602 = vmatprep.subr.bf16.mxu0 %v6986
      %7603 = vmatpush1.bf16.msra.mxu0 %v6985
      %7604 = vmatprep.subr.bf16.mxu0 %v7016
      %7605 = vmatpush2.bf16.msra.mxu0 %v7015
      %7606 = vmatprep.subr.bf16.mxu0 %v7014
      %7607 = vmatpush2.bf16.msra.mxu0 %v7013
      %7608 = vmatprep.subr.bf16.mxu0 %v7012
      %7609 = vmatpush2.bf16.msra.mxu0 %v7011
      %7610 = vmatprep.subr.bf16.mxu0 %v7010
      %7611 = vmatpush2.bf16.msra.mxu0 %v7009
      %7612 = vmatprep.subr.bf16.mxu0 %v7008
      %7613 = vmatpush2.bf16.msra.mxu0 %v7007
      %7614 = vmatprep.subr.bf16.mxu0 %v7006
      %7615 = vmatpush2.bf16.msra.mxu0 %v7005
      %7616 = vmatprep.subr.bf16.mxu0 %v7004
      %7617 = vmatpush2.bf16.msra.mxu0 %v7003
      %7618 = vmatprep.subr.bf16.mxu0 %v7002
      %7619 = vmatpush2.bf16.msra.mxu0 %v7001
      %7620 = vmatprep.mubr.bf16.mxu0 %v5933
      %7621 = vmatmul.mubr.bf16.gmra.mxu0 %v5931
      %v7622 = vpop.f32.mrf.mxu0
      %v7623 = vadd.f32 %v7582, %v7622
      %v7624 = vpop.f32.mrf.mxu0
      %v7625 = vadd.f32 %v7584, %v7624
      %v7626 = vpop.f32.mrf.mxu0
      %v7627 = vpop.f32.mrf.mxu0
      %7628 = vdwg.mxu0
      %7629 = vmatprep.subr.bf16.mxu0 %v7032
      %7630 = vmatpush1.bf16.msra.mxu0 %v7031
      %7631 = vmatprep.subr.bf16.mxu0 %v7030
      %7632 = vmatpush1.bf16.msra.mxu0 %v7029
      %7633 = vmatprep.subr.bf16.mxu0 %v7028
      %7634 = vmatpush1.bf16.msra.mxu0 %v7027
      %7635 = vmatprep.subr.bf16.mxu0 %v7026
      %7636 = vmatpush1.bf16.msra.mxu0 %v7025
      %7637 = vmatprep.subr.bf16.mxu0 %v7024
      %7638 = vmatpush1.bf16.msra.mxu0 %v7023
      %7639 = vmatprep.subr.bf16.mxu0 %v7022
      %7640 = vmatpush1.bf16.msra.mxu0 %v7021
      %7641 = vmatprep.subr.bf16.mxu0 %v7020
      %7642 = vmatpush1.bf16.msra.mxu0 %v7019
      %7643 = vmatprep.subr.bf16.mxu0 %v7018
      %7644 = vmatpush1.bf16.msra.mxu0 %v7017
      %7645 = vmatprep.subr.bf16.mxu0 %v7048
      %7646 = vmatpush2.bf16.msra.mxu0 %v7047
      %7647 = vmatprep.subr.bf16.mxu0 %v7046
      %7648 = vmatpush2.bf16.msra.mxu0 %v7045
      %7649 = vmatprep.subr.bf16.mxu0 %v7044
      %7650 = vmatpush2.bf16.msra.mxu0 %v7043
      %7651 = vmatprep.subr.bf16.mxu0 %v7042
      %7652 = vmatpush2.bf16.msra.mxu0 %v7041
      %7653 = vmatprep.subr.bf16.mxu0 %v7040
      %7654 = vmatpush2.bf16.msra.mxu0 %v7039
      %7655 = vmatprep.subr.bf16.mxu0 %v7038
      %7656 = vmatpush2.bf16.msra.mxu0 %v7037
      %7657 = vmatprep.subr.bf16.mxu0 %v7036
      %7658 = vmatpush2.bf16.msra.mxu0 %v7035
      %7659 = vmatprep.subr.bf16.mxu0 %v7034
      %7660 = vmatpush2.bf16.msra.mxu0 %v7033
      %7661 = vmatprep.mubr.bf16.mxu0 %v5972
      %7662 = vmatmul.mubr.bf16.gmra.mxu0 %v5958
      %v7663 = vpop.f32.mrf.mxu0
      %v7664 = vadd.f32 %v7623, %v7663
      %v7665 = vpop.f32.mrf.mxu0
      %v7666 = vadd.f32 %v7625, %v7665
      %v7667 = vpop.f32.mrf.mxu0
      %v7668 = vpop.f32.mrf.mxu0
      %7669 = vdwg.mxu0
      %7670 = vmatprep.subr.bf16.mxu0 %v7064
      %7671 = vmatpush1.bf16.msra.mxu0 %v7063
      %7672 = vmatprep.subr.bf16.mxu0 %v7062
      %7673 = vmatpush1.bf16.msra.mxu0 %v7061
      %7674 = vmatprep.subr.bf16.mxu0 %v7060
      %7675 = vmatpush1.bf16.msra.mxu0 %v7059
      %7676 = vmatprep.subr.bf16.mxu0 %v7058
      %7677 = vmatpush1.bf16.msra.mxu0 %v7057
      %7678 = vmatprep.subr.bf16.mxu0 %v7056
      %7679 = vmatpush1.bf16.msra.mxu0 %v7055
      %7680 = vmatprep.subr.bf16.mxu0 %v7054
      %7681 = vmatpush1.bf16.msra.mxu0 %v7053
      %7682 = vmatprep.subr.bf16.mxu0 %v7052
      %7683 = vmatpush1.bf16.msra.mxu0 %v7051
      %7684 = vmatprep.subr.bf16.mxu0 %v7050
      %7685 = vmatpush1.bf16.msra.mxu0 %v7049
      %7686 = vmatprep.subr.bf16.mxu0 %v7080
      %7687 = vmatpush2.bf16.msra.mxu0 %v7079
      %7688 = vmatprep.subr.bf16.mxu0 %v7078
      %7689 = vmatpush2.bf16.msra.mxu0 %v7077
      %7690 = vmatprep.subr.bf16.mxu0 %v7076
      %7691 = vmatpush2.bf16.msra.mxu0 %v7075
      %7692 = vmatprep.subr.bf16.mxu0 %v7074
      %7693 = vmatpush2.bf16.msra.mxu0 %v7073
      %7694 = vmatprep.subr.bf16.mxu0 %v7072
      %7695 = vmatpush2.bf16.msra.mxu0 %v7071
      %7696 = vmatprep.subr.bf16.mxu0 %v7070
      %7697 = vmatpush2.bf16.msra.mxu0 %v7069
      %7698 = vmatprep.subr.bf16.mxu0 %v7068
      %7699 = vmatpush2.bf16.msra.mxu0 %v7067
      %7700 = vmatprep.subr.bf16.mxu0 %v7066
      %7701 = vmatpush2.bf16.msra.mxu0 %v7065
      %7702 = vmatprep.mubr.bf16.mxu0 %v5982
      %7703 = vmatmul.mubr.bf16.gmra.mxu0 %v5980
      %v7704 = vpop.f32.mrf.mxu0
      %v7705 = vadd.f32 %v7664, %v7704
      %v7706 = vpop.f32.mrf.mxu0
      %v7707 = vadd.f32 %v7666, %v7706
      %v7708 = vpop.f32.mrf.mxu0
      %v7709 = vpop.f32.mrf.mxu0
      %7710 = vdwg.mxu0
      %7711 = vmatprep.subr.bf16.mxu0 %v7096
      %7712 = vmatpush1.bf16.msra.mxu0 %v7095
      %7713 = vmatprep.subr.bf16.mxu0 %v7094
      %7714 = vmatpush1.bf16.msra.mxu0 %v7093
      %7715 = vmatprep.subr.bf16.mxu0 %v7092
      %7716 = vmatpush1.bf16.msra.mxu0 %v7091
      %7717 = vmatprep.subr.bf16.mxu0 %v7090
      %7718 = vmatpush1.bf16.msra.mxu0 %v7089
      %7719 = vmatprep.subr.bf16.mxu0 %v7088
      %7720 = vmatpush1.bf16.msra.mxu0 %v7087
      %7721 = vmatprep.subr.bf16.mxu0 %v7086
      %7722 = vmatpush1.bf16.msra.mxu0 %v7085
      %7723 = vmatprep.subr.bf16.mxu0 %v7084
      %7724 = vmatpush1.bf16.msra.mxu0 %v7083
      %7725 = vmatprep.subr.bf16.mxu0 %v7082
      %7726 = vmatpush1.bf16.msra.mxu0 %v7081
      %7727 = vmatprep.subr.bf16.mxu0 %v7112
      %7728 = vmatpush2.bf16.msra.mxu0 %v7111
      %7729 = vmatprep.subr.bf16.mxu0 %v7110
      %7730 = vmatpush2.bf16.msra.mxu0 %v7109
      %7731 = vmatprep.subr.bf16.mxu0 %v7108
      %7732 = vmatpush2.bf16.msra.mxu0 %v7107
      %7733 = vmatprep.subr.bf16.mxu0 %v7106
      %7734 = vmatpush2.bf16.msra.mxu0 %v7105
      %7735 = vmatprep.subr.bf16.mxu0 %v7104
      %7736 = vmatpush2.bf16.msra.mxu0 %v7103
      %7737 = vmatprep.subr.bf16.mxu0 %v7102
      %7738 = vmatpush2.bf16.msra.mxu0 %v7101
      %7739 = vmatprep.subr.bf16.mxu0 %v7100
      %7740 = vmatpush2.bf16.msra.mxu0 %v7099
      %7741 = vmatprep.subr.bf16.mxu0 %v7098
      %7742 = vmatpush2.bf16.msra.mxu0 %v7097
      %7743 = vmatprep.mubr.bf16.mxu0 %v5979
      %7744 = vmatmul.mubr.bf16.gmra.mxu0 %v5965
      %v7745 = vpop.f32.mrf.mxu0
      %v7746 = vadd.f32 %v7705, %v7745
      %v7747 = vpop.f32.mrf.mxu0
      %v7748 = vadd.f32 %v7707, %v7747
      %v7749 = vpop.f32.mrf.mxu0
      %v7750 = vpop.f32.mrf.mxu0
      %7751 = vdwg.mxu0
      %7752 = vmatprep.subr.bf16.mxu0 %v7128
      %7753 = vmatpush1.bf16.msra.mxu0 %v7127
      %7754 = vmatprep.subr.bf16.mxu0 %v7126
      %7755 = vmatpush1.bf16.msra.mxu0 %v7125
      %7756 = vmatprep.subr.bf16.mxu0 %v7124
      %7757 = vmatpush1.bf16.msra.mxu0 %v7123
      %7758 = vmatprep.subr.bf16.mxu0 %v7122
      %7759 = vmatpush1.bf16.msra.mxu0 %v7121
      %7760 = vmatprep.subr.bf16.mxu0 %v7120
      %7761 = vmatpush1.bf16.msra.mxu0 %v7119
      %7762 = vmatprep.subr.bf16.mxu0 %v7118
      %7763 = vmatpush1.bf16.msra.mxu0 %v7117
      %7764 = vmatprep.subr.bf16.mxu0 %v7116
      %7765 = vmatpush1.bf16.msra.mxu0 %v7115
      %7766 = vmatprep.subr.bf16.mxu0 %v7114
      %7767 = vmatpush1.bf16.msra.mxu0 %v7113
      %7768 = vmatprep.subr.bf16.mxu0 %v7144
      %7769 = vmatpush2.bf16.msra.mxu0 %v7143
      %7770 = vmatprep.subr.bf16.mxu0 %v7142
      %7771 = vmatpush2.bf16.msra.mxu0 %v7141
      %7772 = vmatprep.subr.bf16.mxu0 %v7140
      %7773 = vmatpush2.bf16.msra.mxu0 %v7139
      %7774 = vmatprep.subr.bf16.mxu0 %v7138
      %7775 = vmatpush2.bf16.msra.mxu0 %v7137
      %7776 = vmatprep.subr.bf16.mxu0 %v7136
      %7777 = vmatpush2.bf16.msra.mxu0 %v7135
      %7778 = vmatprep.subr.bf16.mxu0 %v7134
      %7779 = vmatpush2.bf16.msra.mxu0 %v7133
      %7780 = vmatprep.subr.bf16.mxu0 %v7132
      %7781 = vmatpush2.bf16.msra.mxu0 %v7131
      %7782 = vmatprep.subr.bf16.mxu0 %v7130
      %7783 = vmatpush2.bf16.msra.mxu0 %v7129
      %7784 = vmatprep.mubr.bf16.mxu0 %v5983
      %7785 = vmatmul.mubr.bf16.gmra.mxu0 %v5981
      %v7786 = vpop.f32.mrf.mxu0
      %v7787 = vadd.f32 %v7746, %v7786
      %v7788 = vpop.f32.mrf.mxu0
      %v7789 = vadd.f32 %v7748, %v7788
      %v7790 = vpop.f32.mrf.mxu0
      %v7791 = vpop.f32.mrf.mxu0
      %7792 = vdwg.mxu0
      %7793 = vmatprep.subr.bf16.mxu0 %v7160
      %7794 = vmatpush1.bf16.msra.mxu0 %v7159
      %7795 = vmatprep.subr.bf16.mxu0 %v7158
      %7796 = vmatpush1.bf16.msra.mxu0 %v7157
      %7797 = vmatprep.subr.bf16.mxu0 %v7156
      %7798 = vmatpush1.bf16.msra.mxu0 %v7155
      %7799 = vmatprep.subr.bf16.mxu0 %v7154
      %7800 = vmatpush1.bf16.msra.mxu0 %v7153
      %7801 = vmatprep.subr.bf16.mxu0 %v7152
      %7802 = vmatpush1.bf16.msra.mxu0 %v7151
      %7803 = vmatprep.subr.bf16.mxu0 %v7150
      %7804 = vmatpush1.bf16.msra.mxu0 %v7149
      %7805 = vmatprep.subr.bf16.mxu0 %v7148
      %7806 = vmatpush1.bf16.msra.mxu0 %v7147
      %7807 = vmatprep.subr.bf16.mxu0 %v7146
      %7808 = vmatpush1.bf16.msra.mxu0 %v7145
      %7809 = vmatprep.subr.bf16.mxu0 %v7176
      %7810 = vmatpush2.bf16.msra.mxu0 %v7175
      %7811 = vmatprep.subr.bf16.mxu0 %v7174
      %7812 = vmatpush2.bf16.msra.mxu0 %v7173
      %7813 = vmatprep.subr.bf16.mxu0 %v7172
      %7814 = vmatpush2.bf16.msra.mxu0 %v7171
      %7815 = vmatprep.subr.bf16.mxu0 %v7170
      %7816 = vmatpush2.bf16.msra.mxu0 %v7169
      %7817 = vmatprep.subr.bf16.mxu0 %v7168
      %7818 = vmatpush2.bf16.msra.mxu0 %v7167
      %7819 = vmatprep.subr.bf16.mxu0 %v7166
      %7820 = vmatpush2.bf16.msra.mxu0 %v7165
      %7821 = vmatprep.subr.bf16.mxu0 %v7164
      %7822 = vmatpush2.bf16.msra.mxu0 %v7163
      %7823 = vmatprep.subr.bf16.mxu0 %v7162
      %7824 = vmatpush2.bf16.msra.mxu0 %v7161
      %7825 = vmatprep.mubr.bf16.mxu0 %v6006
      %7826 = vmatmul.mubr.bf16.gmra.mxu0 %v5999
      %v7827 = vpop.f32.mrf.mxu0
      %v7828 = vadd.f32 %v7787, %v7827
      %v7829 = vpop.f32.mrf.mxu0
      %v7830 = vadd.f32 %v7789, %v7829
      %v7831 = vpop.f32.mrf.mxu0
      %v7832 = vpop.f32.mrf.mxu0
      %7833 = vdwg.mxu0
      %v7834 = vmax.f32 %v7828, 0.0
      %v7835 = vmax.f32 %v7830, 0.0
      %v7838 = vcombine.low %v7834, %v7835
      %v7840 = vunpack.c.l.s4 1983009808
      %v7841 = vunpack.c.0.s8 %v7840
      %v7842 = vlaneseq
      %v7843 = vshrl.u32 %v7842, 7
      %v7844 = vsub.s32 %v7841, %v7843
      %v7845 = vrot.slane %v7838, %v7844
      %v7846 = vcombine.high %v7845, %v7845
      %v7849 = vmax.f32 %v7845, %v7846
      %v7851 = vrot.slane %v7849, 7
      %v7852 = vrot.slane %v7851, 2
      %v7854 = vmax.f32 %v7849, %v7852
      %v7857 = vunpack.c.l.s4 1966171168
      %v7858 = vunpack.c.0.s8 %v7857
      %v7859 = vlaneseq
      %v7860 = vshrl.u32 %v7859, 7
      %v7861 = vsub.s32 %v7858, %v7860
      %v7862 = vrot.slane %v7854, %v7861
      %v7864 = vlaneseq
      %vm7865 = vcmp.ge.s32.totalorder %v7864, 0
      %vm7866 = vcmp.lt.s32.totalorder %v7864, 256
      %vm7867 = vmand %vm7865, %vm7866
      %7868 = vst.msk [vmem:[%s330] sm:$0x3] %vm7867, %v7862
      %p7869 = scmp.lt.s32.totalorder %s20, 1
      %s7870 = scalar_select %p7869, %s20, 1
      %s7871 = smul.addr %s7870, 2
      %s7872 = scalar_lea.vmem %s9, %s7871
      // Predicated region
      $region57: #{feature_extractor.1} parent=55 // pred_check
        %p7873 = pneg %p232
      $region58: #{feature_extractor.1} parent=55 // pred_check_branch
        %7875 = sbr.rel (%p7873) target = $region60
      $region59: #{feature_extractor.1} parent=55 // pred_region
        _
      $region60: #{feature_extractor.1} parent=55 // pred_fallthru
        _
    $region56: #{feature_extractor.1} parent=5 // pred_fallthru
      _
    %p7876 = scmp.le.s32.totalorder 2, %s15
    // Predicated region
    $region61: #{feature_extractor.1} parent=5 // pred_check
      %p7877 = pneg %p7876
    $region62: #{feature_extractor.1} parent=5 // pred_check_branch
      %7879 = sbr.rel (%p7877) target = $region64
    $region63: #{feature_extractor.1} parent=5 // pred_region
      %s7880 = ssub.s32 %s15, 2
      // Predicated region
      $region65: #{feature_extractor.1} parent=63 // pred_check
        %p7881 = pneg %p238
      $region66: #{feature_extractor.1} parent=63 // pred_check_branch
        %7883 = sbr.rel (%p7881) target = $region68
      $region67: #{feature_extractor.1} parent=63 // pred_region
        %p7884 = scmp.lt.s32.totalorder %s21, 1
        %s7885 = scalar_select %p7884, %s21, 1
        %s7886 = smul.addr %s7885, 2
        %s7887 = scalar_lea.vmem %s9, %s7886
      $region68: #{feature_extractor.1} parent=63 // pred_fallthru
        _
    $region64: #{feature_extractor.1} parent=5 // pred_fallthru
      _
  $region6: #{feature_extractor.1} parent=0 // loop_footer
    %s19 = sadd.s32 1, %s15
  $region7: #{feature_extractor.1} parent=0 // loop_footer_branch
    %14 = sbr.rel target = $region3
  $region8: #{feature_extractor.1} parent=0 // loop_exit
    _

</llo_original>
